<compile_context>
chip_gen: v7x
topology: tpu7x:2x2x1
jax: 0.10.0
libtpu: 0.0.40
codegen_flags: <defaults>
</compile_context>

<pallas_src>
import functools

import jax
import jax.numpy as jnp
from jax import lax
from jax.experimental import pallas as pl
from jax.experimental.pallas import tpu as pltpu

EPS = 1e-5
_LANE = 128
_MIB = 1024 * 1024


# --------------------------------------------------------------------------- kernels
def conv_stats_kernel(x_ref, w_ref, mask_ref, y_ref, sum_ref, ssq_ref, *, offsets, out_rows):
    """Phase 1: fused conv (KH*KW shift-and-matmul taps) + per-channel sum / sumsq.

    x_ref    : (Sp, Cin)           flattened zero-padded image window (bf16)
    w_ref    : (KH*KW, Cin, C_pad) weight taps (bf16)
    mask_ref : (Qp, 1)             1.0 for real output pixels, 0.0 for overscan rows
    y_ref    : (Qp, C_pad)         pre-BN activations for this image
    sum_ref / ssq_ref : (8, C_pad) per-core resident accumulators (all 8 rows identical).
    """
    t = pl.program_id(1)

    @pl.when(t == 0)
    def _init():
        sum_ref[...] = jnp.zeros_like(sum_ref)
        ssq_ref[...] = jnp.zeros_like(ssq_ref)

    c_pad = y_ref.shape[-1]
    acc = jnp.zeros((out_rows, c_pad), jnp.float32)
    for tap, off in enumerate(offsets):                       # static unroll over KH*KW taps
        lhs = x_ref[pl.ds(off, out_rows), :]                  # (Qp, Cin) sublane-offset slice
        acc = acc + jnp.dot(lhs, w_ref[tap], preferred_element_type=jnp.float32)

    y_ref[...] = acc.astype(y_ref.dtype)

    ym = acc * mask_ref[...]                                  # zero the overscan rows
    sum_ref[...] += jnp.sum(ym, axis=0, keepdims=True)        # broadcast over the 8 rows
    ssq_ref[...] += jnp.sum(ym * acc, axis=0, keepdims=True)


def bn_apply_kernel(y_ref, scale_ref, shift_ref, o_ref):
    """Phase 2: y * scale + shift (BN already folded into scale/shift by the wrapper)."""
    y = y_ref[...].astype(jnp.float32)
    o_ref[...] = (y * scale_ref[...] + shift_ref[...]).astype(o_ref.dtype)


# --------------------------------------------------------------------------- helpers
def _round_up(x, m):
    return ((x + m - 1) // m) * m


def _vmem_caps():
    """(working_budget, scoped_limit_cap) in bytes for the current TPU generation."""
    try:
        cap = pltpu.get_tpu_info().vmem_capacity_bytes
    except Exception:  # pragma: no cover - interpret mode / older jax
        cap = 64 * _MIB
    if cap >= 100 * _MIB:        # v5e / v6e: 128 MiB physical -> use the headroom
        return cap // 3, min(96 * _MIB, (3 * cap) // 4)
    return cap // 4, 40 * _MIB   # v7x: 64 MiB physical -> stay conservative


def _phase1_vmem_bytes(sp, qp, cin, taps, c_pad, y_itemsize):
    """Honest per-step VMEM estimate (lane padding of narrow dims + f32 accumulator)."""
    x_blk = 2 * sp * _LANE * 2                           # bf16 input window, double-buffered
    w_blk = 2 * taps * _round_up(cin, 16) * c_pad * 2    # weight taps
    mask_blk = 2 * qp * _LANE * 4                        # (Qp,1) f32, lane-padded
    y_blk = 2 * qp * c_pad * y_itemsize                  # y tile, double-buffered
    stats = 4 * 8 * c_pad * 4                            # two (8, C_pad) f32 accumulators
    acc = qp * c_pad * 4 + 2 * qp * _LANE * 2            # f32 accumulator + tap slices
    return x_blk + w_blk + mask_blk + y_blk + stats + acc


def _choose_phase2_rows(qp, n_images, budget, per_row):
    """Largest row tile that fits the budget and divides n_images * qp (qp % 8 == 0)."""
    max_rows = max(8, budget // max(per_row, 1))
    if qp <= max_rows:
        g = max(1, min(n_images, max_rows // qp))
        while n_images % g:
            g -= 1
        return qp * g
    r = min(qp, (max_rows // 8) * 8)
    while r > 8 and qp % r:
        r -= 8
    return max(8, r)


# --------------------------------------------------------------------------- forward
@functools.partial(jax.jit, static_argnames=("compute_dtype", "y_store_dtype", "out_dtype"))
def normalized_op_forward(x_nchw, conv_w, conv_b, bn_gamma, bn_beta, *,
                          compute_dtype=jnp.bfloat16, y_store_dtype=jnp.bfloat16,
                          out_dtype=jnp.float32):
    """x_nchw: (N,Cin,H,W); conv_w: (Cout,Cin,KH,KW) PyTorch layout; stride 1, 'same' pad."""
    n, cin, h, w = x_nchw.shape
    cout, cin_w, kh, kw = conv_w.shape
    assert cin_w == cin
    assert kh % 2 == 1 and kw % 2 == 1, "only odd ('same'-padded) kernels supported"
    pad_h, pad_w = kh // 2, kw // 2
    hp, wp = h + 2 * pad_h, w + 2 * pad_w
    taps = kh * kw

    c_pad = _round_up(cout, 128)                   # lane-dense output / full-width MXU RHS
    qp = _round_up(h * wp, 8)                      # "overscan" output rows per image
    max_off = (kh - 1) * wp + (kw - 1)
    sp = _round_up(max(max_off + qp, hp * wp), 8)  # flattened padded input rows per image
    n_pad = _round_up(n, 2)                        # even image count -> 2-way core split (v7x)
    tpc = n_pad // 2                               # phase-1 steps per core

    budget, limit_cap = _vmem_caps()
    y_item = jnp.dtype(y_store_dtype).itemsize
    est1 = _phase1_vmem_bytes(sp, qp, cin, taps, c_pad, y_item)
    if est1 > limit_cap:
        # TODO(synk): halo-tiled (manual-DMA) fused conv for images too large for one
        #             VMEM window per grid step.
        raise ValueError(f"padded image window needs ~{est1} B of VMEM (> {limit_cap} B)")
    vmem1 = int(min(limit_cap, max(2 * est1, 16 * _MIB)))

    # ---- layout: NCHW -> zero-padded, flattened NHWC (one fused XLA pass) -------------
    x_nhwc = jnp.transpose(x_nchw, (0, 2, 3, 1)).astype(compute_dtype)
    xpad = jnp.pad(x_nhwc, ((0, n_pad - n), (pad_h, pad_h), (pad_w, pad_w), (0, 0)))
    xf = jnp.pad(xpad.reshape(n_pad, hp * wp, cin), ((0, 0), (0, sp - hp * wp), (0, 0)))
    xf = xf.reshape(n_pad * sp, cin)

    # Weight taps: (KH*KW, Cin, C_pad); tap index = i*KW + j; W_ij = conv_w[:, :, i, j].T.
    w_taps = jnp.transpose(conv_w, (2, 3, 1, 0)).reshape(taps, cin, cout)
    w_taps = jnp.pad(w_taps, ((0, 0), (0, 0), (0, c_pad - cout))).astype(compute_dtype)
    offsets = tuple(i * wp + j for i in range(kh) for j in range(kw))

    # Rows of the overscan grid that are real output pixels (excluded: w' >= W, tail pad).
    row = jnp.arange(qp)
    mask = ((row < h * wp) & ((row % wp) < w)).astype(jnp.float32).reshape(qp, 1)

    # Conv bias intentionally dropped: training-mode BN subtracts the batch mean, so a
    # per-channel constant added by the conv cancels exactly.
    del conv_b

    # ---- Phase 1: fused conv + per-channel sum / sum-of-squares ------------------------
    kern1 = functools.partial(conv_stats_kernel, offsets=offsets, out_rows=qp)
    y, s_sum, s_ssq = pl.pallas_call(
        kern1,
        out_shape=(
            jax.ShapeDtypeStruct((n_pad * qp, c_pad), y_store_dtype),
            jax.ShapeDtypeStruct((16, c_pad), jnp.float32),   # 2 cores x 8-row slab
            jax.ShapeDtypeStruct((16, c_pad), jnp.float32),
        ),
        grid=(2, tpc),
        in_specs=[
            pl.BlockSpec((sp, cin), lambda c, t: (c * tpc + t, 0)),
            pl.BlockSpec((taps, cin, c_pad), lambda c, t: (0, 0, 0)),
            pl.BlockSpec((qp, 1), lambda c, t: (0, 0)),
        ],
        out_specs=(
            pl.BlockSpec((qp, c_pad), lambda c, t: (c * tpc + t, 0)),
            pl.BlockSpec((8, c_pad), lambda c, t: (c, 0)),    # per-core resident accumulator
            pl.BlockSpec((8, c_pad), lambda c, t: (c, 0)),
        ),
        compiler_params=pltpu.CompilerParams(
            dimension_semantics=("parallel", "arbitrary"),
            vmem_limit_bytes=vmem1,
        ),
        cost_estimate=pl.CostEstimate(
            flops=2 * n_pad * qp * cin * c_pad * taps + 4 * n_pad * qp * c_pad,
            transcendentals=0,
            bytes_accessed=int(xf.size * jnp.dtype(compute_dtype).itemsize
                               + w_taps.size * jnp.dtype(compute_dtype).itemsize
                               + n_pad * qp * c_pad * y_item + 2 * 16 * c_pad * 4),
        ),
    )(xf, w_taps, mask)

    # ---- BN fold hoisted out of the kernels: per-channel scale/shift -------------------
    count = float(n * h * w)
    ch_sum = s_sum[::8, :].sum(axis=0)             # rows 0 and 8 hold the per-core partials
    ch_ssq = s_ssq[::8, :].sum(axis=0)
    mean = ch_sum / count
    var = jnp.maximum(ch_ssq / count - mean * mean, 0.0)
    gamma_p = jnp.pad(bn_gamma.astype(jnp.float32), (0, c_pad - cout))
    beta_p = jnp.pad(bn_beta.astype(jnp.float32), (0, c_pad - cout))
    scale = (gamma_p * lax.rsqrt(var + EPS)).reshape(1, c_pad)
    shift = (beta_p - mean * scale[0]).reshape(1, c_pad)

    # ---- Phase 2: y * scale + shift as a lane-dense FMA stream -------------------------
    m2 = n_pad * qp
    out_item = jnp.dtype(out_dtype).itemsize
    per_row2 = c_pad * (2 * y_item + 2 * out_item)
    rows2 = _choose_phase2_rows(qp, n_pad, budget, per_row2)
    vmem2 = int(min(limit_cap, max(2 * rows2 * per_row2 + 4 * c_pad * 4, 16 * _MIB)))
    alias = {0: 0} if jnp.dtype(y_store_dtype) == jnp.dtype(out_dtype) else {}

    out_flat = pl.pallas_call(
        bn_apply_kernel,
        out_shape=jax.ShapeDtypeStruct((m2, c_pad), out_dtype),
        grid=(m2 // rows2,),
        in_specs=[
            pl.BlockSpec((rows2, c_pad), lambda i: (i, 0)),
            pl.BlockSpec((1, c_pad), lambda i: (0, 0)),
            pl.BlockSpec((1, c_pad), lambda i: (0, 0)),
        ],
        out_specs=pl.BlockSpec((rows2, c_pad), lambda i: (i, 0)),
        input_output_aliases=alias,                 # in-place normalize when dtypes match
        compiler_params=pltpu.CompilerParams(
            dimension_semantics=("parallel",),      # megacore sharding on v7x
            vmem_limit_bytes=vmem2,
        ),
        cost_estimate=pl.CostEstimate(
            flops=2 * m2 * c_pad,
            transcendentals=0,
            bytes_accessed=int(m2 * c_pad * (y_item + out_item) + 2 * c_pad * 4),
        ),
    )(y, scale, shift)

    # (N_pad*Qp, C_pad) -> (N, H, W, Cout) -> NCHW.  Overscan columns, padded rows and
    # padded channels are sliced off here; the module's NCHW in/out contract keeps the
    # two transposes (TODO(synk): NHWC variant to drop them for memory-bound callers).
    out = out_flat.reshape(n_pad, qp, c_pad)[:n, :h * wp, :].reshape(n, h, wp, c_pad)
    out = out[:, :, :w, :cout]
    return jnp.transpose(out, (0, 3, 1, 2))


# --------------------------------------------------------------------------- reference
def reference_forward(x_nchw, conv_w, conv_b, bn_gamma, bn_beta):
    kh, kw = conv_w.shape[2], conv_w.shape[3]
    y = lax.conv_general_dilated(
        x_nchw, conv_w, window_strides=(1, 1),
        padding=((kh // 2, kh // 2), (kw // 2, kw // 2)),
        dimension_numbers=("NCHW", "OIHW", "NCHW"))
    y = y + conv_b[None, :, None, None]
    mean = jnp.mean(y, axis=(0, 2, 3), keepdims=True)
    var = jnp.mean((y - mean) ** 2, axis=(0, 2, 3), keepdims=True)
    return (bn_gamma[None, :, None, None] * (y - mean) * lax.rsqrt(var + EPS)
            + bn_beta[None, :, None, None])


if __name__ == "__main__":
    key = jax.random.PRNGKey(0)
    k_x, k_w, k_b, k_g, k_be = jax.random.split(key, 5)

    N, CIN, H, W = 2, 4, 16, 16
    COUT, KH, KW = 8, 3, 3

    # Pre-round x / weights to bf16-representable values so the kernel's bf16 MXU feed is
    # lossless w.r.t. the f32 reference conv.
    x = jax.random.normal(k_x, (N, CIN, H, W), jnp.float32)
    x = x.astype(jnp.bfloat16).astype(jnp.float32)
    conv_w = (jax.random.normal(k_w, (COUT, CIN, KH, KW), jnp.float32) * 0.1)
    conv_w = conv_w.astype(jnp.bfloat16).astype(jnp.float32)
    conv_b = jax.random.normal(k_b, (COUT,), jnp.float32) * 0.1
    bn_gamma = 1.0 + 0.1 * jax.random.normal(k_g, (COUT,), jnp.float32)
    bn_beta = 0.1 * jax.random.normal(k_be, (COUT,), jnp.float32)

    ref = reference_forward(x, conv_w, conv_b, bn_gamma, bn_beta)

    # Exact-intermediate path: y kept f32 between phases (phase 2 normalizes in place via
    # input_output_aliases) -> tight tolerance against the f32 reference.
    out_f32 = jax.block_until_ready(
        normalized_op_forward(x, conv_w, conv_b, bn_gamma, bn_beta,
                              y_store_dtype=jnp.float32))
    assert out_f32.shape == (N, COUT, H, W)
    assert jnp.allclose(out_f32, ref, atol=1e-3, rtol=1e-3), "mismatch (f32 intermediate)"

    # Default path: y stored bf16 between the two phases (halves its HBM round-trip);
    # stats are still f32, so only the bf16 quantization of y shows up in the output.
    out_bf = jax.block_until_ready(
        normalized_op_forward(x, conv_w, conv_b, bn_gamma, bn_beta))
    assert out_bf.shape == (N, COUT, H, W)
    assert jnp.allclose(out_bf, ref, atol=2e-2, rtol=2e-2), "mismatch (bf16 intermediate)"

    print("KERNEL_OK")
</pallas_src>

<mosaic_0001>
module attributes {stable_mosaic.version = 11 : i64} {
  func.func @conv_stats_kernel(%arg0: i32, %arg1: i32, %arg2: memref<328x4xbf16, #tpu.memory_space<vmem>>, %arg3: memref<9x4x128xbf16, #tpu.memory_space<vmem>>, %arg4: memref<288x1xf32, #tpu.memory_space<vmem>>, %arg5: memref<288x128xf32, #tpu.memory_space<vmem>>, %arg6: memref<8x128xf32, #tpu.memory_space<vmem>>, %arg7: memref<8x128xf32, #tpu.memory_space<vmem>>) attributes {dimension_semantics = [#tpu.dimension_semantics<parallel>, #tpu.dimension_semantics<arbitrary>], iteration_bounds = array<i64: 2, 1>, scalar_prefetch = 0 : i64, scratch_operands = 0 : i64, tpu.core_type = #tpu.core_type<tc>, window_params = [{transform_indices = @transform_0, window_bounds = array<i64: 328, 4>}, {pipeline_mode = #tpu.pipeline_mode<synchronous>, transform_indices = @transform_1, window_bounds = array<i64: 9, 4, 128>}, {pipeline_mode = #tpu.pipeline_mode<synchronous>, transform_indices = @transform_2, window_bounds = array<i64: 288, 1>}, {transform_indices = @transform_3, window_bounds = array<i64: 288, 128>}, {transform_indices = @transform_4, window_bounds = array<i64: 8, 128>}, {transform_indices = @transform_5, window_bounds = array<i64: 8, 128>}]} {
    %c0_i32 = arith.constant 0 : i32
    %0 = arith.cmpi eq, %arg1, %c0_i32 : i32
    %1 = arith.extui %0 : i1 to i32
    %c0_i32_0 = arith.constant 0 : i32
    %2 = arith.cmpi ne, %1, %c0_i32_0 : i32
    scf.if %2 {
      %cst_54 = arith.constant 0.000000e+00 : f32
      %66 = vector.broadcast %cst_54 : f32 to vector<8x128xf32>
      %c0_55 = arith.constant 0 : index
      %c0_56 = arith.constant 0 : index
      %67 = vector.load %arg6[%c0_55, %c0_56] : memref<8x128xf32, #tpu.memory_space<vmem>>, vector<8x128xf32>
      tpu.vector_store %arg6[%c0_55, %c0_56], %66 {strides = array<i32>} : memref<8x128xf32, #tpu.memory_space<vmem>>, vector<8x128xf32>,
      %cst_57 = arith.constant 0.000000e+00 : f32
      %68 = vector.broadcast %cst_57 : f32 to vector<8x128xf32>
      %c0_58 = arith.constant 0 : index
      %c0_59 = arith.constant 0 : index
      %69 = vector.load %arg7[%c0_58, %c0_59] : memref<8x128xf32, #tpu.memory_space<vmem>>, vector<8x128xf32>
      tpu.vector_store %arg7[%c0_58, %c0_59], %68 {strides = array<i32>} : memref<8x128xf32, #tpu.memory_space<vmem>>, vector<8x128xf32>,
    } else {
    }
    %cst = arith.constant 0.000000e+00 : f32
    %3 = vector.broadcast %cst : f32 to vector<288x128xf32>
    %c0 = arith.constant 0 : index
    %c0_1 = arith.constant 0 : index
    %4 = vector.load %arg2[%c0, %c0_1] : memref<328x4xbf16, #tpu.memory_space<vmem>>, vector<288x4xbf16>
    %c0_2 = arith.constant 0 : index
    %c0_3 = arith.constant 0 : index
    %c0_4 = arith.constant 0 : index
    %5 = vector.load %arg3[%c0_2, %c0_3, %c0_4] : memref<9x4x128xbf16, #tpu.memory_space<vmem>>, vector<1x4x128xbf16>
    %6 = vector.shape_cast %5 : vector<1x4x128xbf16> to vector<4x128xbf16>
    %cst_5 = arith.constant dense<0.000000e+00> : vector<288x128xf32>
    %7 = tpu.matmul %4, %6, %cst_5 {dimension_numbers = #tpu.dot_dimension_numbers<[1], [0], [0], [1], [0, 0, 1, 1], [], []>} : vector<288x4xbf16>, vector<4x128xbf16>, vector<288x128xf32> -> vector<288x128xf32>
    %8 = arith.addf %3, %7 : vector<288x128xf32>
    %c1 = arith.constant 1 : index
    %c0_6 = arith.constant 0 : index
    %9 = vector.load %arg2[%c1, %c0_6] : memref<328x4xbf16, #tpu.memory_space<vmem>>, vector<288x4xbf16>
    %c1_7 = arith.constant 1 : index
    %c0_8 = arith.constant 0 : index
    %c0_9 = arith.constant 0 : index
    %10 = vector.load %arg3[%c1_7, %c0_8, %c0_9] : memref<9x4x128xbf16, #tpu.memory_space<vmem>>, vector<1x4x128xbf16>
    %11 = vector.shape_cast %10 : vector<1x4x128xbf16> to vector<4x128xbf16>
    %cst_10 = arith.constant dense<0.000000e+00> : vector<288x128xf32>
    %12 = tpu.matmul %9, %11, %cst_10 {dimension_numbers = #tpu.dot_dimension_numbers<[1], [0], [0], [1], [0, 0, 1, 1], [], []>} : vector<288x4xbf16>, vector<4x128xbf16>, vector<288x128xf32> -> vector<288x128xf32>
    %13 = arith.addf %8, %12 : vector<288x128xf32>
    %c2 = arith.constant 2 : index
    %c0_11 = arith.constant 0 : index
    %14 = vector.load %arg2[%c2, %c0_11] : memref<328x4xbf16, #tpu.memory_space<vmem>>, vector<288x4xbf16>
    %c2_12 = arith.constant 2 : index
    %c0_13 = arith.constant 0 : index
    %c0_14 = arith.constant 0 : index
    %15 = vector.load %arg3[%c2_12, %c0_13, %c0_14] : memref<9x4x128xbf16, #tpu.memory_space<vmem>>, vector<1x4x128xbf16>
    %16 = vector.shape_cast %15 : vector<1x4x128xbf16> to vector<4x128xbf16>
    %cst_15 = arith.constant dense<0.000000e+00> : vector<288x128xf32>
    %17 = tpu.matmul %14, %16, %cst_15 {dimension_numbers = #tpu.dot_dimension_numbers<[1], [0], [0], [1], [0, 0, 1, 1], [], []>} : vector<288x4xbf16>, vector<4x128xbf16>, vector<288x128xf32> -> vector<288x128xf32>
    %18 = arith.addf %13, %17 : vector<288x128xf32>
    %c18 = arith.constant 18 : index
    %c0_16 = arith.constant 0 : index
    %19 = vector.load %arg2[%c18, %c0_16] : memref<328x4xbf16, #tpu.memory_space<vmem>>, vector<288x4xbf16>
    %c3 = arith.constant 3 : index
    %c0_17 = arith.constant 0 : index
    %c0_18 = arith.constant 0 : index
    %20 = vector.load %arg3[%c3, %c0_17, %c0_18] : memref<9x4x128xbf16, #tpu.memory_space<vmem>>, vector<1x4x128xbf16>
    %21 = vector.shape_cast %20 : vector<1x4x128xbf16> to vector<4x128xbf16>
    %cst_19 = arith.constant dense<0.000000e+00> : vector<288x128xf32>
    %22 = tpu.matmul %19, %21, %cst_19 {dimension_numbers = #tpu.dot_dimension_numbers<[1], [0], [0], [1], [0, 0, 1, 1], [], []>} : vector<288x4xbf16>, vector<4x128xbf16>, vector<288x128xf32> -> vector<288x128xf32>
    %23 = arith.addf %18, %22 : vector<288x128xf32>
    %c19 = arith.constant 19 : index
    %c0_20 = arith.constant 0 : index
    %24 = vector.load %arg2[%c19, %c0_20] : memref<328x4xbf16, #tpu.memory_space<vmem>>, vector<288x4xbf16>
    %c4 = arith.constant 4 : index
    %c0_21 = arith.constant 0 : index
    %c0_22 = arith.constant 0 : index
    %25 = vector.load %arg3[%c4, %c0_21, %c0_22] : memref<9x4x128xbf16, #tpu.memory_space<vmem>>, vector<1x4x128xbf16>
    %26 = vector.shape_cast %25 : vector<1x4x128xbf16> to vector<4x128xbf16>
    %cst_23 = arith.constant dense<0.000000e+00> : vector<288x128xf32>
    %27 = tpu.matmul %24, %26, %cst_23 {dimension_numbers = #tpu.dot_dimension_numbers<[1], [0], [0], [1], [0, 0, 1, 1], [], []>} : vector<288x4xbf16>, vector<4x128xbf16>, vector<288x128xf32> -> vector<288x128xf32>
    %28 = arith.addf %23, %27 : vector<288x128xf32>
    %c20 = arith.constant 20 : index
    %c0_24 = arith.constant 0 : index
    %29 = vector.load %arg2[%c20, %c0_24] : memref<328x4xbf16, #tpu.memory_space<vmem>>, vector<288x4xbf16>
    %c5 = arith.constant 5 : index
    %c0_25 = arith.constant 0 : index
    %c0_26 = arith.constant 0 : index
    %30 = vector.load %arg3[%c5, %c0_25, %c0_26] : memref<9x4x128xbf16, #tpu.memory_space<vmem>>, vector<1x4x128xbf16>
    %31 = vector.shape_cast %30 : vector<1x4x128xbf16> to vector<4x128xbf16>
    %cst_27 = arith.constant dense<0.000000e+00> : vector<288x128xf32>
    %32 = tpu.matmul %29, %31, %cst_27 {dimension_numbers = #tpu.dot_dimension_numbers<[1], [0], [0], [1], [0, 0, 1, 1], [], []>} : vector<288x4xbf16>, vector<4x128xbf16>, vector<288x128xf32> -> vector<288x128xf32>
    %33 = arith.addf %28, %32 : vector<288x128xf32>
    %c36 = arith.constant 36 : index
    %c0_28 = arith.constant 0 : index
    %34 = vector.load %arg2[%c36, %c0_28] : memref<328x4xbf16, #tpu.memory_space<vmem>>, vector<288x4xbf16>
    %c6 = arith.constant 6 : index
    %c0_29 = arith.constant 0 : index
    %c0_30 = arith.constant 0 : index
    %35 = vector.load %arg3[%c6, %c0_29, %c0_30] : memref<9x4x128xbf16, #tpu.memory_space<vmem>>, vector<1x4x128xbf16>
    %36 = vector.shape_cast %35 : vector<1x4x128xbf16> to vector<4x128xbf16>
    %cst_31 = arith.constant dense<0.000000e+00> : vector<288x128xf32>
    %37 = tpu.matmul %34, %36, %cst_31 {dimension_numbers = #tpu.dot_dimension_numbers<[1], [0], [0], [1], [0, 0, 1, 1], [], []>} : vector<288x4xbf16>, vector<4x128xbf16>, vector<288x128xf32> -> vector<288x128xf32>
    %38 = arith.addf %33, %37 : vector<288x128xf32>
    %c37 = arith.constant 37 : index
    %c0_32 = arith.constant 0 : index
    %39 = vector.load %arg2[%c37, %c0_32] : memref<328x4xbf16, #tpu.memory_space<vmem>>, vector<288x4xbf16>
    %c7 = arith.constant 7 : index
    %c0_33 = arith.constant 0 : index
    %c0_34 = arith.constant 0 : index
    %40 = vector.load %arg3[%c7, %c0_33, %c0_34] : memref<9x4x128xbf16, #tpu.memory_space<vmem>>, vector<1x4x128xbf16>
    %41 = vector.shape_cast %40 : vector<1x4x128xbf16> to vector<4x128xbf16>
    %cst_35 = arith.constant dense<0.000000e+00> : vector<288x128xf32>
    %42 = tpu.matmul %39, %41, %cst_35 {dimension_numbers = #tpu.dot_dimension_numbers<[1], [0], [0], [1], [0, 0, 1, 1], [], []>} : vector<288x4xbf16>, vector<4x128xbf16>, vector<288x128xf32> -> vector<288x128xf32>
    %43 = arith.addf %38, %42 : vector<288x128xf32>
    %c38 = arith.constant 38 : index
    %c0_36 = arith.constant 0 : index
    %44 = vector.load %arg2[%c38, %c0_36] : memref<328x4xbf16, #tpu.memory_space<vmem>>, vector<288x4xbf16>
    %c8 = arith.constant 8 : index
    %c0_37 = arith.constant 0 : index
    %c0_38 = arith.constant 0 : index
    %45 = vector.load %arg3[%c8, %c0_37, %c0_38] : memref<9x4x128xbf16, #tpu.memory_space<vmem>>, vector<1x4x128xbf16>
    %46 = vector.shape_cast %45 : vector<1x4x128xbf16> to vector<4x128xbf16>
    %cst_39 = arith.constant dense<0.000000e+00> : vector<288x128xf32>
    %47 = tpu.matmul %44, %46, %cst_39 {dimension_numbers = #tpu.dot_dimension_numbers<[1], [0], [0], [1], [0, 0, 1, 1], [], []>} : vector<288x4xbf16>, vector<4x128xbf16>, vector<288x128xf32> -> vector<288x128xf32>
    %48 = arith.addf %43, %47 : vector<288x128xf32>
    %c0_40 = arith.constant 0 : index
    %c0_41 = arith.constant 0 : index
    %49 = vector.load %arg5[%c0_40, %c0_41] : memref<288x128xf32, #tpu.memory_space<vmem>>, vector<288x128xf32>
    tpu.vector_store %arg5[%c0_40, %c0_41], %48 {strides = array<i32>} : memref<288x128xf32, #tpu.memory_space<vmem>>, vector<288x128xf32>,
    %c0_42 = arith.constant 0 : index
    %c0_43 = arith.constant 0 : index
    %50 = vector.load %arg4[%c0_42, %c0_43] : memref<288x1xf32, #tpu.memory_space<vmem>>, vector<288x1xf32>
    %51 = vector.broadcast %50 : vector<288x1xf32> to vector<288x128xf32>
    %52 = arith.mulf %48, %51 : vector<288x128xf32>
    %c0_44 = arith.constant 0 : index
    %c0_45 = arith.constant 0 : index
    %53 = vector.load %arg6[%c0_44, %c0_45] : memref<8x128xf32, #tpu.memory_space<vmem>>, vector<8x128xf32>
    %cst_46 = arith.constant dense<0.000000e+00> : vector<128xf32>
    %54 = vector.multi_reduction <add>, %52, %cst_46 [0] : vector<288x128xf32> to vector<128xf32>
    %55 = vector.shape_cast %54 : vector<128xf32> to vector<1x128xf32>
    %56 = vector.broadcast %55 : vector<1x128xf32> to vector<8x128xf32>
    %57 = arith.addf %53, %56 : vector<8x128xf32>
    %c0_47 = arith.constant 0 : index
    %c0_48 = arith.constant 0 : index
    %58 = vector.load %arg6[%c0_47, %c0_48] : memref<8x128xf32, #tpu.memory_space<vmem>>, vector<8x128xf32>
    tpu.vector_store %arg6[%c0_47, %c0_48], %57 {strides = array<i32>} : memref<8x128xf32, #tpu.memory_space<vmem>>, vector<8x128xf32>,
    %c0_49 = arith.constant 0 : index
    %c0_50 = arith.constant 0 : index
    %59 = vector.load %arg7[%c0_49, %c0_50] : memref<8x128xf32, #tpu.memory_space<vmem>>, vector<8x128xf32>
    %60 = arith.mulf %52, %48 : vector<288x128xf32>
    %cst_51 = arith.constant dense<0.000000e+00> : vector<128xf32>
    %61 = vector.multi_reduction <add>, %60, %cst_51 [0] : vector<288x128xf32> to vector<128xf32>
    %62 = vector.shape_cast %61 : vector<128xf32> to vector<1x128xf32>
    %63 = vector.broadcast %62 : vector<1x128xf32> to vector<8x128xf32>
    %64 = arith.addf %59, %63 : vector<8x128xf32>
    %c0_52 = arith.constant 0 : index
    %c0_53 = arith.constant 0 : index
    %65 = vector.load %arg7[%c0_52, %c0_53] : memref<8x128xf32, #tpu.memory_space<vmem>>, vector<8x128xf32>
    tpu.vector_store %arg7[%c0_52, %c0_53], %64 {strides = array<i32>} : memref<8x128xf32, #tpu.memory_space<vmem>>, vector<8x128xf32>,
    return
  }
  func.func @transform_0(%arg0: i32, %arg1: i32) -> (i32, i32) {
    %c1_i32 = arith.constant 1 : i32
    %0 = arith.muli %arg0, %c1_i32 : i32
    %1 = arith.addi %0, %arg1 : i32
    %c0_i32 = arith.constant 0 : i32
    %c0_i32_0 = arith.constant 0 : i32
    return %1, %c0_i32 : i32, i32
  }
  func.func @transform_1(%arg0: i32, %arg1: i32) -> (i32, i32, i32) {
    %c0_i32 = arith.constant 0 : i32
    %c0_i32_0 = arith.constant 0 : i32
    %c0_i32_1 = arith.constant 0 : i32
    %c0_i32_2 = arith.constant 0 : i32
    return %c0_i32, %c0_i32_0, %c0_i32_1 : i32, i32, i32
  }
  func.func @transform_2(%arg0: i32, %arg1: i32) -> (i32, i32) {
    %c0_i32 = arith.constant 0 : i32
    %c0_i32_0 = arith.constant 0 : i32
    %c0_i32_1 = arith.constant 0 : i32
    return %c0_i32, %c0_i32_0 : i32, i32
  }
  func.func @transform_3(%arg0: i32, %arg1: i32) -> (i32, i32) {
    %c1_i32 = arith.constant 1 : i32
    %0 = arith.muli %arg0, %c1_i32 : i32
    %1 = arith.addi %0, %arg1 : i32
    %c0_i32 = arith.constant 0 : i32
    %c0_i32_0 = arith.constant 0 : i32
    return %1, %c0_i32 : i32, i32
  }
  func.func @transform_4(%arg0: i32, %arg1: i32) -> (i32, i32) {
    %c0_i32 = arith.constant 0 : i32
    %c0_i32_0 = arith.constant 0 : i32
    return %arg0, %c0_i32 : i32, i32
  }
  func.func @transform_5(%arg0: i32, %arg1: i32) -> (i32, i32) {
    %c0_i32 = arith.constant 0 : i32
    %c0_i32_0 = arith.constant 0 : i32
    return %arg0, %c0_i32 : i32, i32
  }
}

module attributes {stable_mosaic.version = 11 : i64} {
  func.func @bn_apply_kernel(%arg0: i32, %arg1: memref<576x128xf32, #tpu.memory_space<vmem>>, %arg2: memref<1x128xf32, #tpu.memory_space<vmem>>, %arg3: memref<1x128xf32, #tpu.memory_space<vmem>>, %arg4: memref<576x128xf32, #tpu.memory_space<vmem>>) attributes {dimension_semantics = [#tpu.dimension_semantics<parallel>], iteration_bounds = array<i64: 1>, scalar_prefetch = 0 : i64, scratch_operands = 0 : i64, tpu.core_type = #tpu.core_type<tc>, window_params = [{transform_indices = @transform_0, window_bounds = array<i64: 576, 128>}, {pipeline_mode = #tpu.pipeline_mode<synchronous>, transform_indices = @transform_1, window_bounds = array<i64: 1, 128>}, {pipeline_mode = #tpu.pipeline_mode<synchronous>, transform_indices = @transform_2, window_bounds = array<i64: 1, 128>}, {transform_indices = @transform_3, window_bounds = array<i64: 576, 128>}]} {
    %c0 = arith.constant 0 : index
    %c0_0 = arith.constant 0 : index
    %0 = vector.load %arg1[%c0, %c0_0] : memref<576x128xf32, #tpu.memory_space<vmem>>, vector<576x128xf32>
    %c0_1 = arith.constant 0 : index
    %c0_2 = arith.constant 0 : index
    %1 = vector.load %arg2[%c0_1, %c0_2] : memref<1x128xf32, #tpu.memory_space<vmem>>, vector<1x128xf32>
    %2 = vector.broadcast %1 : vector<1x128xf32> to vector<576x128xf32>
    %3 = arith.mulf %0, %2 : vector<576x128xf32>
    %c0_3 = arith.constant 0 : index
    %c0_4 = arith.constant 0 : index
    %4 = vector.load %arg3[%c0_3, %c0_4] : memref<1x128xf32, #tpu.memory_space<vmem>>, vector<1x128xf32>
    %5 = vector.broadcast %4 : vector<1x128xf32> to vector<576x128xf32>
    %6 = arith.addf %3, %5 : vector<576x128xf32>
    %c0_5 = arith.constant 0 : index
    %c0_6 = arith.constant 0 : index
    %7 = vector.load %arg4[%c0_5, %c0_6] : memref<576x128xf32, #tpu.memory_space<vmem>>, vector<576x128xf32>
    tpu.vector_store %arg4[%c0_5, %c0_6], %6 {strides = array<i32>} : memref<576x128xf32, #tpu.memory_space<vmem>>, vector<576x128xf32>,
    return
  }
  func.func @transform_0(%arg0: i32) -> (i32, i32) {
    %c0_i32 = arith.constant 0 : i32
    %c0_i32_0 = arith.constant 0 : i32
    return %arg0, %c0_i32 : i32, i32
  }
  func.func @transform_1(%arg0: i32) -> (i32, i32) {
    %c0_i32 = arith.constant 0 : i32
    %c0_i32_0 = arith.constant 0 : i32
    %c0_i32_1 = arith.constant 0 : i32
    return %c0_i32, %c0_i32_0 : i32, i32
  }
  func.func @transform_2(%arg0: i32) -> (i32, i32) {
    %c0_i32 = arith.constant 0 : i32
    %c0_i32_0 = arith.constant 0 : i32
    %c0_i32_1 = arith.constant 0 : i32
    return %c0_i32, %c0_i32_0 : i32, i32
  }
  func.func @transform_3(%arg0: i32) -> (i32, i32) {
    %c0_i32 = arith.constant 0 : i32
    %c0_i32_0 = arith.constant 0 : i32
    return %arg0, %c0_i32 : i32, i32
  }
}

</mosaic_0001>

<llo_original>
// kernel: normalized_op_forward.3
$region0: #{normalized_op_forward.3}
  #allocation0 [shape = 'u32[]', space=smem, size = 0x4, offset = 0x4, fixed_abs, tag = 'smem constant byte address 0x4 - core index']
  #allocation1 [shape = 'u32[144,128]{1,0:T(1,128)}', space=vmem, size = 0x12000, scoped, tag = 'internal scratch']
  %s0 = inlined_call_operand.vmem [shape: f32[576,128], index: 0, kind: input, shape index: {}, may-alias: {0,3}]
  %s1 = inlined_call_operand.vmem [shape: f32[1,128], index: 1, kind: input, shape index: {}]
  %s2 = inlined_call_operand.vmem [shape: f32[1,128], index: 2, kind: input, shape index: {}]
  %s3 = inlined_call_operand.vmem [shape: f32[576,128], index: 3, kind: output, shape index: {}, may-alias: {0,3}]
  %s4 = sld [smem:[#allocation0]]
  $region22: #{normalized_op_forward.3} parent=0
    _
  %s6 = ssub.s32 1, %s4
  %s7 = scalar_select 0, %s6, %s4
  // Predicated region
  $region2: #{normalized_op_forward.3} parent=0 // pred_check
    _
  $region3: #{normalized_op_forward.3} parent=0 // pred_check_branch
    %9 = sbr.rel (0) target = $region5
  $region4: #{normalized_op_forward.3} parent=0 // pred_region
    _
  $region5: #{normalized_op_forward.3} parent=0 // pred_fallthru
    _
  // Predicated region
  $region6: #{normalized_op_forward.3} parent=0 // pred_check
    _
  $region7: #{normalized_op_forward.3} parent=0 // pred_check_branch
    %11 = sbr.rel (0) target = $region9
  $region8: #{normalized_op_forward.3} parent=0 // pred_region
    _
  $region9: #{normalized_op_forward.3} parent=0 // pred_fallthru
    _
  // Predicated region
  $region10: #{normalized_op_forward.3} parent=0 // pred_check
    _
  $region11: #{normalized_op_forward.3} parent=0 // pred_check_branch
    %13 = sbr.rel (0) target = $region13
  $region12: #{normalized_op_forward.3} parent=0 // pred_region
    _
  $region13: #{normalized_op_forward.3} parent=0 // pred_fallthru
    _
  %v14 = vld [vmem:[%s0] sm:$0xff]
  %v15 = vld [vmem:[%s0 + $0x8] sm:$0xff]
  %v16 = vld [vmem:[%s0 + $0x10] sm:$0xff]
  %v17 = vld [vmem:[%s0 + $0x18] sm:$0xff]
  %v18 = vld [vmem:[%s0 + $0x20] sm:$0xff]
  %v19 = vld [vmem:[%s0 + $0x28] sm:$0xff]
  %v20 = vld [vmem:[%s0 + $0x30] sm:$0xff]
  %v21 = vld [vmem:[%s0 + $0x38] sm:$0xff]
  %v22 = vld [vmem:[%s0 + $0x40] sm:$0xff]
  %v23 = vld [vmem:[%s0 + $0x48] sm:$0xff]
  %v24 = vld [vmem:[%s0 + $0x50] sm:$0xff]
  %v25 = vld [vmem:[%s0 + $0x58] sm:$0xff]
  %v26 = vld [vmem:[%s0 + $0x60] sm:$0xff]
  %v27 = vld [vmem:[%s0 + $0x68] sm:$0xff]
  %v28 = vld [vmem:[%s0 + $0x70] sm:$0xff]
  %v29 = vld [vmem:[%s0 + $0x78] sm:$0xff]
  %v30 = vld [vmem:[%s0 + $0x80] sm:$0xff]
  %v31 = vld [vmem:[%s0 + $0x88] sm:$0xff]
  %v32 = vld [vmem:[%s0 + $0x90] sm:$0xff]
  %v33 = vld [vmem:[%s0 + $0x98] sm:$0xff]
  %v34 = vld [vmem:[%s0 + $0xa0] sm:$0xff]
  %v35 = vld [vmem:[%s0 + $0xa8] sm:$0xff]
  %v36 = vld [vmem:[%s0 + $0xb0] sm:$0xff]
  %v37 = vld [vmem:[%s0 + $0xb8] sm:$0xff]
  %v38 = vld [vmem:[%s0 + $0xc0] sm:$0xff]
  %v39 = vld [vmem:[%s0 + $0xc8] sm:$0xff]
  %v40 = vld [vmem:[%s0 + $0xd0] sm:$0xff]
  %v41 = vld [vmem:[%s0 + $0xd8] sm:$0xff]
  %v42 = vld [vmem:[%s0 + $0xe0] sm:$0xff]
  %v43 = vld [vmem:[%s0 + $0xe8] sm:$0xff]
  %v44 = vld [vmem:[%s0 + $0xf0] sm:$0xff]
  %v45 = vld [vmem:[%s0 + $0xf8] sm:$0xff]
  %v46 = vld [vmem:[%s0 + $0x100] sm:$0xff]
  %v47 = vld [vmem:[%s0 + $0x108] sm:$0xff]
  %v48 = vld [vmem:[%s0 + $0x110] sm:$0xff]
  %v49 = vld [vmem:[%s0 + $0x118] sm:$0xff]
  %v50 = vld [vmem:[%s0 + $0x120] sm:$0xff]
  %v51 = vld [vmem:[%s0 + $0x128] sm:$0xff]
  %v52 = vld [vmem:[%s0 + $0x130] sm:$0xff]
  %v53 = vld [vmem:[%s0 + $0x138] sm:$0xff]
  %v54 = vld [vmem:[%s0 + $0x140] sm:$0xff]
  %v55 = vld [vmem:[%s0 + $0x148] sm:$0xff]
  %v56 = vld [vmem:[%s0 + $0x150] sm:$0xff]
  %v57 = vld [vmem:[%s0 + $0x158] sm:$0xff]
  %v58 = vld [vmem:[%s0 + $0x160] sm:$0xff]
  %v59 = vld [vmem:[%s0 + $0x168] sm:$0xff]
  %v60 = vld [vmem:[%s0 + $0x170] sm:$0xff]
  %v61 = vld [vmem:[%s0 + $0x178] sm:$0xff]
  %v62 = vld [vmem:[%s0 + $0x180] sm:$0xff]
  %v63 = vld [vmem:[%s0 + $0x188] sm:$0xff]
  %v64 = vld [vmem:[%s0 + $0x190] sm:$0xff]
  %v65 = vld [vmem:[%s0 + $0x198] sm:$0xff]
  %v66 = vld [vmem:[%s0 + $0x1a0] sm:$0xff]
  %v67 = vld [vmem:[%s0 + $0x1a8] sm:$0xff]
  %v68 = vld [vmem:[%s0 + $0x1b0] sm:$0xff]
  %v69 = vld [vmem:[%s0 + $0x1b8] sm:$0xff]
  %v70 = vld [vmem:[%s0 + $0x1c0] sm:$0xff]
  %v71 = vld [vmem:[%s0 + $0x1c8] sm:$0xff]
  %v72 = vld [vmem:[%s0 + $0x1d0] sm:$0xff]
  %v73 = vld [vmem:[%s0 + $0x1d8] sm:$0xff]
  %v74 = vld [vmem:[%s0 + $0x1e0] sm:$0xff]
  %v75 = vld [vmem:[%s0 + $0x1e8] sm:$0xff]
  %v76 = vld [vmem:[%s0 + $0x1f0] sm:$0xff]
  %v77 = vld [vmem:[%s0 + $0x1f8] sm:$0xff]
  %v78 = vld [vmem:[%s0 + $0x200] sm:$0xff]
  %v79 = vld [vmem:[%s0 + $0x208] sm:$0xff]
  %v80 = vld [vmem:[%s0 + $0x210] sm:$0xff]
  %v81 = vld [vmem:[%s0 + $0x218] sm:$0xff]
  %v82 = vld [vmem:[%s0 + $0x220] sm:$0xff]
  %v83 = vld [vmem:[%s0 + $0x228] sm:$0xff]
  %v84 = vld [vmem:[%s0 + $0x230] sm:$0xff]
  %v85 = vld [vmem:[%s0 + $0x238] sm:$0xff]
  %v86 = vld [vmem:[%s1] sm:$0x1]
  %v88 = vlaneseq
  %v89 = vshrl.u32 %v88, 7
  %v90 = vsub.s32 0, %v89
  %v91 = vrot.slane %v86, %v90
  %v93 = vmul.f32 %v14, %v91
  %v94 = vmul.f32 %v15, %v91
  %v95 = vmul.f32 %v16, %v91
  %v96 = vmul.f32 %v17, %v91
  %v97 = vmul.f32 %v18, %v91
  %v98 = vmul.f32 %v19, %v91
  %v99 = vmul.f32 %v20, %v91
  %v100 = vmul.f32 %v21, %v91
  %v101 = vmul.f32 %v22, %v91
  %v102 = vmul.f32 %v23, %v91
  %v103 = vmul.f32 %v24, %v91
  %v104 = vmul.f32 %v25, %v91
  %v105 = vmul.f32 %v26, %v91
  %v106 = vmul.f32 %v27, %v91
  %v107 = vmul.f32 %v28, %v91
  %v108 = vmul.f32 %v29, %v91
  %v109 = vmul.f32 %v30, %v91
  %v110 = vmul.f32 %v31, %v91
  %v111 = vmul.f32 %v32, %v91
  %v112 = vmul.f32 %v33, %v91
  %v113 = vmul.f32 %v34, %v91
  %v114 = vmul.f32 %v35, %v91
  %v115 = vmul.f32 %v36, %v91
  %v116 = vmul.f32 %v37, %v91
  %v117 = vmul.f32 %v38, %v91
  %v118 = vmul.f32 %v39, %v91
  %v119 = vmul.f32 %v40, %v91
  %v120 = vmul.f32 %v41, %v91
  %v121 = vmul.f32 %v42, %v91
  %v122 = vmul.f32 %v43, %v91
  %v123 = vmul.f32 %v44, %v91
  %v124 = vmul.f32 %v45, %v91
  %v125 = vmul.f32 %v46, %v91
  %v126 = vmul.f32 %v47, %v91
  %v127 = vmul.f32 %v48, %v91
  %v128 = vmul.f32 %v49, %v91
  %v129 = vmul.f32 %v50, %v91
  %v130 = vmul.f32 %v51, %v91
  %v131 = vmul.f32 %v52, %v91
  %v132 = vmul.f32 %v53, %v91
  %v133 = vmul.f32 %v54, %v91
  %v134 = vmul.f32 %v55, %v91
  %v135 = vmul.f32 %v56, %v91
  %v136 = vmul.f32 %v57, %v91
  %v137 = vmul.f32 %v58, %v91
  %v138 = vmul.f32 %v59, %v91
  %v139 = vmul.f32 %v60, %v91
  %v140 = vmul.f32 %v61, %v91
  %v141 = vmul.f32 %v62, %v91
  %v142 = vmul.f32 %v63, %v91
  %v143 = vmul.f32 %v64, %v91
  %v144 = vmul.f32 %v65, %v91
  %v145 = vmul.f32 %v66, %v91
  %v146 = vmul.f32 %v67, %v91
  %v147 = vmul.f32 %v68, %v91
  %v148 = vmul.f32 %v69, %v91
  %v149 = vmul.f32 %v70, %v91
  %v150 = vmul.f32 %v71, %v91
  %v151 = vmul.f32 %v72, %v91
  %v152 = vmul.f32 %v73, %v91
  %v153 = vmul.f32 %v74, %v91
  %v154 = vmul.f32 %v75, %v91
  %v155 = vmul.f32 %v76, %v91
  %v156 = vmul.f32 %v77, %v91
  %v157 = vmul.f32 %v78, %v91
  %v158 = vmul.f32 %v79, %v91
  %v159 = vmul.f32 %v80, %v91
  %v160 = vmul.f32 %v81, %v91
  %v161 = vmul.f32 %v82, %v91
  %v162 = vmul.f32 %v83, %v91
  %v163 = vmul.f32 %v84, %v91
  %v164 = vmul.f32 %v85, %v91
  %v165 = vld [vmem:[%s2] sm:$0x1]
  %v167 = vlaneseq
  %v168 = vshrl.u32 %v167, 7
  %v169 = vsub.s32 0, %v168
  %v170 = vrot.slane %v165, %v169
  %v172 = vadd.f32 %v93, %v170
  %v173 = vadd.f32 %v94, %v170
  %v174 = vadd.f32 %v95, %v170
  %v175 = vadd.f32 %v96, %v170
  %v176 = vadd.f32 %v97, %v170
  %v177 = vadd.f32 %v98, %v170
  %v178 = vadd.f32 %v99, %v170
  %v179 = vadd.f32 %v100, %v170
  %v180 = vadd.f32 %v101, %v170
  %v181 = vadd.f32 %v102, %v170
  %v182 = vadd.f32 %v103, %v170
  %v183 = vadd.f32 %v104, %v170
  %v184 = vadd.f32 %v105, %v170
  %v185 = vadd.f32 %v106, %v170
  %v186 = vadd.f32 %v107, %v170
  %v187 = vadd.f32 %v108, %v170
  %v188 = vadd.f32 %v109, %v170
  %v189 = vadd.f32 %v110, %v170
  %v190 = vadd.f32 %v111, %v170
  %v191 = vadd.f32 %v112, %v170
  %v192 = vadd.f32 %v113, %v170
  %v193 = vadd.f32 %v114, %v170
  %v194 = vadd.f32 %v115, %v170
  %v195 = vadd.f32 %v116, %v170
  %v196 = vadd.f32 %v117, %v170
  %v197 = vadd.f32 %v118, %v170
  %v198 = vadd.f32 %v119, %v170
  %v199 = vadd.f32 %v120, %v170
  %v200 = vadd.f32 %v121, %v170
  %v201 = vadd.f32 %v122, %v170
  %v202 = vadd.f32 %v123, %v170
  %v203 = vadd.f32 %v124, %v170
  %v204 = vadd.f32 %v125, %v170
  %v205 = vadd.f32 %v126, %v170
  %v206 = vadd.f32 %v127, %v170
  %v207 = vadd.f32 %v128, %v170
  %v208 = vadd.f32 %v129, %v170
  %v209 = vadd.f32 %v130, %v170
  %v210 = vadd.f32 %v131, %v170
  %v211 = vadd.f32 %v132, %v170
  %v212 = vadd.f32 %v133, %v170
  %v213 = vadd.f32 %v134, %v170
  %v214 = vadd.f32 %v135, %v170
  %v215 = vadd.f32 %v136, %v170
  %v216 = vadd.f32 %v137, %v170
  %v217 = vadd.f32 %v138, %v170
  %v218 = vadd.f32 %v139, %v170
  %v219 = vadd.f32 %v140, %v170
  %v220 = vadd.f32 %v141, %v170
  %v221 = vadd.f32 %v142, %v170
  %v222 = vadd.f32 %v143, %v170
  %v223 = vadd.f32 %v144, %v170
  %v224 = vadd.f32 %v145, %v170
  %v225 = vadd.f32 %v146, %v170
  %v226 = vadd.f32 %v147, %v170
  %v227 = vadd.f32 %v148, %v170
  %v228 = vadd.f32 %v149, %v170
  %v229 = vadd.f32 %v150, %v170
  %v230 = vadd.f32 %v151, %v170
  %v231 = vadd.f32 %v152, %v170
  %v232 = vadd.f32 %v153, %v170
  %v233 = vadd.f32 %v154, %v170
  %v234 = vadd.f32 %v155, %v170
  %v235 = vadd.f32 %v156, %v170
  %v236 = vadd.f32 %v157, %v170
  %v237 = vadd.f32 %v158, %v170
  %v238 = vadd.f32 %v159, %v170
  %v239 = vadd.f32 %v160, %v170
  %v240 = vadd.f32 %v161, %v170
  %v241 = vadd.f32 %v162, %v170
  %v242 = vadd.f32 %v163, %v170
  %v243 = vadd.f32 %v164, %v170
  %244 = vst [vmem:[%s3] sm:$0xff] %v172
  %245 = vst [vmem:[%s3 + $0x8] sm:$0xff] %v173
  %246 = vst [vmem:[%s3 + $0x10] sm:$0xff] %v174
  %247 = vst [vmem:[%s3 + $0x18] sm:$0xff] %v175
  %248 = vst [vmem:[%s3 + $0x20] sm:$0xff] %v176
  %249 = vst [vmem:[%s3 + $0x28] sm:$0xff] %v177
  %250 = vst [vmem:[%s3 + $0x30] sm:$0xff] %v178
  %251 = vst [vmem:[%s3 + $0x38] sm:$0xff] %v179
  %252 = vst [vmem:[%s3 + $0x40] sm:$0xff] %v180
  %253 = vst [vmem:[%s3 + $0x48] sm:$0xff] %v181
  %254 = vst [vmem:[%s3 + $0x50] sm:$0xff] %v182
  %255 = vst [vmem:[%s3 + $0x58] sm:$0xff] %v183
  %256 = vst [vmem:[%s3 + $0x60] sm:$0xff] %v184
  %257 = vst [vmem:[%s3 + $0x68] sm:$0xff] %v185
  %258 = vst [vmem:[%s3 + $0x70] sm:$0xff] %v186
  %259 = vst [vmem:[%s3 + $0x78] sm:$0xff] %v187
  %260 = vst [vmem:[%s3 + $0x80] sm:$0xff] %v188
  %261 = vst [vmem:[%s3 + $0x88] sm:$0xff] %v189
  %262 = vst [vmem:[%s3 + $0x90] sm:$0xff] %v190
  %263 = vst [vmem:[%s3 + $0x98] sm:$0xff] %v191
  %264 = vst [vmem:[%s3 + $0xa0] sm:$0xff] %v192
  %265 = vst [vmem:[%s3 + $0xa8] sm:$0xff] %v193
  %266 = vst [vmem:[%s3 + $0xb0] sm:$0xff] %v194
  %267 = vst [vmem:[%s3 + $0xb8] sm:$0xff] %v195
  %268 = vst [vmem:[%s3 + $0xc0] sm:$0xff] %v196
  %269 = vst [vmem:[%s3 + $0xc8] sm:$0xff] %v197
  %270 = vst [vmem:[%s3 + $0xd0] sm:$0xff] %v198
  %271 = vst [vmem:[%s3 + $0xd8] sm:$0xff] %v199
  %272 = vst [vmem:[%s3 + $0xe0] sm:$0xff] %v200
  %273 = vst [vmem:[%s3 + $0xe8] sm:$0xff] %v201
  %274 = vst [vmem:[%s3 + $0xf0] sm:$0xff] %v202
  %275 = vst [vmem:[%s3 + $0xf8] sm:$0xff] %v203
  %276 = vst [vmem:[%s3 + $0x100] sm:$0xff] %v204
  %277 = vst [vmem:[%s3 + $0x108] sm:$0xff] %v205
  %278 = vst [vmem:[%s3 + $0x110] sm:$0xff] %v206
  %279 = vst [vmem:[%s3 + $0x118] sm:$0xff] %v207
  %280 = vst [vmem:[%s3 + $0x120] sm:$0xff] %v208
  %281 = vst [vmem:[%s3 + $0x128] sm:$0xff] %v209
  %282 = vst [vmem:[%s3 + $0x130] sm:$0xff] %v210
  %283 = vst [vmem:[%s3 + $0x138] sm:$0xff] %v211
  %284 = vst [vmem:[%s3 + $0x140] sm:$0xff] %v212
  %285 = vst [vmem:[%s3 + $0x148] sm:$0xff] %v213
  %286 = vst [vmem:[%s3 + $0x150] sm:$0xff] %v214
  %287 = vst [vmem:[%s3 + $0x158] sm:$0xff] %v215
  %288 = vst [vmem:[%s3 + $0x160] sm:$0xff] %v216
  %289 = vst [vmem:[%s3 + $0x168] sm:$0xff] %v217
  %290 = vst [vmem:[%s3 + $0x170] sm:$0xff] %v218
  %291 = vst [vmem:[%s3 + $0x178] sm:$0xff] %v219
  %292 = vst [vmem:[%s3 + $0x180] sm:$0xff] %v220
  %293 = vst [vmem:[%s3 + $0x188] sm:$0xff] %v221
  %294 = vst [vmem:[%s3 + $0x190] sm:$0xff] %v222
  %295 = vst [vmem:[%s3 + $0x198] sm:$0xff] %v223
  %296 = vst [vmem:[%s3 + $0x1a0] sm:$0xff] %v224
  %297 = vst [vmem:[%s3 + $0x1a8] sm:$0xff] %v225
  %298 = vst [vmem:[%s3 + $0x1b0] sm:$0xff] %v226
  %299 = vst [vmem:[%s3 + $0x1b8] sm:$0xff] %v227
  %300 = vst [vmem:[%s3 + $0x1c0] sm:$0xff] %v228
  %301 = vst [vmem:[%s3 + $0x1c8] sm:$0xff] %v229
  %302 = vst [vmem:[%s3 + $0x1d0] sm:$0xff] %v230
  %303 = vst [vmem:[%s3 + $0x1d8] sm:$0xff] %v231
  %304 = vst [vmem:[%s3 + $0x1e0] sm:$0xff] %v232
  %305 = vst [vmem:[%s3 + $0x1e8] sm:$0xff] %v233
  %306 = vst [vmem:[%s3 + $0x1f0] sm:$0xff] %v234
  %307 = vst [vmem:[%s3 + $0x1f8] sm:$0xff] %v235
  %308 = vst [vmem:[%s3 + $0x200] sm:$0xff] %v236
  %309 = vst [vmem:[%s3 + $0x208] sm:$0xff] %v237
  %310 = vst [vmem:[%s3 + $0x210] sm:$0xff] %v238
  %311 = vst [vmem:[%s3 + $0x218] sm:$0xff] %v239
  %312 = vst [vmem:[%s3 + $0x220] sm:$0xff] %v240
  %313 = vst [vmem:[%s3 + $0x228] sm:$0xff] %v241
  %314 = vst [vmem:[%s3 + $0x230] sm:$0xff] %v242
  %315 = vst [vmem:[%s3 + $0x238] sm:$0xff] %v243
  // Predicated region
  $region14: #{normalized_op_forward.3} parent=0 // pred_check
    _
  $region15: #{normalized_op_forward.3} parent=0 // pred_check_branch
    %317 = sbr.rel (0) target = $region17
  $region16: #{normalized_op_forward.3} parent=0 // pred_region
    _
  $region17: #{normalized_op_forward.3} parent=0 // pred_fallthru
    _
  // Predicated region
  $region18: #{normalized_op_forward.3} parent=0 // pred_check
    _
  $region19: #{normalized_op_forward.3} parent=0 // pred_check_branch
    %319 = sbr.rel (0) target = $region21
  $region20: #{normalized_op_forward.3} parent=0 // pred_region
    _
  $region21: #{normalized_op_forward.3} parent=0 // pred_fallthru
    _

// kernel: normalized_op_forward.2
$region0: #{normalized_op_forward.2}
  #allocation0 [shape = 'u32[]', space=smem, size = 0x4, offset = 0x4, fixed_abs, tag = 'smem constant byte address 0x4 - core index']
  #allocation1 [shape = 'u32[144,128]{1,0:T(1,128)}', space=vmem, size = 0x12000, scoped, tag = 'internal scratch']
  %s0 = inlined_call_operand.vmem [shape: bf16[656,4], index: 0, kind: input, shape index: {}]
  %s1 = inlined_call_operand.vmem [shape: bf16[9,4,128], index: 1, kind: input, shape index: {}]
  %s2 = inlined_call_operand.vmem [shape: f32[288,1], index: 2, kind: input, shape index: {}]
  %s3 = inlined_call_operand.vmem [shape: f32[576,128], index: 3, kind: output, shape index: {0}]
  %s4 = inlined_call_operand.vmem [shape: f32[16,128], index: 4, kind: output, shape index: {1}]
  %s5 = inlined_call_operand.vmem [shape: f32[16,128], index: 5, kind: output, shape index: {2}]
  %6 = xla_tuple %s3, %s4, %s5
  %s7 = sld [smem:[#allocation0]]
  $region65: #{normalized_op_forward.2} parent=0
    _
  %s9 = ssub.s32 1, %s7
  %s10 = scalar_select 0, %s9, %s7
  loop: start=0, step=1, limit=4
  $region2: #{normalized_op_forward.2} parent=0 // loop_pre_header
    _
  $region3: #{normalized_op_forward.2} parent=0 // loop_header
    %s12 = sphi 0, %s16
    %p13 = scmp.ge.s32.totalorder %s12, 4
    %s19 = sphi 0, %s31
    %s20 = sphi 0, %s27
    %s21 = sphi 0, %s19
    %s22 = sphi 0, %s20
    %s23 = sphi 0, %s21
    %s24 = sphi 0, %s22
    %s36 = sphi 0, %s38
    %s39 = sphi 0, %s36
    %s40 = sphi 0, %s39
    %s56 = sphi 0, %s40
    %s60 = sphi 0, %s60
    %s62 = sphi 0, %s60
    %s63 = sphi 0, %s62
    %s77 = sphi 0, %s63
    %s81 = sphi 0, %s81
    %s83 = sphi 0, %s81
    %s84 = sphi 0, %s83
    %s98 = sphi 0, %s84
    %s106 = sphi 0, %s108
    %s109 = sphi 0, %s106
    %s110 = sphi 0, %s109
    %s126 = sphi 0, %s110
    %s132 = sphi 0, %s134
    %s135 = sphi 0, %s132
    %s136 = sphi 0, %s135
    %s152 = sphi 0, %s136
    %s158 = sphi 0, %s160
    %s161 = sphi 0, %s158
    %s162 = sphi 0, %s161
    %s178 = sphi 0, %s162
  $region4: #{normalized_op_forward.2} parent=0 // loop_header_branch
    %15 = sbr.rel (%p13) target = $region8
  $region5: #{normalized_op_forward.2} parent=0 // loop_body
    %s17 = ssub.s32 %s12, 1
    %s18 = ssub.s32 %s12, 2
    %s25 = sadd.s32 1, %s20
    %p26 = scmp.ge.s32.totalorder %s25, 1
    %s27 = scalar_select %p26, 0, %s25
    %s28 = sadd.s32 1, %s19
    %s29 = scalar_select %p26, %s28, %s19
    %p30 = scmp.ge.s32.totalorder %s29, 2
    %s31 = scalar_select %p30, 0, %s29
    %s32 = sadd.s32 %s19, %s20
    %s33 = sadd.s32 %s31, %s27
    %s34 = ssub.s32 %s32, %s33
    %p35 = scmp.eq.s32.totalorder %s34, 0
    %s37 = sadd.s32 %s36, 1
    %s38 = scalar_select %p35, %s36, %s37
    %p41 = pneg %p35
    %p42 = scmp.eq.s32.totalorder %s12, 1
    %p43 = por %p41, %p42
    %p44 = scmp.ne.s32.totalorder %s36, %s39
    %p45 = scmp.eq.s32.totalorder %s12, 0
    %p46 = por %p44, %p45
    %p47 = scmp.ne.s32.totalorder %s36, %s39
    %p48 = scmp.eq.s32.totalorder %s17, 1
    %p49 = por %p47, %p48
    %p50 = scmp.ne.s32.totalorder %s39, %s40
    %p51 = scmp.eq.s32.totalorder %s17, 0
    %p52 = por %p50, %p51
    %p53 = scmp.ne.s32.totalorder %s39, %s40
    %p54 = scmp.eq.s32.totalorder %s18, 1
    %p55 = por %p53, %p54
    %p57 = scmp.ne.s32.totalorder %s40, %s56
    %p58 = scmp.eq.s32.totalorder %s18, 0
    %p59 = por %p57, %p58
    %s61 = sadd.s32 %s60, 1
    %p64 = scmp.eq.s32.totalorder %s12, 1
    %p65 = scmp.ne.s32.totalorder %s60, %s62
    %p66 = scmp.eq.s32.totalorder %s12, 0
    %p67 = por %p65, %p66
    %p68 = scmp.ne.s32.totalorder %s60, %s62
    %p69 = scmp.eq.s32.totalorder %s17, 1
    %p70 = por %p68, %p69
    %p71 = scmp.ne.s32.totalorder %s62, %s63
    %p72 = scmp.eq.s32.totalorder %s17, 0
    %p73 = por %p71, %p72
    %p74 = scmp.ne.s32.totalorder %s62, %s63
    %p75 = scmp.eq.s32.totalorder %s18, 1
    %p76 = por %p74, %p75
    %p78 = scmp.ne.s32.totalorder %s63, %s77
    %p79 = scmp.eq.s32.totalorder %s18, 0
    %p80 = por %p78, %p79
    %s82 = sadd.s32 %s81, 1
    %p85 = scmp.eq.s32.totalorder %s12, 1
    %p86 = scmp.ne.s32.totalorder %s81, %s83
    %p87 = scmp.eq.s32.totalorder %s12, 0
    %p88 = por %p86, %p87
    %p89 = scmp.ne.s32.totalorder %s81, %s83
    %p90 = scmp.eq.s32.totalorder %s17, 1
    %p91 = por %p89, %p90
    %p92 = scmp.ne.s32.totalorder %s83, %s84
    %p93 = scmp.eq.s32.totalorder %s17, 0
    %p94 = por %p92, %p93
    %p95 = scmp.ne.s32.totalorder %s83, %s84
    %p96 = scmp.eq.s32.totalorder %s18, 1
    %p97 = por %p95, %p96
    %p99 = scmp.ne.s32.totalorder %s84, %s98
    %p100 = scmp.eq.s32.totalorder %s18, 0
    %p101 = por %p99, %p100
    %s102 = sadd.s32 %s19, %s20
    %s103 = sadd.s32 %s31, %s27
    %s104 = ssub.s32 %s102, %s103
    %p105 = scmp.eq.s32.totalorder %s104, 0
    %s107 = sadd.s32 %s106, 1
    %s108 = scalar_select %p105, %s106, %s107
    %p111 = pneg %p105
    %p112 = scmp.eq.s32.totalorder %s12, 1
    %p113 = por %p111, %p112
    %p114 = scmp.ne.s32.totalorder %s106, %s109
    %p115 = scmp.eq.s32.totalorder %s12, 0
    %p116 = por %p114, %p115
    %p117 = scmp.ne.s32.totalorder %s106, %s109
    %p118 = scmp.eq.s32.totalorder %s17, 1
    %p119 = por %p117, %p118
    %p120 = scmp.ne.s32.totalorder %s109, %s110
    %p121 = scmp.eq.s32.totalorder %s17, 0
    %p122 = por %p120, %p121
    %p123 = scmp.ne.s32.totalorder %s109, %s110
    %p124 = scmp.eq.s32.totalorder %s18, 1
    %p125 = por %p123, %p124
    %p127 = scmp.ne.s32.totalorder %s110, %s126
    %p128 = scmp.eq.s32.totalorder %s18, 0
    %p129 = por %p127, %p128
    %s130 = ssub.s32 %s19, %s31
    %p131 = scmp.eq.s32.totalorder %s130, 0
    %s133 = sadd.s32 %s132, 1
    %s134 = scalar_select %p131, %s132, %s133
    %p137 = pneg %p131
    %p138 = scmp.eq.s32.totalorder %s12, 1
    %p139 = por %p137, %p138
    %p140 = scmp.ne.s32.totalorder %s132, %s135
    %p141 = scmp.eq.s32.totalorder %s12, 0
    %p142 = por %p140, %p141
    %p143 = scmp.ne.s32.totalorder %s132, %s135
    %p144 = scmp.eq.s32.totalorder %s17, 1
    %p145 = por %p143, %p144
    %p146 = scmp.ne.s32.totalorder %s135, %s136
    %p147 = scmp.eq.s32.totalorder %s17, 0
    %p148 = por %p146, %p147
    %p149 = scmp.ne.s32.totalorder %s135, %s136
    %p150 = scmp.eq.s32.totalorder %s18, 1
    %p151 = por %p149, %p150
    %p153 = scmp.ne.s32.totalorder %s136, %s152
    %p154 = scmp.eq.s32.totalorder %s18, 0
    %p155 = por %p153, %p154
    %s156 = ssub.s32 %s19, %s31
    %p157 = scmp.eq.s32.totalorder %s156, 0
    %s159 = sadd.s32 %s158, 1
    %s160 = scalar_select %p157, %s158, %s159
    %p163 = pneg %p157
    %p164 = scmp.eq.s32.totalorder %s12, 1
    %p165 = por %p163, %p164
    %p166 = scmp.ne.s32.totalorder %s158, %s161
    %p167 = scmp.eq.s32.totalorder %s12, 0
    %p168 = por %p166, %p167
    %p169 = scmp.ne.s32.totalorder %s158, %s161
    %p170 = scmp.eq.s32.totalorder %s17, 1
    %p171 = por %p169, %p170
    %p172 = scmp.ne.s32.totalorder %s161, %s162
    %p173 = scmp.eq.s32.totalorder %s17, 0
    %p174 = por %p172, %p173
    %p175 = scmp.ne.s32.totalorder %s161, %s162
    %p176 = scmp.eq.s32.totalorder %s18, 1
    %p177 = por %p175, %p176
    %p179 = scmp.ne.s32.totalorder %s162, %s178
    %p180 = scmp.eq.s32.totalorder %s18, 0
    %p181 = por %p179, %p180
    %p182 = scmp.le.s32.totalorder 1, %s12
    %p183 = scmp.lt.s32.totalorder %s12, 3
    %p184 = pnand %p182, %p183
    %p185 = pneg %p184
    // Predicated region
    $region9: #{normalized_op_forward.2} parent=5 // pred_check
      _
    $region10: #{normalized_op_forward.2} parent=5 // pred_check_branch
      %187 = sbr.rel (%p184) target = $region12
    $region11: #{normalized_op_forward.2} parent=5 // pred_region
      %s188 = ssub.s32 %s12, 1
      // Predicated region
      $region13: #{normalized_op_forward.2} parent=11 // pred_check
        %p189 = pneg %p73
      $region14: #{normalized_op_forward.2} parent=11 // pred_check_branch
        %191 = sbr.rel (%p189) target = $region16
      $region15: #{normalized_op_forward.2} parent=11 // pred_region
        _
      $region16: #{normalized_op_forward.2} parent=11 // pred_fallthru
        _
      // Predicated region
      $region17: #{normalized_op_forward.2} parent=11 // pred_check
        %p192 = pneg %p94
      $region18: #{normalized_op_forward.2} parent=11 // pred_check_branch
        %194 = sbr.rel (%p192) target = $region20
      $region19: #{normalized_op_forward.2} parent=11 // pred_region
        _
      $region20: #{normalized_op_forward.2} parent=11 // pred_fallthru
        _
    $region12: #{normalized_op_forward.2} parent=5 // pred_fallthru
      _
    %p195 = scmp.lt.s32.totalorder %s12, 2
    // Predicated region
    $region21: #{normalized_op_forward.2} parent=5 // pred_check
      %p196 = pneg %p195
    $region22: #{normalized_op_forward.2} parent=5 // pred_check_branch
      %198 = sbr.rel (%p196) target = $region24
    $region23: #{normalized_op_forward.2} parent=5 // pred_region
      // Predicated region
      $region25: #{normalized_op_forward.2} parent=23 // pred_check
        %p199 = pneg %p46
      $region26: #{normalized_op_forward.2} parent=23 // pred_check_branch
        %201 = sbr.rel (%p199) target = $region28
      $region27: #{normalized_op_forward.2} parent=23 // pred_region
        %s202 = sadd.s32 %s19, %s20
        %s203 = smul.u32 41, %s202
        %p204 = scmp.lt.s32.totalorder %s203, 81
        %s205 = scalar_select %p204, %s203, 81
        %s206 = smul.addr %s205, 4
        %s207 = scalar_lea.vmem %s0, %s206
        %s208 = sadd.s32 %s19, %s20
        %s209 = smul.u32 41, %s208
      $region28: #{normalized_op_forward.2} parent=23 // pred_fallthru
        _
    $region24: #{normalized_op_forward.2} parent=5 // pred_fallthru
      _
    %p210 = scmp.le.s32.totalorder 1, %s12
    %p211 = scmp.lt.s32.totalorder %s12, 3
    %p212 = pnand %p210, %p211
    %p213 = pneg %p212
    // Predicated region
    $region29: #{normalized_op_forward.2} parent=5 // pred_check
      _
    $region30: #{normalized_op_forward.2} parent=5 // pred_check_branch
      %215 = sbr.rel (%p212) target = $region32
    $region31: #{normalized_op_forward.2} parent=5 // pred_region
      %s216 = ssub.s32 %s12, 1
      %s217 = sadd.s32 %s21, %s22
      %s218 = smul.u32 41, %s217
      %p219 = scmp.lt.s32.totalorder %s218, 81
      %s220 = scalar_select %p219, %s218, 81
      %s221 = smul.addr %s220, 4
      %s222 = scalar_lea.vmem %s0, %s221
      %p223 = pneg %p52
      %p224 = pneg %p49
      %p225 = pneg %p73
      %p226 = pneg %p70
      %p227 = pneg %p94
      %p228 = pneg %p91
      %p229 = pneg %p122
      %p230 = pneg %p119
      %s231 = sadd.s32 %s21, %s22
      %s232 = smul.u32 36, %s231
      %p233 = scmp.lt.s32.totalorder %s232, 71
      %s234 = scalar_select %p233, %s232, 71
      %s235 = smul.addr %s234, 8
      %s236 = scalar_lea.vmem %s3, %s235
      %p237 = pneg %p148
      %p238 = pneg %p145
      %p239 = scmp.lt.s32.totalorder %s21, 1
      %s240 = scalar_select %p239, %s21, 1
      %s241 = smul.addr %s240, 8
      %s242 = scalar_lea.vmem %s4, %s241
      %p243 = pneg %p174
      %p244 = pneg %p171
      %p245 = scmp.lt.s32.totalorder %s21, 1
      %s246 = scalar_select %p245, %s21, 1
      %s247 = smul.addr %s246, 8
      %s248 = scalar_lea.vmem %s5, %s247
      %s249 = sadd.s32 %s21, %s22
      %s250 = smul.u32 41, %s249
      %p251 = scmp.lt.s32.totalorder %s250, 81
      %s252 = scalar_select %p251, %s250, 81
      %s253 = smul.addr %s252, 4
      %s254 = scalar_lea.vmem %s0, %s253
      %s255 = sadd.s32 %s21, %s22
      %s256 = smul.u32 41, %s255
      %s257 = sadd.s32 %s21, %s22
      %s258 = smul.u32 36, %s257
      %p259 = scmp.lt.s32.totalorder %s258, 71
      %s260 = scalar_select %p259, %s258, 71
      %s261 = smul.addr %s260, 8
      %s262 = scalar_lea.vmem %s3, %s261
      %s263 = sadd.s32 %s21, %s22
      %s264 = smul.u32 36, %s263
      %p265 = scmp.lt.s32.totalorder %s21, 1
      %s266 = scalar_select %p265, %s21, 1
      %s267 = smul.addr %s266, 8
      %s268 = scalar_lea.vmem %s4, %s267
      %p269 = scmp.lt.s32.totalorder %s21, 1
      %s270 = scalar_select %p269, %s21, 1
      %s271 = smul.addr %s270, 8
      %s272 = scalar_lea.vmem %s5, %s271
      %p274 = scmp.eq.s32.totalorder %s22, 0
      // Predicated region
      $region33: #{normalized_op_forward.2} parent=31 // pred_check
        %p275 = pneg %p274
      $region34: #{normalized_op_forward.2} parent=31 // pred_check_branch
        %277 = sbr.rel (%p275) target = $region36
      $region35: #{normalized_op_forward.2} parent=31 // pred_region
        %278 = vst [vmem:[%s268] sm:$0xff] 0.0
        %279 = vst [vmem:[%s272] sm:$0xff] 0.0
      $region36: #{normalized_op_forward.2} parent=31 // pred_fallthru
        _
      %v280 = vld [vmem:[%s254] sm:$0xf]
      %v281 = vld [vmem:[%s254 + $0x4] sm:$0xf]
      %v282 = vld [vmem:[%s254 + $0x8] sm:$0xf]
      %v283 = vld [vmem:[%s254 + $0xc] sm:$0xf]
      %v284 = vld [vmem:[%s254 + $0x10] sm:$0xf]
      %v285 = vld [vmem:[%s254 + $0x14] sm:$0xf]
      %v286 = vld [vmem:[%s254 + $0x18] sm:$0xf]
      %v287 = vld [vmem:[%s254 + $0x1c] sm:$0xf]
      %v288 = vld [vmem:[%s254 + $0x20] sm:$0xf]
      %v289 = vld [vmem:[%s254 + $0x24] sm:$0xf]
      %v290 = vld [vmem:[%s254 + $0x28] sm:$0xf]
      %v291 = vld [vmem:[%s254 + $0x2c] sm:$0xf]
      %v292 = vld [vmem:[%s254 + $0x30] sm:$0xf]
      %v293 = vld [vmem:[%s254 + $0x34] sm:$0xf]
      %v294 = vld [vmem:[%s254 + $0x38] sm:$0xf]
      %v295 = vld [vmem:[%s254 + $0x3c] sm:$0xf]
      %v296 = vld [vmem:[%s254 + $0x40] sm:$0xf]
      %v297 = vld [vmem:[%s254 + $0x44] sm:$0xf]
      %v298 = vld [vmem:[%s254 + $0x48] sm:$0xf]
      %v299 = vld [vmem:[%s254 + $0x4c] sm:$0xf]
      %v300 = vld [vmem:[%s254 + $0x50] sm:$0xf]
      %v301 = vld [vmem:[%s254 + $0x54] sm:$0xf]
      %v302 = vld [vmem:[%s254 + $0x58] sm:$0xf]
      %v303 = vld [vmem:[%s254 + $0x5c] sm:$0xf]
      %v304 = vld [vmem:[%s254 + $0x60] sm:$0xf]
      %v305 = vld [vmem:[%s254 + $0x64] sm:$0xf]
      %v306 = vld [vmem:[%s254 + $0x68] sm:$0xf]
      %v307 = vld [vmem:[%s254 + $0x6c] sm:$0xf]
      %v308 = vld [vmem:[%s254 + $0x70] sm:$0xf]
      %v309 = vld [vmem:[%s254 + $0x74] sm:$0xf]
      %v310 = vld [vmem:[%s254 + $0x78] sm:$0xf]
      %v311 = vld [vmem:[%s254 + $0x7c] sm:$0xf]
      %v312 = vld [vmem:[%s254 + $0x80] sm:$0xf]
      %v313 = vld [vmem:[%s254 + $0x84] sm:$0xf]
      %v314 = vld [vmem:[%s254 + $0x88] sm:$0xf]
      %v315 = vld [vmem:[%s254 + $0x8c] sm:$0xf]
      %v316 = vld [vmem:[%s1] sm:$0x3]
      %v317 = vld [vmem:[%s254 + $0x90] sm:$0x1]
      %s318 = scalar_lea.vmem %s1, 2
      %v319 = vld [vmem:[%s318] sm:$0x3]
      %v357 = vunpack.c.l.b16 %v280
      %v358 = vunpack.c.l.b16 %v281
      %v359 = vunpack.c.l.b16 %v282
      %v360 = vunpack.c.l.b16 %v283
      %v361 = vunpack.c.l.b16 %v284
      %v362 = vunpack.c.l.b16 %v285
      %v363 = vunpack.c.l.b16 %v286
      %v364 = vunpack.c.l.b16 %v287
      %v365 = vunpack.c.l.b16 %v288
      %v366 = vunpack.c.l.b16 %v289
      %v367 = vunpack.c.l.b16 %v290
      %v368 = vunpack.c.l.b16 %v291
      %v369 = vunpack.c.l.b16 %v292
      %v370 = vunpack.c.l.b16 %v293
      %v371 = vunpack.c.l.b16 %v294
      %v372 = vunpack.c.l.b16 %v295
      %v373 = vunpack.c.l.b16 %v296
      %v374 = vunpack.c.l.b16 %v297
      %v375 = vunpack.c.l.b16 %v298
      %v376 = vunpack.c.l.b16 %v299
      %v377 = vunpack.c.l.b16 %v300
      %v378 = vunpack.c.l.b16 %v301
      %v379 = vunpack.c.l.b16 %v302
      %v380 = vunpack.c.l.b16 %v303
      %v381 = vunpack.c.l.b16 %v304
      %v382 = vunpack.c.l.b16 %v305
      %v383 = vunpack.c.l.b16 %v306
      %v384 = vunpack.c.l.b16 %v307
      %v385 = vunpack.c.l.b16 %v308
      %v386 = vunpack.c.l.b16 %v309
      %v387 = vunpack.c.l.b16 %v310
      %v388 = vunpack.c.l.b16 %v311
      %v389 = vunpack.c.l.b16 %v312
      %v390 = vunpack.c.l.b16 %v313
      %v391 = vunpack.c.l.b16 %v314
      %v392 = vunpack.c.l.b16 %v315
      %v393 = vunpack.c.l.b16 %v317
      %v394 = vpack.c.b16 %v358, %v357
      %v395 = vpack.c.b16 %v360, %v359
      %v396 = vpack.c.b16 %v362, %v361
      %v397 = vpack.c.b16 %v364, %v363
      %v398 = vpack.c.b16 %v366, %v365
      %v399 = vpack.c.b16 %v368, %v367
      %v400 = vpack.c.b16 %v370, %v369
      %v401 = vpack.c.b16 %v372, %v371
      %v402 = vpack.c.b16 %v374, %v373
      %v403 = vpack.c.b16 %v376, %v375
      %v404 = vpack.c.b16 %v378, %v377
      %v405 = vpack.c.b16 %v380, %v379
      %v406 = vpack.c.b16 %v382, %v381
      %v407 = vpack.c.b16 %v384, %v383
      %v408 = vpack.c.b16 %v386, %v385
      %v409 = vpack.c.b16 %v388, %v387
      %v410 = vpack.c.b16 %v390, %v389
      %v411 = vpack.c.b16 %v392, %v391
      %v412 = vpack.c.b16 %v393, %v393
      %vm413 = vsmask.f32 7424
      %v415 = vshrl.u32 %v394, 16
      %v417 = vshll.u32 %v394, 16
      %v419 = vrot.slane %v417, 1
      %v420 = vor.u32 %v415, %v419
      %v422 = vshll.u32 %v395, 16
      %v424 = vrot.slane %v422, 1
      %v425 = vsel %vm413, %v420, %v424
      %v426 = vshrl.u32 %v395, 16
      %v428 = vor.u32 %v426, %v424
      %v430 = vshll.u32 %v396, 16
      %v432 = vrot.slane %v430, 1
      %v433 = vsel %vm413, %v428, %v432
      %v434 = vshrl.u32 %v396, 16
      %v436 = vor.u32 %v434, %v432
      %v438 = vshll.u32 %v397, 16
      %v440 = vrot.slane %v438, 1
      %v441 = vsel %vm413, %v436, %v440
      %v442 = vshrl.u32 %v397, 16
      %v444 = vor.u32 %v442, %v440
      %v446 = vshll.u32 %v398, 16
      %v448 = vrot.slane %v446, 1
      %v449 = vsel %vm413, %v444, %v448
      %v450 = vshrl.u32 %v398, 16
      %v452 = vor.u32 %v450, %v448
      %v454 = vshll.u32 %v399, 16
      %v456 = vrot.slane %v454, 1
      %v457 = vsel %vm413, %v452, %v456
      %v458 = vshrl.u32 %v399, 16
      %v460 = vor.u32 %v458, %v456
      %v462 = vshll.u32 %v400, 16
      %v464 = vrot.slane %v462, 1
      %v465 = vsel %vm413, %v460, %v464
      %v466 = vshrl.u32 %v400, 16
      %v468 = vor.u32 %v466, %v464
      %v470 = vshll.u32 %v401, 16
      %v472 = vrot.slane %v470, 1
      %v473 = vsel %vm413, %v468, %v472
      %v474 = vshrl.u32 %v401, 16
      %v476 = vor.u32 %v474, %v472
      %v478 = vshll.u32 %v402, 16
      %v480 = vrot.slane %v478, 1
      %v481 = vsel %vm413, %v476, %v480
      %v482 = vshrl.u32 %v402, 16
      %v484 = vor.u32 %v482, %v480
      %v486 = vshll.u32 %v403, 16
      %v488 = vrot.slane %v486, 1
      %v489 = vsel %vm413, %v484, %v488
      %v490 = vshrl.u32 %v403, 16
      %v492 = vor.u32 %v490, %v488
      %v494 = vshll.u32 %v404, 16
      %v496 = vrot.slane %v494, 1
      %v497 = vsel %vm413, %v492, %v496
      %v498 = vshrl.u32 %v404, 16
      %v500 = vor.u32 %v498, %v496
      %v502 = vshll.u32 %v405, 16
      %v504 = vrot.slane %v502, 1
      %v505 = vsel %vm413, %v500, %v504
      %v506 = vshrl.u32 %v405, 16
      %v508 = vor.u32 %v506, %v504
      %v510 = vshll.u32 %v406, 16
      %v512 = vrot.slane %v510, 1
      %v513 = vsel %vm413, %v508, %v512
      %v514 = vshrl.u32 %v406, 16
      %v516 = vor.u32 %v514, %v512
      %v518 = vshll.u32 %v407, 16
      %v520 = vrot.slane %v518, 1
      %v521 = vsel %vm413, %v516, %v520
      %v522 = vshrl.u32 %v407, 16
      %v524 = vor.u32 %v522, %v520
      %v526 = vshll.u32 %v408, 16
      %v528 = vrot.slane %v526, 1
      %v529 = vsel %vm413, %v524, %v528
      %v530 = vshrl.u32 %v408, 16
      %v532 = vor.u32 %v530, %v528
      %v534 = vshll.u32 %v409, 16
      %v536 = vrot.slane %v534, 1
      %v537 = vsel %vm413, %v532, %v536
      %v538 = vshrl.u32 %v409, 16
      %v540 = vor.u32 %v538, %v536
      %v542 = vshll.u32 %v410, 16
      %v544 = vrot.slane %v542, 1
      %v545 = vsel %vm413, %v540, %v544
      %v546 = vshrl.u32 %v410, 16
      %v548 = vor.u32 %v546, %v544
      %v550 = vshll.u32 %v411, 16
      %v552 = vrot.slane %v550, 1
      %v553 = vsel %vm413, %v548, %v552
      %v554 = vshrl.u32 %v411, 16
      %v556 = vor.u32 %v554, %v552
      %v558 = vshll.u32 %v412, 16
      %v560 = vrot.slane %v558, 1
      %v561 = vsel %vm413, %v556, %v560
      %vm562 = vcmask 31744
      %v564 = vsel %vm562, %v425, 0
      %v567 = vsel %vm562, %v433, 0
      %v570 = vsel %vm562, %v441, 0
      %v573 = vsel %vm562, %v449, 0
      %v576 = vsel %vm562, %v457, 0
      %v579 = vsel %vm562, %v465, 0
      %v582 = vsel %vm562, %v473, 0
      %v585 = vsel %vm562, %v481, 0
      %v588 = vsel %vm562, %v489, 0
      %v591 = vsel %vm562, %v497, 0
      %v594 = vsel %vm562, %v505, 0
      %v597 = vsel %vm562, %v513, 0
      %v600 = vsel %vm562, %v521, 0
      %v603 = vsel %vm562, %v529, 0
      %v606 = vsel %vm562, %v537, 0
      %v609 = vsel %vm562, %v545, 0
      %v612 = vsel %vm562, %v553, 0
      %v615 = vsel %vm562, %v561, 0
      %vm617 = vcmask 1041408
      %v619 = vsel %vm617, %v319, 0
      %621 = vmatprep.subr.bf16.mxu0 0
      %622 = vmatpush1.bf16.msra.mxu0 %v619
      %623 = vmatprep.subr.bf16.mxu0 0
      %624 = vmatpush1.bf16.msra.mxu0 0
      %625 = vmatprep.subr.bf16.mxu0 0
      %626 = vmatpush1.bf16.msra.mxu0 0
      %627 = vmatprep.subr.bf16.mxu0 0
      %628 = vmatpush1.bf16.msra.mxu0 0
      %629 = vmatprep.subr.bf16.mxu0 0
      %630 = vmatpush1.bf16.msra.mxu0 0
      %631 = vmatprep.subr.bf16.mxu0 0
      %632 = vmatpush1.bf16.msra.mxu0 0
      %633 = vmatprep.subr.bf16.mxu0 0
      %634 = vmatpush1.bf16.msra.mxu0 0
      %635 = vmatprep.subr.bf16.mxu0 0
      %636 = vmatpush1.bf16.msra.mxu0 0
      %637 = vmatprep.subr.bf16.mxu0 0
      %638 = vmatpush1.bf16.msra.mxu0 0
      %639 = vmatprep.subr.bf16.mxu0 0
      %640 = vmatpush1.bf16.msra.mxu0 0
      %641 = vmatprep.subr.bf16.mxu0 0
      %642 = vmatpush1.bf16.msra.mxu0 0
      %643 = vmatprep.subr.bf16.mxu0 0
      %644 = vmatpush1.bf16.msra.mxu0 0
      %645 = vmatprep.subr.bf16.mxu0 0
      %646 = vmatpush1.bf16.msra.mxu0 0
      %647 = vmatprep.subr.bf16.mxu0 0
      %648 = vmatpush1.bf16.msra.mxu0 0
      %649 = vmatprep.subr.bf16.mxu0 0
      %650 = vmatpush1.bf16.msra.mxu0 0
      %651 = vmatprep.subr.bf16.mxu0 0
      %652 = vmatpush1.bf16.msra.mxu0 0
      %653 = vmatprep.mubr.bf16.mxu0 0
      %654 = vmatmul.mubr.bf16.gmra.mrb[0].mxu0 %v564
      %v655 = vpop.f32.mrb[0].mxu0
      %v656 = vadd.f32 0.0, %v655
      %v657 = vpop.f32.mrb[0].mxu0
      %v658 = vpop.f32.mrb[0].mxu0
      %v659 = vadd.f32 0.0, %v658
      %v660 = vpop.f32.mrb[0].mxu0
      %661 = vmatprep.mubr.bf16.mxu0 0
      %662 = vmatmul.mubr.bf16.gmra.mrb[0].mxu0 %v567
      %v663 = vpop.f32.mrb[0].mxu0
      %v664 = vadd.f32 0.0, %v663
      %v665 = vpop.f32.mrb[0].mxu0
      %v666 = vpop.f32.mrb[0].mxu0
      %v667 = vadd.f32 0.0, %v666
      %v668 = vpop.f32.mrb[0].mxu0
      %669 = vmatprep.mubr.bf16.mxu0 0
      %670 = vmatmul.mubr.bf16.gmra.mrb[0].mxu0 %v570
      %v671 = vpop.f32.mrb[0].mxu0
      %v672 = vadd.f32 0.0, %v671
      %v673 = vpop.f32.mrb[0].mxu0
      %v674 = vpop.f32.mrb[0].mxu0
      %v675 = vadd.f32 0.0, %v674
      %v676 = vpop.f32.mrb[0].mxu0
      %677 = vmatprep.mubr.bf16.mxu0 0
      %678 = vmatmul.mubr.bf16.gmra.mrb[0].mxu0 %v573
      %v679 = vpop.f32.mrb[0].mxu0
      %v680 = vadd.f32 0.0, %v679
      %v681 = vpop.f32.mrb[0].mxu0
      %v682 = vpop.f32.mrb[0].mxu0
      %v683 = vadd.f32 0.0, %v682
      %v684 = vpop.f32.mrb[0].mxu0
      %685 = vmatprep.mubr.bf16.mxu0 0
      %686 = vmatmul.mubr.bf16.gmra.mrb[0].mxu0 %v576
      %v687 = vpop.f32.mrb[0].mxu0
      %v688 = vadd.f32 0.0, %v687
      %v689 = vpop.f32.mrb[0].mxu0
      %v690 = vpop.f32.mrb[0].mxu0
      %v691 = vadd.f32 0.0, %v690
      %v692 = vpop.f32.mrb[0].mxu0
      %693 = vmatprep.mubr.bf16.mxu0 0
      %694 = vmatmul.mubr.bf16.gmra.mrb[0].mxu0 %v579
      %v695 = vpop.f32.mrb[0].mxu0
      %v696 = vadd.f32 0.0, %v695
      %v697 = vpop.f32.mrb[0].mxu0
      %v698 = vpop.f32.mrb[0].mxu0
      %v699 = vadd.f32 0.0, %v698
      %v700 = vpop.f32.mrb[0].mxu0
      %701 = vmatprep.mubr.bf16.mxu0 0
      %702 = vmatmul.mubr.bf16.gmra.mrb[0].mxu0 %v582
      %v703 = vpop.f32.mrb[0].mxu0
      %v704 = vadd.f32 0.0, %v703
      %v705 = vpop.f32.mrb[0].mxu0
      %v706 = vpop.f32.mrb[0].mxu0
      %v707 = vadd.f32 0.0, %v706
      %v708 = vpop.f32.mrb[0].mxu0
      %709 = vmatprep.mubr.bf16.mxu0 0
      %710 = vmatmul.mubr.bf16.gmra.mrb[0].mxu0 %v585
      %v711 = vpop.f32.mrb[0].mxu0
      %v712 = vadd.f32 0.0, %v711
      %v713 = vpop.f32.mrb[0].mxu0
      %v714 = vpop.f32.mrb[0].mxu0
      %v715 = vadd.f32 0.0, %v714
      %v716 = vpop.f32.mrb[0].mxu0
      %717 = vmatprep.mubr.bf16.mxu0 0
      %718 = vmatmul.mubr.bf16.gmra.mrb[0].mxu0 %v588
      %v719 = vpop.f32.mrb[0].mxu0
      %v720 = vadd.f32 0.0, %v719
      %v721 = vpop.f32.mrb[0].mxu0
      %v722 = vpop.f32.mrb[0].mxu0
      %v723 = vadd.f32 0.0, %v722
      %v724 = vpop.f32.mrb[0].mxu0
      %725 = vmatprep.mubr.bf16.mxu0 0
      %726 = vmatmul.mubr.bf16.gmra.mrb[0].mxu0 %v591
      %v727 = vpop.f32.mrb[0].mxu0
      %v728 = vadd.f32 0.0, %v727
      %v729 = vpop.f32.mrb[0].mxu0
      %v730 = vpop.f32.mrb[0].mxu0
      %v731 = vadd.f32 0.0, %v730
      %v732 = vpop.f32.mrb[0].mxu0
      %733 = vmatprep.mubr.bf16.mxu0 0
      %734 = vmatmul.mubr.bf16.gmra.mrb[0].mxu0 %v594
      %v735 = vpop.f32.mrb[0].mxu0
      %v736 = vadd.f32 0.0, %v735
      %v737 = vpop.f32.mrb[0].mxu0
      %v738 = vpop.f32.mrb[0].mxu0
      %v739 = vadd.f32 0.0, %v738
      %v740 = vpop.f32.mrb[0].mxu0
      %741 = vmatprep.mubr.bf16.mxu0 0
      %742 = vmatmul.mubr.bf16.gmra.mrb[0].mxu0 %v597
      %v743 = vpop.f32.mrb[0].mxu0
      %v744 = vadd.f32 0.0, %v743
      %v745 = vpop.f32.mrb[0].mxu0
      %v746 = vpop.f32.mrb[0].mxu0
      %v747 = vadd.f32 0.0, %v746
      %v748 = vpop.f32.mrb[0].mxu0
      %749 = vmatprep.mubr.bf16.mxu0 0
      %750 = vmatmul.mubr.bf16.gmra.mrb[0].mxu0 %v600
      %v751 = vpop.f32.mrb[0].mxu0
      %v752 = vadd.f32 0.0, %v751
      %v753 = vpop.f32.mrb[0].mxu0
      %v754 = vpop.f32.mrb[0].mxu0
      %v755 = vadd.f32 0.0, %v754
      %v756 = vpop.f32.mrb[0].mxu0
      %757 = vmatprep.mubr.bf16.mxu0 0
      %758 = vmatmul.mubr.bf16.gmra.mrb[0].mxu0 %v603
      %v759 = vpop.f32.mrb[0].mxu0
      %v760 = vadd.f32 0.0, %v759
      %v761 = vpop.f32.mrb[0].mxu0
      %v762 = vpop.f32.mrb[0].mxu0
      %v763 = vadd.f32 0.0, %v762
      %v764 = vpop.f32.mrb[0].mxu0
      %765 = vmatprep.mubr.bf16.mxu0 0
      %766 = vmatmul.mubr.bf16.gmra.mrb[0].mxu0 %v606
      %v767 = vpop.f32.mrb[0].mxu0
      %v768 = vadd.f32 0.0, %v767
      %v769 = vpop.f32.mrb[0].mxu0
      %v770 = vpop.f32.mrb[0].mxu0
      %v771 = vadd.f32 0.0, %v770
      %v772 = vpop.f32.mrb[0].mxu0
      %773 = vmatprep.mubr.bf16.mxu0 0
      %774 = vmatmul.mubr.bf16.gmra.mrb[0].mxu0 %v609
      %v775 = vpop.f32.mrb[0].mxu0
      %v776 = vadd.f32 0.0, %v775
      %v777 = vpop.f32.mrb[0].mxu0
      %v778 = vpop.f32.mrb[0].mxu0
      %v779 = vadd.f32 0.0, %v778
      %v780 = vpop.f32.mrb[0].mxu0
      %781 = vmatprep.mubr.bf16.mxu0 0
      %782 = vmatmul.mubr.bf16.gmra.mrb[0].mxu0 %v612
      %v783 = vpop.f32.mrb[0].mxu0
      %v784 = vadd.f32 0.0, %v783
      %v785 = vpop.f32.mrb[0].mxu0
      %v786 = vpop.f32.mrb[0].mxu0
      %v787 = vadd.f32 0.0, %v786
      %v788 = vpop.f32.mrb[0].mxu0
      %789 = vmatprep.mubr.bf16.mxu0 0
      %790 = vmatmul.mubr.bf16.gmra.mrb[0].mxu0 %v615
      %v791 = vpop.f32.mrb[0].mxu0
      %v792 = vadd.f32 0.0, %v791
      %v793 = vpop.f32.mrb[0].mxu0
      %v794 = vpop.f32.mrb[0].mxu0
      %v795 = vadd.f32 0.0, %v794
      %v796 = vpop.f32.mrb[0].mxu0
      %797 = vdwg.mxu0
      %v798 = vsel %vm562, %v394, 0
      %v800 = vsel %vm562, %v395, 0
      %v802 = vsel %vm562, %v396, 0
      %v804 = vsel %vm562, %v397, 0
      %v806 = vsel %vm562, %v398, 0
      %v808 = vsel %vm562, %v399, 0
      %v810 = vsel %vm562, %v400, 0
      %v812 = vsel %vm562, %v401, 0
      %v814 = vsel %vm562, %v402, 0
      %v816 = vsel %vm562, %v403, 0
      %v818 = vsel %vm562, %v404, 0
      %v820 = vsel %vm562, %v405, 0
      %v822 = vsel %vm562, %v406, 0
      %v824 = vsel %vm562, %v407, 0
      %v826 = vsel %vm562, %v408, 0
      %v828 = vsel %vm562, %v409, 0
      %v830 = vsel %vm562, %v410, 0
      %v832 = vsel %vm562, %v411, 0
      %v835 = vsel %vm617, %v316, 0
      %837 = vmatprep.subr.bf16.mxu0 0
      %838 = vmatpush1.bf16.msra.mxu0 %v835
      %839 = vmatprep.subr.bf16.mxu0 0
      %840 = vmatpush1.bf16.msra.mxu0 0
      %841 = vmatprep.subr.bf16.mxu0 0
      %842 = vmatpush1.bf16.msra.mxu0 0
      %843 = vmatprep.subr.bf16.mxu0 0
      %844 = vmatpush1.bf16.msra.mxu0 0
      %845 = vmatprep.subr.bf16.mxu0 0
      %846 = vmatpush1.bf16.msra.mxu0 0
      %847 = vmatprep.subr.bf16.mxu0 0
      %848 = vmatpush1.bf16.msra.mxu0 0
      %849 = vmatprep.subr.bf16.mxu0 0
      %850 = vmatpush1.bf16.msra.mxu0 0
      %851 = vmatprep.subr.bf16.mxu0 0
      %852 = vmatpush1.bf16.msra.mxu0 0
      %853 = vmatprep.subr.bf16.mxu0 0
      %854 = vmatpush1.bf16.msra.mxu0 0
      %855 = vmatprep.subr.bf16.mxu0 0
      %856 = vmatpush1.bf16.msra.mxu0 0
      %857 = vmatprep.subr.bf16.mxu0 0
      %858 = vmatpush1.bf16.msra.mxu0 0
      %859 = vmatprep.subr.bf16.mxu0 0
      %860 = vmatpush1.bf16.msra.mxu0 0
      %861 = vmatprep.subr.bf16.mxu0 0
      %862 = vmatpush1.bf16.msra.mxu0 0
      %863 = vmatprep.subr.bf16.mxu0 0
      %864 = vmatpush1.bf16.msra.mxu0 0
      %865 = vmatprep.subr.bf16.mxu0 0
      %866 = vmatpush1.bf16.msra.mxu0 0
      %867 = vmatprep.subr.bf16.mxu0 0
      %868 = vmatpush1.bf16.msra.mxu0 0
      %869 = vmatprep.mubr.bf16.mxu0 0
      %870 = vmatmul.mubr.bf16.gmra.mrb[0].mxu0 %v798
      %v871 = vpop.f32.mrb[0].mxu0
      %v872 = vadd.f32 %v656, %v871
      %v873 = vpop.f32.mrb[0].mxu0
      %v874 = vpop.f32.mrb[0].mxu0
      %v875 = vadd.f32 %v659, %v874
      %v876 = vpop.f32.mrb[0].mxu0
      %877 = vmatprep.mubr.bf16.mxu0 0
      %878 = vmatmul.mubr.bf16.gmra.mrb[0].mxu0 %v800
      %v879 = vpop.f32.mrb[0].mxu0
      %v880 = vadd.f32 %v664, %v879
      %v881 = vpop.f32.mrb[0].mxu0
      %v882 = vpop.f32.mrb[0].mxu0
      %v883 = vadd.f32 %v667, %v882
      %v884 = vpop.f32.mrb[0].mxu0
      %885 = vmatprep.mubr.bf16.mxu0 0
      %886 = vmatmul.mubr.bf16.gmra.mrb[0].mxu0 %v802
      %v887 = vpop.f32.mrb[0].mxu0
      %v888 = vadd.f32 %v672, %v887
      %v889 = vpop.f32.mrb[0].mxu0
      %v890 = vpop.f32.mrb[0].mxu0
      %v891 = vadd.f32 %v675, %v890
      %v892 = vpop.f32.mrb[0].mxu0
      %893 = vmatprep.mubr.bf16.mxu0 0
      %894 = vmatmul.mubr.bf16.gmra.mrb[0].mxu0 %v804
      %v895 = vpop.f32.mrb[0].mxu0
      %v896 = vadd.f32 %v680, %v895
      %v897 = vpop.f32.mrb[0].mxu0
      %v898 = vpop.f32.mrb[0].mxu0
      %v899 = vadd.f32 %v683, %v898
      %v900 = vpop.f32.mrb[0].mxu0
      %901 = vmatprep.mubr.bf16.mxu0 0
      %902 = vmatmul.mubr.bf16.gmra.mrb[0].mxu0 %v806
      %v903 = vpop.f32.mrb[0].mxu0
      %v904 = vadd.f32 %v688, %v903
      %v905 = vpop.f32.mrb[0].mxu0
      %v906 = vpop.f32.mrb[0].mxu0
      %v907 = vadd.f32 %v691, %v906
      %v908 = vpop.f32.mrb[0].mxu0
      %909 = vmatprep.mubr.bf16.mxu0 0
      %910 = vmatmul.mubr.bf16.gmra.mrb[0].mxu0 %v808
      %v911 = vpop.f32.mrb[0].mxu0
      %v912 = vadd.f32 %v696, %v911
      %v913 = vpop.f32.mrb[0].mxu0
      %v914 = vpop.f32.mrb[0].mxu0
      %v915 = vadd.f32 %v699, %v914
      %v916 = vpop.f32.mrb[0].mxu0
      %917 = vmatprep.mubr.bf16.mxu0 0
      %918 = vmatmul.mubr.bf16.gmra.mrb[0].mxu0 %v810
      %v919 = vpop.f32.mrb[0].mxu0
      %v920 = vadd.f32 %v704, %v919
      %v921 = vpop.f32.mrb[0].mxu0
      %v922 = vpop.f32.mrb[0].mxu0
      %v923 = vadd.f32 %v707, %v922
      %v924 = vpop.f32.mrb[0].mxu0
      %925 = vmatprep.mubr.bf16.mxu0 0
      %926 = vmatmul.mubr.bf16.gmra.mrb[0].mxu0 %v812
      %v927 = vpop.f32.mrb[0].mxu0
      %v928 = vadd.f32 %v712, %v927
      %v929 = vpop.f32.mrb[0].mxu0
      %v930 = vpop.f32.mrb[0].mxu0
      %v931 = vadd.f32 %v715, %v930
      %v932 = vpop.f32.mrb[0].mxu0
      %933 = vmatprep.mubr.bf16.mxu0 0
      %934 = vmatmul.mubr.bf16.gmra.mrb[0].mxu0 %v814
      %v935 = vpop.f32.mrb[0].mxu0
      %v936 = vadd.f32 %v720, %v935
      %v937 = vpop.f32.mrb[0].mxu0
      %v938 = vpop.f32.mrb[0].mxu0
      %v939 = vadd.f32 %v723, %v938
      %v940 = vpop.f32.mrb[0].mxu0
      %941 = vmatprep.mubr.bf16.mxu0 0
      %942 = vmatmul.mubr.bf16.gmra.mrb[0].mxu0 %v816
      %v943 = vpop.f32.mrb[0].mxu0
      %v944 = vadd.f32 %v728, %v943
      %v945 = vpop.f32.mrb[0].mxu0
      %v946 = vpop.f32.mrb[0].mxu0
      %v947 = vadd.f32 %v731, %v946
      %v948 = vpop.f32.mrb[0].mxu0
      %949 = vmatprep.mubr.bf16.mxu0 0
      %950 = vmatmul.mubr.bf16.gmra.mrb[0].mxu0 %v818
      %v951 = vpop.f32.mrb[0].mxu0
      %v952 = vadd.f32 %v736, %v951
      %v953 = vpop.f32.mrb[0].mxu0
      %v954 = vpop.f32.mrb[0].mxu0
      %v955 = vadd.f32 %v739, %v954
      %v956 = vpop.f32.mrb[0].mxu0
      %957 = vmatprep.mubr.bf16.mxu0 0
      %958 = vmatmul.mubr.bf16.gmra.mrb[0].mxu0 %v820
      %v959 = vpop.f32.mrb[0].mxu0
      %v960 = vadd.f32 %v744, %v959
      %v961 = vpop.f32.mrb[0].mxu0
      %v962 = vpop.f32.mrb[0].mxu0
      %v963 = vadd.f32 %v747, %v962
      %v964 = vpop.f32.mrb[0].mxu0
      %965 = vmatprep.mubr.bf16.mxu0 0
      %966 = vmatmul.mubr.bf16.gmra.mrb[0].mxu0 %v822
      %v967 = vpop.f32.mrb[0].mxu0
      %v968 = vadd.f32 %v752, %v967
      %v969 = vpop.f32.mrb[0].mxu0
      %v970 = vpop.f32.mrb[0].mxu0
      %v971 = vadd.f32 %v755, %v970
      %v972 = vpop.f32.mrb[0].mxu0
      %973 = vmatprep.mubr.bf16.mxu0 0
      %974 = vmatmul.mubr.bf16.gmra.mrb[0].mxu0 %v824
      %v975 = vpop.f32.mrb[0].mxu0
      %v976 = vadd.f32 %v760, %v975
      %v977 = vpop.f32.mrb[0].mxu0
      %v978 = vpop.f32.mrb[0].mxu0
      %v979 = vadd.f32 %v763, %v978
      %v980 = vpop.f32.mrb[0].mxu0
      %981 = vmatprep.mubr.bf16.mxu0 0
      %982 = vmatmul.mubr.bf16.gmra.mrb[0].mxu0 %v826
      %v983 = vpop.f32.mrb[0].mxu0
      %v984 = vadd.f32 %v768, %v983
      %v985 = vpop.f32.mrb[0].mxu0
      %v986 = vpop.f32.mrb[0].mxu0
      %v987 = vadd.f32 %v771, %v986
      %v988 = vpop.f32.mrb[0].mxu0
      %989 = vmatprep.mubr.bf16.mxu0 0
      %990 = vmatmul.mubr.bf16.gmra.mrb[0].mxu0 %v828
      %v991 = vpop.f32.mrb[0].mxu0
      %v992 = vadd.f32 %v776, %v991
      %v993 = vpop.f32.mrb[0].mxu0
      %v994 = vpop.f32.mrb[0].mxu0
      %v995 = vadd.f32 %v779, %v994
      %v996 = vpop.f32.mrb[0].mxu0
      %997 = vmatprep.mubr.bf16.mxu0 0
      %998 = vmatmul.mubr.bf16.gmra.mrb[0].mxu0 %v830
      %v999 = vpop.f32.mrb[0].mxu0
      %v1000 = vadd.f32 %v784, %v999
      %v1001 = vpop.f32.mrb[0].mxu0
      %v1002 = vpop.f32.mrb[0].mxu0
      %v1003 = vadd.f32 %v787, %v1002
      %v1004 = vpop.f32.mrb[0].mxu0
      %1005 = vmatprep.mubr.bf16.mxu0 0
      %1006 = vmatmul.mubr.bf16.gmra.mrb[0].mxu0 %v832
      %v1007 = vpop.f32.mrb[0].mxu0
      %v1008 = vadd.f32 %v792, %v1007
      %v1009 = vpop.f32.mrb[0].mxu0
      %v1010 = vpop.f32.mrb[0].mxu0
      %v1011 = vadd.f32 %v795, %v1010
      %v1012 = vpop.f32.mrb[0].mxu0
      %1013 = vdwg.mxu0
      %v1014 = vld [vmem:[%s254] sm:$0xe]
      %s1015 = scalar_lea.vmem %s1, 4
      %v1016 = vld [vmem:[%s1015] sm:$0x3]
      %v1018 = vunpack.c.l.b16 %v1014
      %v1019 = vpack.c.b16 %v358, %v1018
      %vm1020 = vcmask 1046528
      %v1021 = vrot.slane %v1019, 1
      %v1022 = vrot.slane %v395, 1
      %v1023 = vsel %vm1020, %v1021, %v1022
      %v1024 = vrot.slane %v396, 1
      %v1025 = vsel %vm1020, %v1022, %v1024
      %v1026 = vrot.slane %v397, 1
      %v1027 = vsel %vm1020, %v1024, %v1026
      %v1028 = vrot.slane %v398, 1
      %v1029 = vsel %vm1020, %v1026, %v1028
      %v1030 = vrot.slane %v399, 1
      %v1031 = vsel %vm1020, %v1028, %v1030
      %v1032 = vrot.slane %v400, 1
      %v1033 = vsel %vm1020, %v1030, %v1032
      %v1034 = vrot.slane %v401, 1
      %v1035 = vsel %vm1020, %v1032, %v1034
      %v1036 = vrot.slane %v402, 1
      %v1037 = vsel %vm1020, %v1034, %v1036
      %v1038 = vrot.slane %v403, 1
      %v1039 = vsel %vm1020, %v1036, %v1038
      %v1040 = vrot.slane %v404, 1
      %v1041 = vsel %vm1020, %v1038, %v1040
      %v1042 = vrot.slane %v405, 1
      %v1043 = vsel %vm1020, %v1040, %v1042
      %v1044 = vrot.slane %v406, 1
      %v1045 = vsel %vm1020, %v1042, %v1044
      %v1046 = vrot.slane %v407, 1
      %v1047 = vsel %vm1020, %v1044, %v1046
      %v1048 = vrot.slane %v408, 1
      %v1049 = vsel %vm1020, %v1046, %v1048
      %v1050 = vrot.slane %v409, 1
      %v1051 = vsel %vm1020, %v1048, %v1050
      %v1052 = vrot.slane %v410, 1
      %v1053 = vsel %vm1020, %v1050, %v1052
      %v1054 = vrot.slane %v411, 1
      %v1055 = vsel %vm1020, %v1052, %v1054
      %v1056 = vrot.slane %v412, 1
      %v1057 = vsel %vm1020, %v1054, %v1056
      %v1059 = vsel %vm562, %v1023, 0
      %v1062 = vsel %vm562, %v1025, 0
      %v1065 = vsel %vm562, %v1027, 0
      %v1068 = vsel %vm562, %v1029, 0
      %v1071 = vsel %vm562, %v1031, 0
      %v1074 = vsel %vm562, %v1033, 0
      %v1077 = vsel %vm562, %v1035, 0
      %v1080 = vsel %vm562, %v1037, 0
      %v1083 = vsel %vm562, %v1039, 0
      %v1086 = vsel %vm562, %v1041, 0
      %v1089 = vsel %vm562, %v1043, 0
      %v1092 = vsel %vm562, %v1045, 0
      %v1095 = vsel %vm562, %v1047, 0
      %v1098 = vsel %vm562, %v1049, 0
      %v1101 = vsel %vm562, %v1051, 0
      %v1104 = vsel %vm562, %v1053, 0
      %v1107 = vsel %vm562, %v1055, 0
      %v1110 = vsel %vm562, %v1057, 0
      %v1113 = vsel %vm617, %v1016, 0
      %1115 = vmatprep.subr.bf16.mxu0 0
      %1116 = vmatpush1.bf16.msra.mxu0 %v1113
      %1117 = vmatprep.subr.bf16.mxu0 0
      %1118 = vmatpush1.bf16.msra.mxu0 0
      %1119 = vmatprep.subr.bf16.mxu0 0
      %1120 = vmatpush1.bf16.msra.mxu0 0
      %1121 = vmatprep.subr.bf16.mxu0 0
      %1122 = vmatpush1.bf16.msra.mxu0 0
      %1123 = vmatprep.subr.bf16.mxu0 0
      %1124 = vmatpush1.bf16.msra.mxu0 0
      %1125 = vmatprep.subr.bf16.mxu0 0
      %1126 = vmatpush1.bf16.msra.mxu0 0
      %1127 = vmatprep.subr.bf16.mxu0 0
      %1128 = vmatpush1.bf16.msra.mxu0 0
      %1129 = vmatprep.subr.bf16.mxu0 0
      %1130 = vmatpush1.bf16.msra.mxu0 0
      %1131 = vmatprep.subr.bf16.mxu0 0
      %1132 = vmatpush1.bf16.msra.mxu0 0
      %1133 = vmatprep.subr.bf16.mxu0 0
      %1134 = vmatpush1.bf16.msra.mxu0 0
      %1135 = vmatprep.subr.bf16.mxu0 0
      %1136 = vmatpush1.bf16.msra.mxu0 0
      %1137 = vmatprep.subr.bf16.mxu0 0
      %1138 = vmatpush1.bf16.msra.mxu0 0
      %1139 = vmatprep.subr.bf16.mxu0 0
      %1140 = vmatpush1.bf16.msra.mxu0 0
      %1141 = vmatprep.subr.bf16.mxu0 0
      %1142 = vmatpush1.bf16.msra.mxu0 0
      %1143 = vmatprep.subr.bf16.mxu0 0
      %1144 = vmatpush1.bf16.msra.mxu0 0
      %1145 = vmatprep.subr.bf16.mxu0 0
      %1146 = vmatpush1.bf16.msra.mxu0 0
      %1147 = vmatprep.mubr.bf16.mxu0 0
      %1148 = vmatmul.mubr.bf16.gmra.mrb[0].mxu0 %v1059
      %v1149 = vpop.f32.mrb[0].mxu0
      %v1150 = vadd.f32 0.0, %v1149
      %v1151 = vpop.f32.mrb[0].mxu0
      %v1152 = vpop.f32.mrb[0].mxu0
      %v1153 = vadd.f32 0.0, %v1152
      %v1154 = vpop.f32.mrb[0].mxu0
      %1155 = vmatprep.mubr.bf16.mxu0 0
      %1156 = vmatmul.mubr.bf16.gmra.mrb[0].mxu0 %v1062
      %v1157 = vpop.f32.mrb[0].mxu0
      %v1158 = vadd.f32 0.0, %v1157
      %v1159 = vpop.f32.mrb[0].mxu0
      %v1160 = vpop.f32.mrb[0].mxu0
      %v1161 = vadd.f32 0.0, %v1160
      %v1162 = vpop.f32.mrb[0].mxu0
      %1163 = vmatprep.mubr.bf16.mxu0 0
      %1164 = vmatmul.mubr.bf16.gmra.mrb[0].mxu0 %v1065
      %v1165 = vpop.f32.mrb[0].mxu0
      %v1166 = vadd.f32 0.0, %v1165
      %v1167 = vpop.f32.mrb[0].mxu0
      %v1168 = vpop.f32.mrb[0].mxu0
      %v1169 = vadd.f32 0.0, %v1168
      %v1170 = vpop.f32.mrb[0].mxu0
      %1171 = vmatprep.mubr.bf16.mxu0 0
      %1172 = vmatmul.mubr.bf16.gmra.mrb[0].mxu0 %v1068
      %v1173 = vpop.f32.mrb[0].mxu0
      %v1174 = vadd.f32 0.0, %v1173
      %v1175 = vpop.f32.mrb[0].mxu0
      %v1176 = vpop.f32.mrb[0].mxu0
      %v1177 = vadd.f32 0.0, %v1176
      %v1178 = vpop.f32.mrb[0].mxu0
      %1179 = vmatprep.mubr.bf16.mxu0 0
      %1180 = vmatmul.mubr.bf16.gmra.mrb[0].mxu0 %v1071
      %v1181 = vpop.f32.mrb[0].mxu0
      %v1182 = vadd.f32 0.0, %v1181
      %v1183 = vpop.f32.mrb[0].mxu0
      %v1184 = vpop.f32.mrb[0].mxu0
      %v1185 = vadd.f32 0.0, %v1184
      %v1186 = vpop.f32.mrb[0].mxu0
      %1187 = vmatprep.mubr.bf16.mxu0 0
      %1188 = vmatmul.mubr.bf16.gmra.mrb[0].mxu0 %v1074
      %v1189 = vpop.f32.mrb[0].mxu0
      %v1190 = vadd.f32 0.0, %v1189
      %v1191 = vpop.f32.mrb[0].mxu0
      %v1192 = vpop.f32.mrb[0].mxu0
      %v1193 = vadd.f32 0.0, %v1192
      %v1194 = vpop.f32.mrb[0].mxu0
      %1195 = vmatprep.mubr.bf16.mxu0 0
      %1196 = vmatmul.mubr.bf16.gmra.mrb[0].mxu0 %v1077
      %v1197 = vpop.f32.mrb[0].mxu0
      %v1198 = vadd.f32 0.0, %v1197
      %v1199 = vpop.f32.mrb[0].mxu0
      %v1200 = vpop.f32.mrb[0].mxu0
      %v1201 = vadd.f32 0.0, %v1200
      %v1202 = vpop.f32.mrb[0].mxu0
      %1203 = vmatprep.mubr.bf16.mxu0 0
      %1204 = vmatmul.mubr.bf16.gmra.mrb[0].mxu0 %v1080
      %v1205 = vpop.f32.mrb[0].mxu0
      %v1206 = vadd.f32 0.0, %v1205
      %v1207 = vpop.f32.mrb[0].mxu0
      %v1208 = vpop.f32.mrb[0].mxu0
      %v1209 = vadd.f32 0.0, %v1208
      %v1210 = vpop.f32.mrb[0].mxu0
      %1211 = vmatprep.mubr.bf16.mxu0 0
      %1212 = vmatmul.mubr.bf16.gmra.mrb[0].mxu0 %v1083
      %v1213 = vpop.f32.mrb[0].mxu0
      %v1214 = vadd.f32 0.0, %v1213
      %v1215 = vpop.f32.mrb[0].mxu0
      %v1216 = vpop.f32.mrb[0].mxu0
      %v1217 = vadd.f32 0.0, %v1216
      %v1218 = vpop.f32.mrb[0].mxu0
      %1219 = vmatprep.mubr.bf16.mxu0 0
      %1220 = vmatmul.mubr.bf16.gmra.mrb[0].mxu0 %v1086
      %v1221 = vpop.f32.mrb[0].mxu0
      %v1222 = vadd.f32 0.0, %v1221
      %v1223 = vpop.f32.mrb[0].mxu0
      %v1224 = vpop.f32.mrb[0].mxu0
      %v1225 = vadd.f32 0.0, %v1224
      %v1226 = vpop.f32.mrb[0].mxu0
      %1227 = vmatprep.mubr.bf16.mxu0 0
      %1228 = vmatmul.mubr.bf16.gmra.mrb[0].mxu0 %v1089
      %v1229 = vpop.f32.mrb[0].mxu0
      %v1230 = vadd.f32 0.0, %v1229
      %v1231 = vpop.f32.mrb[0].mxu0
      %v1232 = vpop.f32.mrb[0].mxu0
      %v1233 = vadd.f32 0.0, %v1232
      %v1234 = vpop.f32.mrb[0].mxu0
      %1235 = vmatprep.mubr.bf16.mxu0 0
      %1236 = vmatmul.mubr.bf16.gmra.mrb[0].mxu0 %v1092
      %v1237 = vpop.f32.mrb[0].mxu0
      %v1238 = vadd.f32 0.0, %v1237
      %v1239 = vpop.f32.mrb[0].mxu0
      %v1240 = vpop.f32.mrb[0].mxu0
      %v1241 = vadd.f32 0.0, %v1240
      %v1242 = vpop.f32.mrb[0].mxu0
      %1243 = vmatprep.mubr.bf16.mxu0 0
      %1244 = vmatmul.mubr.bf16.gmra.mrb[0].mxu0 %v1095
      %v1245 = vpop.f32.mrb[0].mxu0
      %v1246 = vadd.f32 0.0, %v1245
      %v1247 = vpop.f32.mrb[0].mxu0
      %v1248 = vpop.f32.mrb[0].mxu0
      %v1249 = vadd.f32 0.0, %v1248
      %v1250 = vpop.f32.mrb[0].mxu0
      %1251 = vmatprep.mubr.bf16.mxu0 0
      %1252 = vmatmul.mubr.bf16.gmra.mrb[0].mxu0 %v1098
      %v1253 = vpop.f32.mrb[0].mxu0
      %v1254 = vadd.f32 0.0, %v1253
      %v1255 = vpop.f32.mrb[0].mxu0
      %v1256 = vpop.f32.mrb[0].mxu0
      %v1257 = vadd.f32 0.0, %v1256
      %v1258 = vpop.f32.mrb[0].mxu0
      %1259 = vmatprep.mubr.bf16.mxu0 0
      %1260 = vmatmul.mubr.bf16.gmra.mrb[0].mxu0 %v1101
      %v1261 = vpop.f32.mrb[0].mxu0
      %v1262 = vadd.f32 0.0, %v1261
      %v1263 = vpop.f32.mrb[0].mxu0
      %v1264 = vpop.f32.mrb[0].mxu0
      %v1265 = vadd.f32 0.0, %v1264
      %v1266 = vpop.f32.mrb[0].mxu0
      %1267 = vmatprep.mubr.bf16.mxu0 0
      %1268 = vmatmul.mubr.bf16.gmra.mrb[0].mxu0 %v1104
      %v1269 = vpop.f32.mrb[0].mxu0
      %v1270 = vadd.f32 0.0, %v1269
      %v1271 = vpop.f32.mrb[0].mxu0
      %v1272 = vpop.f32.mrb[0].mxu0
      %v1273 = vadd.f32 0.0, %v1272
      %v1274 = vpop.f32.mrb[0].mxu0
      %1275 = vmatprep.mubr.bf16.mxu0 0
      %1276 = vmatmul.mubr.bf16.gmra.mrb[0].mxu0 %v1107
      %v1277 = vpop.f32.mrb[0].mxu0
      %v1278 = vadd.f32 0.0, %v1277
      %v1279 = vpop.f32.mrb[0].mxu0
      %v1280 = vpop.f32.mrb[0].mxu0
      %v1281 = vadd.f32 0.0, %v1280
      %v1282 = vpop.f32.mrb[0].mxu0
      %1283 = vmatprep.mubr.bf16.mxu0 0
      %1284 = vmatmul.mubr.bf16.gmra.mrb[0].mxu0 %v1110
      %v1285 = vpop.f32.mrb[0].mxu0
      %v1286 = vadd.f32 0.0, %v1285
      %v1287 = vpop.f32.mrb[0].mxu0
      %v1288 = vpop.f32.mrb[0].mxu0
      %v1289 = vadd.f32 0.0, %v1288
      %v1290 = vpop.f32.mrb[0].mxu0
      %1291 = vdwg.mxu0
      %v1292 = vadd.f32 %v872, %v1150
      %v1293 = vadd.f32 %v875, %v1153
      %v1294 = vadd.f32 %v880, %v1158
      %v1295 = vadd.f32 %v883, %v1161
      %v1296 = vadd.f32 %v888, %v1166
      %v1297 = vadd.f32 %v891, %v1169
      %v1298 = vadd.f32 %v896, %v1174
      %v1299 = vadd.f32 %v899, %v1177
      %v1300 = vadd.f32 %v904, %v1182
      %v1301 = vadd.f32 %v907, %v1185
      %v1302 = vadd.f32 %v912, %v1190
      %v1303 = vadd.f32 %v915, %v1193
      %v1304 = vadd.f32 %v920, %v1198
      %v1305 = vadd.f32 %v923, %v1201
      %v1306 = vadd.f32 %v928, %v1206
      %v1307 = vadd.f32 %v931, %v1209
      %v1308 = vadd.f32 %v936, %v1214
      %v1309 = vadd.f32 %v939, %v1217
      %v1310 = vadd.f32 %v944, %v1222
      %v1311 = vadd.f32 %v947, %v1225
      %v1312 = vadd.f32 %v952, %v1230
      %v1313 = vadd.f32 %v955, %v1233
      %v1314 = vadd.f32 %v960, %v1238
      %v1315 = vadd.f32 %v963, %v1241
      %v1316 = vadd.f32 %v968, %v1246
      %v1317 = vadd.f32 %v971, %v1249
      %v1318 = vadd.f32 %v976, %v1254
      %v1319 = vadd.f32 %v979, %v1257
      %v1320 = vadd.f32 %v984, %v1262
      %v1321 = vadd.f32 %v987, %v1265
      %v1322 = vadd.f32 %v992, %v1270
      %v1323 = vadd.f32 %v995, %v1273
      %v1324 = vadd.f32 %v1000, %v1278
      %v1325 = vadd.f32 %v1003, %v1281
      %v1326 = vadd.f32 %v1008, %v1286
      %v1327 = vadd.f32 %v1011, %v1289
      %v1328 = vld [vmem:[%s254 + $0x8] sm:$0xe]
      %v1329 = vld [vmem:[%s254 + $0xc] sm:$0xf]
      %v1330 = vld [vmem:[%s254 + $0x10] sm:$0xf]
      %v1331 = vld [vmem:[%s254 + $0x14] sm:$0xf]
      %v1332 = vld [vmem:[%s254 + $0x18] sm:$0xf]
      %v1333 = vld [vmem:[%s254 + $0x1c] sm:$0xf]
      %v1334 = vld [vmem:[%s254 + $0x20] sm:$0xf]
      %v1335 = vld [vmem:[%s254 + $0x24] sm:$0xf]
      %v1336 = vld [vmem:[%s254 + $0x28] sm:$0xf]
      %v1337 = vld [vmem:[%s254 + $0x2c] sm:$0xf]
      %v1338 = vld [vmem:[%s254 + $0x30] sm:$0xf]
      %v1339 = vld [vmem:[%s254 + $0x34] sm:$0xf]
      %v1340 = vld [vmem:[%s254 + $0x38] sm:$0xf]
      %v1341 = vld [vmem:[%s254 + $0x3c] sm:$0xf]
      %v1342 = vld [vmem:[%s254 + $0x40] sm:$0xf]
      %v1343 = vld [vmem:[%s254 + $0x44] sm:$0xf]
      %v1344 = vld [vmem:[%s254 + $0x48] sm:$0xf]
      %v1345 = vld [vmem:[%s254 + $0x4c] sm:$0xf]
      %v1346 = vld [vmem:[%s254 + $0x50] sm:$0xf]
      %v1347 = vld [vmem:[%s254 + $0x54] sm:$0xf]
      %v1348 = vld [vmem:[%s254 + $0x58] sm:$0xf]
      %v1349 = vld [vmem:[%s254 + $0x5c] sm:$0xf]
      %v1350 = vld [vmem:[%s254 + $0x60] sm:$0xf]
      %v1351 = vld [vmem:[%s254 + $0x64] sm:$0xf]
      %v1352 = vld [vmem:[%s254 + $0x68] sm:$0xf]
      %v1353 = vld [vmem:[%s254 + $0x6c] sm:$0xf]
      %v1354 = vld [vmem:[%s254 + $0x70] sm:$0xf]
      %v1355 = vld [vmem:[%s254 + $0x74] sm:$0xf]
      %v1356 = vld [vmem:[%s254 + $0x78] sm:$0xf]
      %v1357 = vld [vmem:[%s254 + $0x7c] sm:$0xf]
      %v1358 = vld [vmem:[%s254 + $0x80] sm:$0xf]
      %v1359 = vld [vmem:[%s254 + $0x84] sm:$0xf]
      %v1360 = vld [vmem:[%s254 + $0x88] sm:$0xf]
      %v1361 = vld [vmem:[%s254 + $0x8c] sm:$0xf]
      %v1362 = vld [vmem:[%s254 + $0x90] sm:$0xf]
      %v1363 = vld [vmem:[%s254 + $0x94] sm:$0xf]
      %v1364 = vld [vmem:[%s254 + $0x98] sm:$0x1]
      %s1365 = scalar_lea.vmem %s1, 6
      %v1366 = vld [vmem:[%s1365] sm:$0x3]
      %v1404 = vunpack.c.l.b16 %v1328
      %v1405 = vunpack.c.l.b16 %v1329
      %v1406 = vunpack.c.l.b16 %v1330
      %v1407 = vunpack.c.l.b16 %v1331
      %v1408 = vunpack.c.l.b16 %v1332
      %v1409 = vunpack.c.l.b16 %v1333
      %v1410 = vunpack.c.l.b16 %v1334
      %v1411 = vunpack.c.l.b16 %v1335
      %v1412 = vunpack.c.l.b16 %v1336
      %v1413 = vunpack.c.l.b16 %v1337
      %v1414 = vunpack.c.l.b16 %v1338
      %v1415 = vunpack.c.l.b16 %v1339
      %v1416 = vunpack.c.l.b16 %v1340
      %v1417 = vunpack.c.l.b16 %v1341
      %v1418 = vunpack.c.l.b16 %v1342
      %v1419 = vunpack.c.l.b16 %v1343
      %v1420 = vunpack.c.l.b16 %v1344
      %v1421 = vunpack.c.l.b16 %v1345
      %v1422 = vunpack.c.l.b16 %v1346
      %v1423 = vunpack.c.l.b16 %v1347
      %v1424 = vunpack.c.l.b16 %v1348
      %v1425 = vunpack.c.l.b16 %v1349
      %v1426 = vunpack.c.l.b16 %v1350
      %v1427 = vunpack.c.l.b16 %v1351
      %v1428 = vunpack.c.l.b16 %v1352
      %v1429 = vunpack.c.l.b16 %v1353
      %v1430 = vunpack.c.l.b16 %v1354
      %v1431 = vunpack.c.l.b16 %v1355
      %v1432 = vunpack.c.l.b16 %v1356
      %v1433 = vunpack.c.l.b16 %v1357
      %v1434 = vunpack.c.l.b16 %v1358
      %v1435 = vunpack.c.l.b16 %v1359
      %v1436 = vunpack.c.l.b16 %v1360
      %v1437 = vunpack.c.l.b16 %v1361
      %v1438 = vunpack.c.l.b16 %v1362
      %v1439 = vunpack.c.l.b16 %v1363
      %v1440 = vunpack.c.l.b16 %v1364
      %v1441 = vpack.c.b16 %v1405, %v1404
      %v1442 = vpack.c.b16 %v1407, %v1406
      %v1443 = vpack.c.b16 %v1409, %v1408
      %v1444 = vpack.c.b16 %v1411, %v1410
      %v1445 = vpack.c.b16 %v1413, %v1412
      %v1446 = vpack.c.b16 %v1415, %v1414
      %v1447 = vpack.c.b16 %v1417, %v1416
      %v1448 = vpack.c.b16 %v1419, %v1418
      %v1449 = vpack.c.b16 %v1421, %v1420
      %v1450 = vpack.c.b16 %v1423, %v1422
      %v1451 = vpack.c.b16 %v1425, %v1424
      %v1452 = vpack.c.b16 %v1427, %v1426
      %v1453 = vpack.c.b16 %v1429, %v1428
      %v1454 = vpack.c.b16 %v1431, %v1430
      %v1455 = vpack.c.b16 %v1433, %v1432
      %v1456 = vpack.c.b16 %v1435, %v1434
      %v1457 = vpack.c.b16 %v1437, %v1436
      %v1458 = vpack.c.b16 %v1439, %v1438
      %v1459 = vpack.c.b16 %v1440, %v1440
      %v1460 = vrot.slane %v1441, 1
      %v1461 = vrot.slane %v1442, 1
      %v1462 = vsel %vm1020, %v1460, %v1461
      %v1463 = vrot.slane %v1443, 1
      %v1464 = vsel %vm1020, %v1461, %v1463
      %v1465 = vrot.slane %v1444, 1
      %v1466 = vsel %vm1020, %v1463, %v1465
      %v1467 = vrot.slane %v1445, 1
      %v1468 = vsel %vm1020, %v1465, %v1467
      %v1469 = vrot.slane %v1446, 1
      %v1470 = vsel %vm1020, %v1467, %v1469
      %v1471 = vrot.slane %v1447, 1
      %v1472 = vsel %vm1020, %v1469, %v1471
      %v1473 = vrot.slane %v1448, 1
      %v1474 = vsel %vm1020, %v1471, %v1473
      %v1475 = vrot.slane %v1449, 1
      %v1476 = vsel %vm1020, %v1473, %v1475
      %v1477 = vrot.slane %v1450, 1
      %v1478 = vsel %vm1020, %v1475, %v1477
      %v1479 = vrot.slane %v1451, 1
      %v1480 = vsel %vm1020, %v1477, %v1479
      %v1481 = vrot.slane %v1452, 1
      %v1482 = vsel %vm1020, %v1479, %v1481
      %v1483 = vrot.slane %v1453, 1
      %v1484 = vsel %vm1020, %v1481, %v1483
      %v1485 = vrot.slane %v1454, 1
      %v1486 = vsel %vm1020, %v1483, %v1485
      %v1487 = vrot.slane %v1455, 1
      %v1488 = vsel %vm1020, %v1485, %v1487
      %v1489 = vrot.slane %v1456, 1
      %v1490 = vsel %vm1020, %v1487, %v1489
      %v1491 = vrot.slane %v1457, 1
      %v1492 = vsel %vm1020, %v1489, %v1491
      %v1493 = vrot.slane %v1458, 1
      %v1494 = vsel %vm1020, %v1491, %v1493
      %v1495 = vrot.slane %v1459, 1
      %v1496 = vsel %vm1020, %v1493, %v1495
      %v1498 = vsel %vm562, %v1462, 0
      %v1501 = vsel %vm562, %v1464, 0
      %v1504 = vsel %vm562, %v1466, 0
      %v1507 = vsel %vm562, %v1468, 0
      %v1510 = vsel %vm562, %v1470, 0
      %v1513 = vsel %vm562, %v1472, 0
      %v1516 = vsel %vm562, %v1474, 0
      %v1519 = vsel %vm562, %v1476, 0
      %v1522 = vsel %vm562, %v1478, 0
      %v1525 = vsel %vm562, %v1480, 0
      %v1528 = vsel %vm562, %v1482, 0
      %v1531 = vsel %vm562, %v1484, 0
      %v1534 = vsel %vm562, %v1486, 0
      %v1537 = vsel %vm562, %v1488, 0
      %v1540 = vsel %vm562, %v1490, 0
      %v1543 = vsel %vm562, %v1492, 0
      %v1546 = vsel %vm562, %v1494, 0
      %v1549 = vsel %vm562, %v1496, 0
      %v1552 = vsel %vm617, %v1366, 0
      %1554 = vmatprep.subr.bf16.mxu0 0
      %1555 = vmatpush1.bf16.msra.mxu0 %v1552
      %1556 = vmatprep.subr.bf16.mxu0 0
      %1557 = vmatpush1.bf16.msra.mxu0 0
      %1558 = vmatprep.subr.bf16.mxu0 0
      %1559 = vmatpush1.bf16.msra.mxu0 0
      %1560 = vmatprep.subr.bf16.mxu0 0
      %1561 = vmatpush1.bf16.msra.mxu0 0
      %1562 = vmatprep.subr.bf16.mxu0 0
      %1563 = vmatpush1.bf16.msra.mxu0 0
      %1564 = vmatprep.subr.bf16.mxu0 0
      %1565 = vmatpush1.bf16.msra.mxu0 0
      %1566 = vmatprep.subr.bf16.mxu0 0
      %1567 = vmatpush1.bf16.msra.mxu0 0
      %1568 = vmatprep.subr.bf16.mxu0 0
      %1569 = vmatpush1.bf16.msra.mxu0 0
      %1570 = vmatprep.subr.bf16.mxu0 0
      %1571 = vmatpush1.bf16.msra.mxu0 0
      %1572 = vmatprep.subr.bf16.mxu0 0
      %1573 = vmatpush1.bf16.msra.mxu0 0
      %1574 = vmatprep.subr.bf16.mxu0 0
      %1575 = vmatpush1.bf16.msra.mxu0 0
      %1576 = vmatprep.subr.bf16.mxu0 0
      %1577 = vmatpush1.bf16.msra.mxu0 0
      %1578 = vmatprep.subr.bf16.mxu0 0
      %1579 = vmatpush1.bf16.msra.mxu0 0
      %1580 = vmatprep.subr.bf16.mxu0 0
      %1581 = vmatpush1.bf16.msra.mxu0 0
      %1582 = vmatprep.subr.bf16.mxu0 0
      %1583 = vmatpush1.bf16.msra.mxu0 0
      %1584 = vmatprep.subr.bf16.mxu0 0
      %1585 = vmatpush1.bf16.msra.mxu0 0
      %1586 = vmatprep.mubr.bf16.mxu0 0
      %1587 = vmatmul.mubr.bf16.gmra.mrb[0].mxu0 %v1498
      %v1588 = vpop.f32.mrb[0].mxu0
      %v1589 = vadd.f32 0.0, %v1588
      %v1590 = vpop.f32.mrb[0].mxu0
      %v1591 = vpop.f32.mrb[0].mxu0
      %v1592 = vadd.f32 0.0, %v1591
      %v1593 = vpop.f32.mrb[0].mxu0
      %1594 = vmatprep.mubr.bf16.mxu0 0
      %1595 = vmatmul.mubr.bf16.gmra.mrb[0].mxu0 %v1501
      %v1596 = vpop.f32.mrb[0].mxu0
      %v1597 = vadd.f32 0.0, %v1596
      %v1598 = vpop.f32.mrb[0].mxu0
      %v1599 = vpop.f32.mrb[0].mxu0
      %v1600 = vadd.f32 0.0, %v1599
      %v1601 = vpop.f32.mrb[0].mxu0
      %1602 = vmatprep.mubr.bf16.mxu0 0
      %1603 = vmatmul.mubr.bf16.gmra.mrb[0].mxu0 %v1504
      %v1604 = vpop.f32.mrb[0].mxu0
      %v1605 = vadd.f32 0.0, %v1604
      %v1606 = vpop.f32.mrb[0].mxu0
      %v1607 = vpop.f32.mrb[0].mxu0
      %v1608 = vadd.f32 0.0, %v1607
      %v1609 = vpop.f32.mrb[0].mxu0
      %1610 = vmatprep.mubr.bf16.mxu0 0
      %1611 = vmatmul.mubr.bf16.gmra.mrb[0].mxu0 %v1507
      %v1612 = vpop.f32.mrb[0].mxu0
      %v1613 = vadd.f32 0.0, %v1612
      %v1614 = vpop.f32.mrb[0].mxu0
      %v1615 = vpop.f32.mrb[0].mxu0
      %v1616 = vadd.f32 0.0, %v1615
      %v1617 = vpop.f32.mrb[0].mxu0
      %1618 = vmatprep.mubr.bf16.mxu0 0
      %1619 = vmatmul.mubr.bf16.gmra.mrb[0].mxu0 %v1510
      %v1620 = vpop.f32.mrb[0].mxu0
      %v1621 = vadd.f32 0.0, %v1620
      %v1622 = vpop.f32.mrb[0].mxu0
      %v1623 = vpop.f32.mrb[0].mxu0
      %v1624 = vadd.f32 0.0, %v1623
      %v1625 = vpop.f32.mrb[0].mxu0
      %1626 = vmatprep.mubr.bf16.mxu0 0
      %1627 = vmatmul.mubr.bf16.gmra.mrb[0].mxu0 %v1513
      %v1628 = vpop.f32.mrb[0].mxu0
      %v1629 = vadd.f32 0.0, %v1628
      %v1630 = vpop.f32.mrb[0].mxu0
      %v1631 = vpop.f32.mrb[0].mxu0
      %v1632 = vadd.f32 0.0, %v1631
      %v1633 = vpop.f32.mrb[0].mxu0
      %1634 = vmatprep.mubr.bf16.mxu0 0
      %1635 = vmatmul.mubr.bf16.gmra.mrb[0].mxu0 %v1516
      %v1636 = vpop.f32.mrb[0].mxu0
      %v1637 = vadd.f32 0.0, %v1636
      %v1638 = vpop.f32.mrb[0].mxu0
      %v1639 = vpop.f32.mrb[0].mxu0
      %v1640 = vadd.f32 0.0, %v1639
      %v1641 = vpop.f32.mrb[0].mxu0
      %1642 = vmatprep.mubr.bf16.mxu0 0
      %1643 = vmatmul.mubr.bf16.gmra.mrb[0].mxu0 %v1519
      %v1644 = vpop.f32.mrb[0].mxu0
      %v1645 = vadd.f32 0.0, %v1644
      %v1646 = vpop.f32.mrb[0].mxu0
      %v1647 = vpop.f32.mrb[0].mxu0
      %v1648 = vadd.f32 0.0, %v1647
      %v1649 = vpop.f32.mrb[0].mxu0
      %1650 = vmatprep.mubr.bf16.mxu0 0
      %1651 = vmatmul.mubr.bf16.gmra.mrb[0].mxu0 %v1522
      %v1652 = vpop.f32.mrb[0].mxu0
      %v1653 = vadd.f32 0.0, %v1652
      %v1654 = vpop.f32.mrb[0].mxu0
      %v1655 = vpop.f32.mrb[0].mxu0
      %v1656 = vadd.f32 0.0, %v1655
      %v1657 = vpop.f32.mrb[0].mxu0
      %1658 = vmatprep.mubr.bf16.mxu0 0
      %1659 = vmatmul.mubr.bf16.gmra.mrb[0].mxu0 %v1525
      %v1660 = vpop.f32.mrb[0].mxu0
      %v1661 = vadd.f32 0.0, %v1660
      %v1662 = vpop.f32.mrb[0].mxu0
      %v1663 = vpop.f32.mrb[0].mxu0
      %v1664 = vadd.f32 0.0, %v1663
      %v1665 = vpop.f32.mrb[0].mxu0
      %1666 = vmatprep.mubr.bf16.mxu0 0
      %1667 = vmatmul.mubr.bf16.gmra.mrb[0].mxu0 %v1528
      %v1668 = vpop.f32.mrb[0].mxu0
      %v1669 = vadd.f32 0.0, %v1668
      %v1670 = vpop.f32.mrb[0].mxu0
      %v1671 = vpop.f32.mrb[0].mxu0
      %v1672 = vadd.f32 0.0, %v1671
      %v1673 = vpop.f32.mrb[0].mxu0
      %1674 = vmatprep.mubr.bf16.mxu0 0
      %1675 = vmatmul.mubr.bf16.gmra.mrb[0].mxu0 %v1531
      %v1676 = vpop.f32.mrb[0].mxu0
      %v1677 = vadd.f32 0.0, %v1676
      %v1678 = vpop.f32.mrb[0].mxu0
      %v1679 = vpop.f32.mrb[0].mxu0
      %v1680 = vadd.f32 0.0, %v1679
      %v1681 = vpop.f32.mrb[0].mxu0
      %1682 = vmatprep.mubr.bf16.mxu0 0
      %1683 = vmatmul.mubr.bf16.gmra.mrb[0].mxu0 %v1534
      %v1684 = vpop.f32.mrb[0].mxu0
      %v1685 = vadd.f32 0.0, %v1684
      %v1686 = vpop.f32.mrb[0].mxu0
      %v1687 = vpop.f32.mrb[0].mxu0
      %v1688 = vadd.f32 0.0, %v1687
      %v1689 = vpop.f32.mrb[0].mxu0
      %1690 = vmatprep.mubr.bf16.mxu0 0
      %1691 = vmatmul.mubr.bf16.gmra.mrb[0].mxu0 %v1537
      %v1692 = vpop.f32.mrb[0].mxu0
      %v1693 = vadd.f32 0.0, %v1692
      %v1694 = vpop.f32.mrb[0].mxu0
      %v1695 = vpop.f32.mrb[0].mxu0
      %v1696 = vadd.f32 0.0, %v1695
      %v1697 = vpop.f32.mrb[0].mxu0
      %1698 = vmatprep.mubr.bf16.mxu0 0
      %1699 = vmatmul.mubr.bf16.gmra.mrb[0].mxu0 %v1540
      %v1700 = vpop.f32.mrb[0].mxu0
      %v1701 = vadd.f32 0.0, %v1700
      %v1702 = vpop.f32.mrb[0].mxu0
      %v1703 = vpop.f32.mrb[0].mxu0
      %v1704 = vadd.f32 0.0, %v1703
      %v1705 = vpop.f32.mrb[0].mxu0
      %1706 = vmatprep.mubr.bf16.mxu0 0
      %1707 = vmatmul.mubr.bf16.gmra.mrb[0].mxu0 %v1543
      %v1708 = vpop.f32.mrb[0].mxu0
      %v1709 = vadd.f32 0.0, %v1708
      %v1710 = vpop.f32.mrb[0].mxu0
      %v1711 = vpop.f32.mrb[0].mxu0
      %v1712 = vadd.f32 0.0, %v1711
      %v1713 = vpop.f32.mrb[0].mxu0
      %1714 = vmatprep.mubr.bf16.mxu0 0
      %1715 = vmatmul.mubr.bf16.gmra.mrb[0].mxu0 %v1546
      %v1716 = vpop.f32.mrb[0].mxu0
      %v1717 = vadd.f32 0.0, %v1716
      %v1718 = vpop.f32.mrb[0].mxu0
      %v1719 = vpop.f32.mrb[0].mxu0
      %v1720 = vadd.f32 0.0, %v1719
      %v1721 = vpop.f32.mrb[0].mxu0
      %1722 = vmatprep.mubr.bf16.mxu0 0
      %1723 = vmatmul.mubr.bf16.gmra.mrb[0].mxu0 %v1549
      %v1724 = vpop.f32.mrb[0].mxu0
      %v1725 = vadd.f32 0.0, %v1724
      %v1726 = vpop.f32.mrb[0].mxu0
      %v1727 = vpop.f32.mrb[0].mxu0
      %v1728 = vadd.f32 0.0, %v1727
      %v1729 = vpop.f32.mrb[0].mxu0
      %1730 = vdwg.mxu0
      %v1731 = vadd.f32 %v1292, %v1589
      %v1732 = vadd.f32 %v1293, %v1592
      %v1733 = vadd.f32 %v1294, %v1597
      %v1734 = vadd.f32 %v1295, %v1600
      %v1735 = vadd.f32 %v1296, %v1605
      %v1736 = vadd.f32 %v1297, %v1608
      %v1737 = vadd.f32 %v1298, %v1613
      %v1738 = vadd.f32 %v1299, %v1616
      %v1739 = vadd.f32 %v1300, %v1621
      %v1740 = vadd.f32 %v1301, %v1624
      %v1741 = vadd.f32 %v1302, %v1629
      %v1742 = vadd.f32 %v1303, %v1632
      %v1743 = vadd.f32 %v1304, %v1637
      %v1744 = vadd.f32 %v1305, %v1640
      %v1745 = vadd.f32 %v1306, %v1645
      %v1746 = vadd.f32 %v1307, %v1648
      %v1747 = vadd.f32 %v1308, %v1653
      %v1748 = vadd.f32 %v1309, %v1656
      %v1749 = vadd.f32 %v1310, %v1661
      %v1750 = vadd.f32 %v1311, %v1664
      %v1751 = vadd.f32 %v1312, %v1669
      %v1752 = vadd.f32 %v1313, %v1672
      %v1753 = vadd.f32 %v1314, %v1677
      %v1754 = vadd.f32 %v1315, %v1680
      %v1755 = vadd.f32 %v1316, %v1685
      %v1756 = vadd.f32 %v1317, %v1688
      %v1757 = vadd.f32 %v1318, %v1693
      %v1758 = vadd.f32 %v1319, %v1696
      %v1759 = vadd.f32 %v1320, %v1701
      %v1760 = vadd.f32 %v1321, %v1704
      %v1761 = vadd.f32 %v1322, %v1709
      %v1762 = vadd.f32 %v1323, %v1712
      %v1763 = vadd.f32 %v1324, %v1717
      %v1764 = vadd.f32 %v1325, %v1720
      %v1765 = vadd.f32 %v1326, %v1725
      %v1766 = vadd.f32 %v1327, %v1728
      %v1767 = vld [vmem:[%s254 + $0x98] sm:$0x3]
      %s1768 = scalar_lea.vmem %s1, 8
      %v1769 = vld [vmem:[%s1768] sm:$0x3]
      %v1771 = vunpack.c.l.b16 %v1767
      %v1772 = vpack.c.b16 %v1771, %v1771
      %vm1773 = vsmask.f32 6400
      %v1775 = vshrl.u32 %v1441, 16
      %v1777 = vrot.slane %v1775, 1
      %v1778 = vshll.u32 %v1441, 16
      %v1780 = vrot.slane %v1778, 2
      %v1781 = vor.u32 %v1777, %v1780
      %v1783 = vshrl.u32 %v1442, 16
      %v1785 = vrot.slane %v1783, 1
      %v1786 = vshll.u32 %v1442, 16
      %v1788 = vrot.slane %v1786, 2
      %v1789 = vor.u32 %v1785, %v1788
      %v1790 = vsel %vm1773, %v1781, %v1789
      %v1792 = vshrl.u32 %v1443, 16
      %v1794 = vrot.slane %v1792, 1
      %v1795 = vshll.u32 %v1443, 16
      %v1797 = vrot.slane %v1795, 2
      %v1798 = vor.u32 %v1794, %v1797
      %v1799 = vsel %vm1773, %v1789, %v1798
      %v1801 = vshrl.u32 %v1444, 16
      %v1803 = vrot.slane %v1801, 1
      %v1804 = vshll.u32 %v1444, 16
      %v1806 = vrot.slane %v1804, 2
      %v1807 = vor.u32 %v1803, %v1806
      %v1808 = vsel %vm1773, %v1798, %v1807
      %v1810 = vshrl.u32 %v1445, 16
      %v1812 = vrot.slane %v1810, 1
      %v1813 = vshll.u32 %v1445, 16
      %v1815 = vrot.slane %v1813, 2
      %v1816 = vor.u32 %v1812, %v1815
      %v1817 = vsel %vm1773, %v1807, %v1816
      %v1819 = vshrl.u32 %v1446, 16
      %v1821 = vrot.slane %v1819, 1
      %v1822 = vshll.u32 %v1446, 16
      %v1824 = vrot.slane %v1822, 2
      %v1825 = vor.u32 %v1821, %v1824
      %v1826 = vsel %vm1773, %v1816, %v1825
      %v1828 = vshrl.u32 %v1447, 16
      %v1830 = vrot.slane %v1828, 1
      %v1831 = vshll.u32 %v1447, 16
      %v1833 = vrot.slane %v1831, 2
      %v1834 = vor.u32 %v1830, %v1833
      %v1835 = vsel %vm1773, %v1825, %v1834
      %v1837 = vshrl.u32 %v1448, 16
      %v1839 = vrot.slane %v1837, 1
      %v1840 = vshll.u32 %v1448, 16
      %v1842 = vrot.slane %v1840, 2
      %v1843 = vor.u32 %v1839, %v1842
      %v1844 = vsel %vm1773, %v1834, %v1843
      %v1846 = vshrl.u32 %v1449, 16
      %v1848 = vrot.slane %v1846, 1
      %v1849 = vshll.u32 %v1449, 16
      %v1851 = vrot.slane %v1849, 2
      %v1852 = vor.u32 %v1848, %v1851
      %v1853 = vsel %vm1773, %v1843, %v1852
      %v1855 = vshrl.u32 %v1450, 16
      %v1857 = vrot.slane %v1855, 1
      %v1858 = vshll.u32 %v1450, 16
      %v1860 = vrot.slane %v1858, 2
      %v1861 = vor.u32 %v1857, %v1860
      %v1862 = vsel %vm1773, %v1852, %v1861
      %v1864 = vshrl.u32 %v1451, 16
      %v1866 = vrot.slane %v1864, 1
      %v1867 = vshll.u32 %v1451, 16
      %v1869 = vrot.slane %v1867, 2
      %v1870 = vor.u32 %v1866, %v1869
      %v1871 = vsel %vm1773, %v1861, %v1870
      %v1873 = vshrl.u32 %v1452, 16
      %v1875 = vrot.slane %v1873, 1
      %v1876 = vshll.u32 %v1452, 16
      %v1878 = vrot.slane %v1876, 2
      %v1879 = vor.u32 %v1875, %v1878
      %v1880 = vsel %vm1773, %v1870, %v1879
      %v1882 = vshrl.u32 %v1453, 16
      %v1884 = vrot.slane %v1882, 1
      %v1885 = vshll.u32 %v1453, 16
      %v1887 = vrot.slane %v1885, 2
      %v1888 = vor.u32 %v1884, %v1887
      %v1889 = vsel %vm1773, %v1879, %v1888
      %v1891 = vshrl.u32 %v1454, 16
      %v1893 = vrot.slane %v1891, 1
      %v1894 = vshll.u32 %v1454, 16
      %v1896 = vrot.slane %v1894, 2
      %v1897 = vor.u32 %v1893, %v1896
      %v1898 = vsel %vm1773, %v1888, %v1897
      %v1900 = vshrl.u32 %v1455, 16
      %v1902 = vrot.slane %v1900, 1
      %v1903 = vshll.u32 %v1455, 16
      %v1905 = vrot.slane %v1903, 2
      %v1906 = vor.u32 %v1902, %v1905
      %v1907 = vsel %vm1773, %v1897, %v1906
      %v1909 = vshrl.u32 %v1456, 16
      %v1911 = vrot.slane %v1909, 1
      %v1912 = vshll.u32 %v1456, 16
      %v1914 = vrot.slane %v1912, 2
      %v1915 = vor.u32 %v1911, %v1914
      %v1916 = vsel %vm1773, %v1906, %v1915
      %v1918 = vshrl.u32 %v1457, 16
      %v1920 = vrot.slane %v1918, 1
      %v1921 = vshll.u32 %v1457, 16
      %v1923 = vrot.slane %v1921, 2
      %v1924 = vor.u32 %v1920, %v1923
      %v1925 = vsel %vm1773, %v1915, %v1924
      %v1927 = vshrl.u32 %v1458, 16
      %v1929 = vrot.slane %v1927, 1
      %v1930 = vshll.u32 %v1458, 16
      %v1932 = vrot.slane %v1930, 2
      %v1933 = vor.u32 %v1929, %v1932
      %v1934 = vsel %vm1773, %v1924, %v1933
      %v1936 = vshrl.u32 %v1772, 16
      %v1938 = vrot.slane %v1936, 1
      %v1939 = vshll.u32 %v1772, 16
      %v1941 = vrot.slane %v1939, 2
      %v1942 = vor.u32 %v1938, %v1941
      %v1943 = vsel %vm1773, %v1933, %v1942
      %v1945 = vsel %vm562, %v1790, 0
      %v1948 = vsel %vm562, %v1799, 0
      %v1951 = vsel %vm562, %v1808, 0
      %v1954 = vsel %vm562, %v1817, 0
      %v1957 = vsel %vm562, %v1826, 0
      %v1960 = vsel %vm562, %v1835, 0
      %v1963 = vsel %vm562, %v1844, 0
      %v1966 = vsel %vm562, %v1853, 0
      %v1969 = vsel %vm562, %v1862, 0
      %v1972 = vsel %vm562, %v1871, 0
      %v1975 = vsel %vm562, %v1880, 0
      %v1978 = vsel %vm562, %v1889, 0
      %v1981 = vsel %vm562, %v1898, 0
      %v1984 = vsel %vm562, %v1907, 0
      %v1987 = vsel %vm562, %v1916, 0
      %v1990 = vsel %vm562, %v1925, 0
      %v1993 = vsel %vm562, %v1934, 0
      %v1996 = vsel %vm562, %v1943, 0
      %v1999 = vsel %vm617, %v1769, 0
      %2001 = vmatprep.subr.bf16.mxu0 0
      %2002 = vmatpush1.bf16.msra.mxu0 %v1999
      %2003 = vmatprep.subr.bf16.mxu0 0
      %2004 = vmatpush1.bf16.msra.mxu0 0
      %2005 = vmatprep.subr.bf16.mxu0 0
      %2006 = vmatpush1.bf16.msra.mxu0 0
      %2007 = vmatprep.subr.bf16.mxu0 0
      %2008 = vmatpush1.bf16.msra.mxu0 0
      %2009 = vmatprep.subr.bf16.mxu0 0
      %2010 = vmatpush1.bf16.msra.mxu0 0
      %2011 = vmatprep.subr.bf16.mxu0 0
      %2012 = vmatpush1.bf16.msra.mxu0 0
      %2013 = vmatprep.subr.bf16.mxu0 0
      %2014 = vmatpush1.bf16.msra.mxu0 0
      %2015 = vmatprep.subr.bf16.mxu0 0
      %2016 = vmatpush1.bf16.msra.mxu0 0
      %2017 = vmatprep.subr.bf16.mxu0 0
      %2018 = vmatpush1.bf16.msra.mxu0 0
      %2019 = vmatprep.subr.bf16.mxu0 0
      %2020 = vmatpush1.bf16.msra.mxu0 0
      %2021 = vmatprep.subr.bf16.mxu0 0
      %2022 = vmatpush1.bf16.msra.mxu0 0
      %2023 = vmatprep.subr.bf16.mxu0 0
      %2024 = vmatpush1.bf16.msra.mxu0 0
      %2025 = vmatprep.subr.bf16.mxu0 0
      %2026 = vmatpush1.bf16.msra.mxu0 0
      %2027 = vmatprep.subr.bf16.mxu0 0
      %2028 = vmatpush1.bf16.msra.mxu0 0
      %2029 = vmatprep.subr.bf16.mxu0 0
      %2030 = vmatpush1.bf16.msra.mxu0 0
      %2031 = vmatprep.subr.bf16.mxu0 0
      %2032 = vmatpush1.bf16.msra.mxu0 0
      %2033 = vmatprep.mubr.bf16.mxu0 0
      %2034 = vmatmul.mubr.bf16.gmra.mrb[0].mxu0 %v1945
      %v2035 = vpop.f32.mrb[0].mxu0
      %v2036 = vadd.f32 0.0, %v2035
      %v2037 = vpop.f32.mrb[0].mxu0
      %v2038 = vpop.f32.mrb[0].mxu0
      %v2039 = vadd.f32 0.0, %v2038
      %v2040 = vpop.f32.mrb[0].mxu0
      %2041 = vmatprep.mubr.bf16.mxu0 0
      %2042 = vmatmul.mubr.bf16.gmra.mrb[0].mxu0 %v1948
      %v2043 = vpop.f32.mrb[0].mxu0
      %v2044 = vadd.f32 0.0, %v2043
      %v2045 = vpop.f32.mrb[0].mxu0
      %v2046 = vpop.f32.mrb[0].mxu0
      %v2047 = vadd.f32 0.0, %v2046
      %v2048 = vpop.f32.mrb[0].mxu0
      %2049 = vmatprep.mubr.bf16.mxu0 0
      %2050 = vmatmul.mubr.bf16.gmra.mrb[0].mxu0 %v1951
      %v2051 = vpop.f32.mrb[0].mxu0
      %v2052 = vadd.f32 0.0, %v2051
      %v2053 = vpop.f32.mrb[0].mxu0
      %v2054 = vpop.f32.mrb[0].mxu0
      %v2055 = vadd.f32 0.0, %v2054
      %v2056 = vpop.f32.mrb[0].mxu0
      %2057 = vmatprep.mubr.bf16.mxu0 0
      %2058 = vmatmul.mubr.bf16.gmra.mrb[0].mxu0 %v1954
      %v2059 = vpop.f32.mrb[0].mxu0
      %v2060 = vadd.f32 0.0, %v2059
      %v2061 = vpop.f32.mrb[0].mxu0
      %v2062 = vpop.f32.mrb[0].mxu0
      %v2063 = vadd.f32 0.0, %v2062
      %v2064 = vpop.f32.mrb[0].mxu0
      %2065 = vmatprep.mubr.bf16.mxu0 0
      %2066 = vmatmul.mubr.bf16.gmra.mrb[0].mxu0 %v1957
      %v2067 = vpop.f32.mrb[0].mxu0
      %v2068 = vadd.f32 0.0, %v2067
      %v2069 = vpop.f32.mrb[0].mxu0
      %v2070 = vpop.f32.mrb[0].mxu0
      %v2071 = vadd.f32 0.0, %v2070
      %v2072 = vpop.f32.mrb[0].mxu0
      %2073 = vmatprep.mubr.bf16.mxu0 0
      %2074 = vmatmul.mubr.bf16.gmra.mrb[0].mxu0 %v1960
      %v2075 = vpop.f32.mrb[0].mxu0
      %v2076 = vadd.f32 0.0, %v2075
      %v2077 = vpop.f32.mrb[0].mxu0
      %v2078 = vpop.f32.mrb[0].mxu0
      %v2079 = vadd.f32 0.0, %v2078
      %v2080 = vpop.f32.mrb[0].mxu0
      %2081 = vmatprep.mubr.bf16.mxu0 0
      %2082 = vmatmul.mubr.bf16.gmra.mrb[0].mxu0 %v1963
      %v2083 = vpop.f32.mrb[0].mxu0
      %v2084 = vadd.f32 0.0, %v2083
      %v2085 = vpop.f32.mrb[0].mxu0
      %v2086 = vpop.f32.mrb[0].mxu0
      %v2087 = vadd.f32 0.0, %v2086
      %v2088 = vpop.f32.mrb[0].mxu0
      %2089 = vmatprep.mubr.bf16.mxu0 0
      %2090 = vmatmul.mubr.bf16.gmra.mrb[0].mxu0 %v1966
      %v2091 = vpop.f32.mrb[0].mxu0
      %v2092 = vadd.f32 0.0, %v2091
      %v2093 = vpop.f32.mrb[0].mxu0
      %v2094 = vpop.f32.mrb[0].mxu0
      %v2095 = vadd.f32 0.0, %v2094
      %v2096 = vpop.f32.mrb[0].mxu0
      %2097 = vmatprep.mubr.bf16.mxu0 0
      %2098 = vmatmul.mubr.bf16.gmra.mrb[0].mxu0 %v1969
      %v2099 = vpop.f32.mrb[0].mxu0
      %v2100 = vadd.f32 0.0, %v2099
      %v2101 = vpop.f32.mrb[0].mxu0
      %v2102 = vpop.f32.mrb[0].mxu0
      %v2103 = vadd.f32 0.0, %v2102
      %v2104 = vpop.f32.mrb[0].mxu0
      %2105 = vmatprep.mubr.bf16.mxu0 0
      %2106 = vmatmul.mubr.bf16.gmra.mrb[0].mxu0 %v1972
      %v2107 = vpop.f32.mrb[0].mxu0
      %v2108 = vadd.f32 0.0, %v2107
      %v2109 = vpop.f32.mrb[0].mxu0
      %v2110 = vpop.f32.mrb[0].mxu0
      %v2111 = vadd.f32 0.0, %v2110
      %v2112 = vpop.f32.mrb[0].mxu0
      %2113 = vmatprep.mubr.bf16.mxu0 0
      %2114 = vmatmul.mubr.bf16.gmra.mrb[0].mxu0 %v1975
      %v2115 = vpop.f32.mrb[0].mxu0
      %v2116 = vadd.f32 0.0, %v2115
      %v2117 = vpop.f32.mrb[0].mxu0
      %v2118 = vpop.f32.mrb[0].mxu0
      %v2119 = vadd.f32 0.0, %v2118
      %v2120 = vpop.f32.mrb[0].mxu0
      %2121 = vmatprep.mubr.bf16.mxu0 0
      %2122 = vmatmul.mubr.bf16.gmra.mrb[0].mxu0 %v1978
      %v2123 = vpop.f32.mrb[0].mxu0
      %v2124 = vadd.f32 0.0, %v2123
      %v2125 = vpop.f32.mrb[0].mxu0
      %v2126 = vpop.f32.mrb[0].mxu0
      %v2127 = vadd.f32 0.0, %v2126
      %v2128 = vpop.f32.mrb[0].mxu0
      %2129 = vmatprep.mubr.bf16.mxu0 0
      %2130 = vmatmul.mubr.bf16.gmra.mrb[0].mxu0 %v1981
      %v2131 = vpop.f32.mrb[0].mxu0
      %v2132 = vadd.f32 0.0, %v2131
      %v2133 = vpop.f32.mrb[0].mxu0
      %v2134 = vpop.f32.mrb[0].mxu0
      %v2135 = vadd.f32 0.0, %v2134
      %v2136 = vpop.f32.mrb[0].mxu0
      %2137 = vmatprep.mubr.bf16.mxu0 0
      %2138 = vmatmul.mubr.bf16.gmra.mrb[0].mxu0 %v1984
      %v2139 = vpop.f32.mrb[0].mxu0
      %v2140 = vadd.f32 0.0, %v2139
      %v2141 = vpop.f32.mrb[0].mxu0
      %v2142 = vpop.f32.mrb[0].mxu0
      %v2143 = vadd.f32 0.0, %v2142
      %v2144 = vpop.f32.mrb[0].mxu0
      %2145 = vmatprep.mubr.bf16.mxu0 0
      %2146 = vmatmul.mubr.bf16.gmra.mrb[0].mxu0 %v1987
      %v2147 = vpop.f32.mrb[0].mxu0
      %v2148 = vadd.f32 0.0, %v2147
      %v2149 = vpop.f32.mrb[0].mxu0
      %v2150 = vpop.f32.mrb[0].mxu0
      %v2151 = vadd.f32 0.0, %v2150
      %v2152 = vpop.f32.mrb[0].mxu0
      %2153 = vmatprep.mubr.bf16.mxu0 0
      %2154 = vmatmul.mubr.bf16.gmra.mrb[0].mxu0 %v1990
      %v2155 = vpop.f32.mrb[0].mxu0
      %v2156 = vadd.f32 0.0, %v2155
      %v2157 = vpop.f32.mrb[0].mxu0
      %v2158 = vpop.f32.mrb[0].mxu0
      %v2159 = vadd.f32 0.0, %v2158
      %v2160 = vpop.f32.mrb[0].mxu0
      %2161 = vmatprep.mubr.bf16.mxu0 0
      %2162 = vmatmul.mubr.bf16.gmra.mrb[0].mxu0 %v1993
      %v2163 = vpop.f32.mrb[0].mxu0
      %v2164 = vadd.f32 0.0, %v2163
      %v2165 = vpop.f32.mrb[0].mxu0
      %v2166 = vpop.f32.mrb[0].mxu0
      %v2167 = vadd.f32 0.0, %v2166
      %v2168 = vpop.f32.mrb[0].mxu0
      %2169 = vmatprep.mubr.bf16.mxu0 0
      %2170 = vmatmul.mubr.bf16.gmra.mrb[0].mxu0 %v1996
      %v2171 = vpop.f32.mrb[0].mxu0
      %v2172 = vadd.f32 0.0, %v2171
      %v2173 = vpop.f32.mrb[0].mxu0
      %v2174 = vpop.f32.mrb[0].mxu0
      %v2175 = vadd.f32 0.0, %v2174
      %v2176 = vpop.f32.mrb[0].mxu0
      %2177 = vdwg.mxu0
      %v2178 = vadd.f32 %v1731, %v2036
      %v2179 = vadd.f32 %v1732, %v2039
      %v2180 = vadd.f32 %v1733, %v2044
      %v2181 = vadd.f32 %v1734, %v2047
      %v2182 = vadd.f32 %v1735, %v2052
      %v2183 = vadd.f32 %v1736, %v2055
      %v2184 = vadd.f32 %v1737, %v2060
      %v2185 = vadd.f32 %v1738, %v2063
      %v2186 = vadd.f32 %v1739, %v2068
      %v2187 = vadd.f32 %v1740, %v2071
      %v2188 = vadd.f32 %v1741, %v2076
      %v2189 = vadd.f32 %v1742, %v2079
      %v2190 = vadd.f32 %v1743, %v2084
      %v2191 = vadd.f32 %v1744, %v2087
      %v2192 = vadd.f32 %v1745, %v2092
      %v2193 = vadd.f32 %v1746, %v2095
      %v2194 = vadd.f32 %v1747, %v2100
      %v2195 = vadd.f32 %v1748, %v2103
      %v2196 = vadd.f32 %v1749, %v2108
      %v2197 = vadd.f32 %v1750, %v2111
      %v2198 = vadd.f32 %v1751, %v2116
      %v2199 = vadd.f32 %v1752, %v2119
      %v2200 = vadd.f32 %v1753, %v2124
      %v2201 = vadd.f32 %v1754, %v2127
      %v2202 = vadd.f32 %v1755, %v2132
      %v2203 = vadd.f32 %v1756, %v2135
      %v2204 = vadd.f32 %v1757, %v2140
      %v2205 = vadd.f32 %v1758, %v2143
      %v2206 = vadd.f32 %v1759, %v2148
      %v2207 = vadd.f32 %v1760, %v2151
      %v2208 = vadd.f32 %v1761, %v2156
      %v2209 = vadd.f32 %v1762, %v2159
      %v2210 = vadd.f32 %v1763, %v2164
      %v2211 = vadd.f32 %v1764, %v2167
      %v2212 = vadd.f32 %v1765, %v2172
      %v2213 = vadd.f32 %v1766, %v2175
      %v2214 = vld [vmem:[%s254 + $0x8] sm:$0xc]
      %s2215 = scalar_lea.vmem %s1, 10
      %v2216 = vld [vmem:[%s2215] sm:$0x3]
      %v2218 = vunpack.c.l.b16 %v2214
      %v2219 = vpack.c.b16 %v1405, %v2218
      %vm2220 = vcmask 1045504
      %v2221 = vrot.slane %v2219, 2
      %v2222 = vrot.slane %v1442, 2
      %v2223 = vsel %vm2220, %v2221, %v2222
      %v2224 = vrot.slane %v1443, 2
      %v2225 = vsel %vm2220, %v2222, %v2224
      %v2226 = vrot.slane %v1444, 2
      %v2227 = vsel %vm2220, %v2224, %v2226
      %v2228 = vrot.slane %v1445, 2
      %v2229 = vsel %vm2220, %v2226, %v2228
      %v2230 = vrot.slane %v1446, 2
      %v2231 = vsel %vm2220, %v2228, %v2230
      %v2232 = vrot.slane %v1447, 2
      %v2233 = vsel %vm2220, %v2230, %v2232
      %v2234 = vrot.slane %v1448, 2
      %v2235 = vsel %vm2220, %v2232, %v2234
      %v2236 = vrot.slane %v1449, 2
      %v2237 = vsel %vm2220, %v2234, %v2236
      %v2238 = vrot.slane %v1450, 2
      %v2239 = vsel %vm2220, %v2236, %v2238
      %v2240 = vrot.slane %v1451, 2
      %v2241 = vsel %vm2220, %v2238, %v2240
      %v2242 = vrot.slane %v1452, 2
      %v2243 = vsel %vm2220, %v2240, %v2242
      %v2244 = vrot.slane %v1453, 2
      %v2245 = vsel %vm2220, %v2242, %v2244
      %v2246 = vrot.slane %v1454, 2
      %v2247 = vsel %vm2220, %v2244, %v2246
      %v2248 = vrot.slane %v1455, 2
      %v2249 = vsel %vm2220, %v2246, %v2248
      %v2250 = vrot.slane %v1456, 2
      %v2251 = vsel %vm2220, %v2248, %v2250
      %v2252 = vrot.slane %v1457, 2
      %v2253 = vsel %vm2220, %v2250, %v2252
      %v2254 = vrot.slane %v1458, 2
      %v2255 = vsel %vm2220, %v2252, %v2254
      %v2256 = vrot.slane %v1772, 2
      %v2257 = vsel %vm2220, %v2254, %v2256
      %v2259 = vsel %vm562, %v2223, 0
      %v2262 = vsel %vm562, %v2225, 0
      %v2265 = vsel %vm562, %v2227, 0
      %v2268 = vsel %vm562, %v2229, 0
      %v2271 = vsel %vm562, %v2231, 0
      %v2274 = vsel %vm562, %v2233, 0
      %v2277 = vsel %vm562, %v2235, 0
      %v2280 = vsel %vm562, %v2237, 0
      %v2283 = vsel %vm562, %v2239, 0
      %v2286 = vsel %vm562, %v2241, 0
      %v2289 = vsel %vm562, %v2243, 0
      %v2292 = vsel %vm562, %v2245, 0
      %v2295 = vsel %vm562, %v2247, 0
      %v2298 = vsel %vm562, %v2249, 0
      %v2301 = vsel %vm562, %v2251, 0
      %v2304 = vsel %vm562, %v2253, 0
      %v2307 = vsel %vm562, %v2255, 0
      %v2310 = vsel %vm562, %v2257, 0
      %v2313 = vsel %vm617, %v2216, 0
      %2315 = vmatprep.subr.bf16.mxu0 0
      %2316 = vmatpush1.bf16.msra.mxu0 %v2313
      %2317 = vmatprep.subr.bf16.mxu0 0
      %2318 = vmatpush1.bf16.msra.mxu0 0
      %2319 = vmatprep.subr.bf16.mxu0 0
      %2320 = vmatpush1.bf16.msra.mxu0 0
      %2321 = vmatprep.subr.bf16.mxu0 0
      %2322 = vmatpush1.bf16.msra.mxu0 0
      %2323 = vmatprep.subr.bf16.mxu0 0
      %2324 = vmatpush1.bf16.msra.mxu0 0
      %2325 = vmatprep.subr.bf16.mxu0 0
      %2326 = vmatpush1.bf16.msra.mxu0 0
      %2327 = vmatprep.subr.bf16.mxu0 0
      %2328 = vmatpush1.bf16.msra.mxu0 0
      %2329 = vmatprep.subr.bf16.mxu0 0
      %2330 = vmatpush1.bf16.msra.mxu0 0
      %2331 = vmatprep.subr.bf16.mxu0 0
      %2332 = vmatpush1.bf16.msra.mxu0 0
      %2333 = vmatprep.subr.bf16.mxu0 0
      %2334 = vmatpush1.bf16.msra.mxu0 0
      %2335 = vmatprep.subr.bf16.mxu0 0
      %2336 = vmatpush1.bf16.msra.mxu0 0
      %2337 = vmatprep.subr.bf16.mxu0 0
      %2338 = vmatpush1.bf16.msra.mxu0 0
      %2339 = vmatprep.subr.bf16.mxu0 0
      %2340 = vmatpush1.bf16.msra.mxu0 0
      %2341 = vmatprep.subr.bf16.mxu0 0
      %2342 = vmatpush1.bf16.msra.mxu0 0
      %2343 = vmatprep.subr.bf16.mxu0 0
      %2344 = vmatpush1.bf16.msra.mxu0 0
      %2345 = vmatprep.subr.bf16.mxu0 0
      %2346 = vmatpush1.bf16.msra.mxu0 0
      %2347 = vmatprep.mubr.bf16.mxu0 0
      %2348 = vmatmul.mubr.bf16.gmra.mrb[0].mxu0 %v2259
      %v2349 = vpop.f32.mrb[0].mxu0
      %v2350 = vadd.f32 0.0, %v2349
      %v2351 = vpop.f32.mrb[0].mxu0
      %v2352 = vpop.f32.mrb[0].mxu0
      %v2353 = vadd.f32 0.0, %v2352
      %v2354 = vpop.f32.mrb[0].mxu0
      %2355 = vmatprep.mubr.bf16.mxu0 0
      %2356 = vmatmul.mubr.bf16.gmra.mrb[0].mxu0 %v2262
      %v2357 = vpop.f32.mrb[0].mxu0
      %v2358 = vadd.f32 0.0, %v2357
      %v2359 = vpop.f32.mrb[0].mxu0
      %v2360 = vpop.f32.mrb[0].mxu0
      %v2361 = vadd.f32 0.0, %v2360
      %v2362 = vpop.f32.mrb[0].mxu0
      %2363 = vmatprep.mubr.bf16.mxu0 0
      %2364 = vmatmul.mubr.bf16.gmra.mrb[0].mxu0 %v2265
      %v2365 = vpop.f32.mrb[0].mxu0
      %v2366 = vadd.f32 0.0, %v2365
      %v2367 = vpop.f32.mrb[0].mxu0
      %v2368 = vpop.f32.mrb[0].mxu0
      %v2369 = vadd.f32 0.0, %v2368
      %v2370 = vpop.f32.mrb[0].mxu0
      %2371 = vmatprep.mubr.bf16.mxu0 0
      %2372 = vmatmul.mubr.bf16.gmra.mrb[0].mxu0 %v2268
      %v2373 = vpop.f32.mrb[0].mxu0
      %v2374 = vadd.f32 0.0, %v2373
      %v2375 = vpop.f32.mrb[0].mxu0
      %v2376 = vpop.f32.mrb[0].mxu0
      %v2377 = vadd.f32 0.0, %v2376
      %v2378 = vpop.f32.mrb[0].mxu0
      %2379 = vmatprep.mubr.bf16.mxu0 0
      %2380 = vmatmul.mubr.bf16.gmra.mrb[0].mxu0 %v2271
      %v2381 = vpop.f32.mrb[0].mxu0
      %v2382 = vadd.f32 0.0, %v2381
      %v2383 = vpop.f32.mrb[0].mxu0
      %v2384 = vpop.f32.mrb[0].mxu0
      %v2385 = vadd.f32 0.0, %v2384
      %v2386 = vpop.f32.mrb[0].mxu0
      %2387 = vmatprep.mubr.bf16.mxu0 0
      %2388 = vmatmul.mubr.bf16.gmra.mrb[0].mxu0 %v2274
      %v2389 = vpop.f32.mrb[0].mxu0
      %v2390 = vadd.f32 0.0, %v2389
      %v2391 = vpop.f32.mrb[0].mxu0
      %v2392 = vpop.f32.mrb[0].mxu0
      %v2393 = vadd.f32 0.0, %v2392
      %v2394 = vpop.f32.mrb[0].mxu0
      %2395 = vmatprep.mubr.bf16.mxu0 0
      %2396 = vmatmul.mubr.bf16.gmra.mrb[0].mxu0 %v2277
      %v2397 = vpop.f32.mrb[0].mxu0
      %v2398 = vadd.f32 0.0, %v2397
      %v2399 = vpop.f32.mrb[0].mxu0
      %v2400 = vpop.f32.mrb[0].mxu0
      %v2401 = vadd.f32 0.0, %v2400
      %v2402 = vpop.f32.mrb[0].mxu0
      %2403 = vmatprep.mubr.bf16.mxu0 0
      %2404 = vmatmul.mubr.bf16.gmra.mrb[0].mxu0 %v2280
      %v2405 = vpop.f32.mrb[0].mxu0
      %v2406 = vadd.f32 0.0, %v2405
      %v2407 = vpop.f32.mrb[0].mxu0
      %v2408 = vpop.f32.mrb[0].mxu0
      %v2409 = vadd.f32 0.0, %v2408
      %v2410 = vpop.f32.mrb[0].mxu0
      %2411 = vmatprep.mubr.bf16.mxu0 0
      %2412 = vmatmul.mubr.bf16.gmra.mrb[0].mxu0 %v2283
      %v2413 = vpop.f32.mrb[0].mxu0
      %v2414 = vadd.f32 0.0, %v2413
      %v2415 = vpop.f32.mrb[0].mxu0
      %v2416 = vpop.f32.mrb[0].mxu0
      %v2417 = vadd.f32 0.0, %v2416
      %v2418 = vpop.f32.mrb[0].mxu0
      %2419 = vmatprep.mubr.bf16.mxu0 0
      %2420 = vmatmul.mubr.bf16.gmra.mrb[0].mxu0 %v2286
      %v2421 = vpop.f32.mrb[0].mxu0
      %v2422 = vadd.f32 0.0, %v2421
      %v2423 = vpop.f32.mrb[0].mxu0
      %v2424 = vpop.f32.mrb[0].mxu0
      %v2425 = vadd.f32 0.0, %v2424
      %v2426 = vpop.f32.mrb[0].mxu0
      %2427 = vmatprep.mubr.bf16.mxu0 0
      %2428 = vmatmul.mubr.bf16.gmra.mrb[0].mxu0 %v2289
      %v2429 = vpop.f32.mrb[0].mxu0
      %v2430 = vadd.f32 0.0, %v2429
      %v2431 = vpop.f32.mrb[0].mxu0
      %v2432 = vpop.f32.mrb[0].mxu0
      %v2433 = vadd.f32 0.0, %v2432
      %v2434 = vpop.f32.mrb[0].mxu0
      %2435 = vmatprep.mubr.bf16.mxu0 0
      %2436 = vmatmul.mubr.bf16.gmra.mrb[0].mxu0 %v2292
      %v2437 = vpop.f32.mrb[0].mxu0
      %v2438 = vadd.f32 0.0, %v2437
      %v2439 = vpop.f32.mrb[0].mxu0
      %v2440 = vpop.f32.mrb[0].mxu0
      %v2441 = vadd.f32 0.0, %v2440
      %v2442 = vpop.f32.mrb[0].mxu0
      %2443 = vmatprep.mubr.bf16.mxu0 0
      %2444 = vmatmul.mubr.bf16.gmra.mrb[0].mxu0 %v2295
      %v2445 = vpop.f32.mrb[0].mxu0
      %v2446 = vadd.f32 0.0, %v2445
      %v2447 = vpop.f32.mrb[0].mxu0
      %v2448 = vpop.f32.mrb[0].mxu0
      %v2449 = vadd.f32 0.0, %v2448
      %v2450 = vpop.f32.mrb[0].mxu0
      %2451 = vmatprep.mubr.bf16.mxu0 0
      %2452 = vmatmul.mubr.bf16.gmra.mrb[0].mxu0 %v2298
      %v2453 = vpop.f32.mrb[0].mxu0
      %v2454 = vadd.f32 0.0, %v2453
      %v2455 = vpop.f32.mrb[0].mxu0
      %v2456 = vpop.f32.mrb[0].mxu0
      %v2457 = vadd.f32 0.0, %v2456
      %v2458 = vpop.f32.mrb[0].mxu0
      %2459 = vmatprep.mubr.bf16.mxu0 0
      %2460 = vmatmul.mubr.bf16.gmra.mrb[0].mxu0 %v2301
      %v2461 = vpop.f32.mrb[0].mxu0
      %v2462 = vadd.f32 0.0, %v2461
      %v2463 = vpop.f32.mrb[0].mxu0
      %v2464 = vpop.f32.mrb[0].mxu0
      %v2465 = vadd.f32 0.0, %v2464
      %v2466 = vpop.f32.mrb[0].mxu0
      %2467 = vmatprep.mubr.bf16.mxu0 0
      %2468 = vmatmul.mubr.bf16.gmra.mrb[0].mxu0 %v2304
      %v2469 = vpop.f32.mrb[0].mxu0
      %v2470 = vadd.f32 0.0, %v2469
      %v2471 = vpop.f32.mrb[0].mxu0
      %v2472 = vpop.f32.mrb[0].mxu0
      %v2473 = vadd.f32 0.0, %v2472
      %v2474 = vpop.f32.mrb[0].mxu0
      %2475 = vmatprep.mubr.bf16.mxu0 0
      %2476 = vmatmul.mubr.bf16.gmra.mrb[0].mxu0 %v2307
      %v2477 = vpop.f32.mrb[0].mxu0
      %v2478 = vadd.f32 0.0, %v2477
      %v2479 = vpop.f32.mrb[0].mxu0
      %v2480 = vpop.f32.mrb[0].mxu0
      %v2481 = vadd.f32 0.0, %v2480
      %v2482 = vpop.f32.mrb[0].mxu0
      %2483 = vmatprep.mubr.bf16.mxu0 0
      %2484 = vmatmul.mubr.bf16.gmra.mrb[0].mxu0 %v2310
      %v2485 = vpop.f32.mrb[0].mxu0
      %v2486 = vadd.f32 0.0, %v2485
      %v2487 = vpop.f32.mrb[0].mxu0
      %v2488 = vpop.f32.mrb[0].mxu0
      %v2489 = vadd.f32 0.0, %v2488
      %v2490 = vpop.f32.mrb[0].mxu0
      %2491 = vdwg.mxu0
      %v2492 = vadd.f32 %v2178, %v2350
      %v2493 = vadd.f32 %v2179, %v2353
      %v2494 = vadd.f32 %v2180, %v2358
      %v2495 = vadd.f32 %v2181, %v2361
      %v2496 = vadd.f32 %v2182, %v2366
      %v2497 = vadd.f32 %v2183, %v2369
      %v2498 = vadd.f32 %v2184, %v2374
      %v2499 = vadd.f32 %v2185, %v2377
      %v2500 = vadd.f32 %v2186, %v2382
      %v2501 = vadd.f32 %v2187, %v2385
      %v2502 = vadd.f32 %v2188, %v2390
      %v2503 = vadd.f32 %v2189, %v2393
      %v2504 = vadd.f32 %v2190, %v2398
      %v2505 = vadd.f32 %v2191, %v2401
      %v2506 = vadd.f32 %v2192, %v2406
      %v2507 = vadd.f32 %v2193, %v2409
      %v2508 = vadd.f32 %v2194, %v2414
      %v2509 = vadd.f32 %v2195, %v2417
      %v2510 = vadd.f32 %v2196, %v2422
      %v2511 = vadd.f32 %v2197, %v2425
      %v2512 = vadd.f32 %v2198, %v2430
      %v2513 = vadd.f32 %v2199, %v2433
      %v2514 = vadd.f32 %v2200, %v2438
      %v2515 = vadd.f32 %v2201, %v2441
      %v2516 = vadd.f32 %v2202, %v2446
      %v2517 = vadd.f32 %v2203, %v2449
      %v2518 = vadd.f32 %v2204, %v2454
      %v2519 = vadd.f32 %v2205, %v2457
      %v2520 = vadd.f32 %v2206, %v2462
      %v2521 = vadd.f32 %v2207, %v2465
      %v2522 = vadd.f32 %v2208, %v2470
      %v2523 = vadd.f32 %v2209, %v2473
      %v2524 = vadd.f32 %v2210, %v2478
      %v2525 = vadd.f32 %v2211, %v2481
      %v2526 = vadd.f32 %v2212, %v2486
      %v2527 = vadd.f32 %v2213, %v2489
      %v2528 = vld [vmem:[%s254 + $0x10] sm:$0xc]
      %v2529 = vld [vmem:[%s254 + $0x14] sm:$0xf]
      %v2530 = vld [vmem:[%s254 + $0x18] sm:$0xf]
      %v2531 = vld [vmem:[%s254 + $0x1c] sm:$0xf]
      %v2532 = vld [vmem:[%s254 + $0x20] sm:$0xf]
      %v2533 = vld [vmem:[%s254 + $0x24] sm:$0xf]
      %v2534 = vld [vmem:[%s254 + $0x28] sm:$0xf]
      %v2535 = vld [vmem:[%s254 + $0x2c] sm:$0xf]
      %v2536 = vld [vmem:[%s254 + $0x30] sm:$0xf]
      %v2537 = vld [vmem:[%s254 + $0x34] sm:$0xf]
      %v2538 = vld [vmem:[%s254 + $0x38] sm:$0xf]
      %v2539 = vld [vmem:[%s254 + $0x3c] sm:$0xf]
      %v2540 = vld [vmem:[%s254 + $0x40] sm:$0xf]
      %v2541 = vld [vmem:[%s254 + $0x44] sm:$0xf]
      %v2542 = vld [vmem:[%s254 + $0x48] sm:$0xf]
      %v2543 = vld [vmem:[%s254 + $0x4c] sm:$0xf]
      %v2544 = vld [vmem:[%s254 + $0x50] sm:$0xf]
      %v2545 = vld [vmem:[%s254 + $0x54] sm:$0xf]
      %v2546 = vld [vmem:[%s254 + $0x58] sm:$0xf]
      %v2547 = vld [vmem:[%s254 + $0x5c] sm:$0xf]
      %v2548 = vld [vmem:[%s254 + $0x60] sm:$0xf]
      %v2549 = vld [vmem:[%s254 + $0x64] sm:$0xf]
      %v2550 = vld [vmem:[%s254 + $0x68] sm:$0xf]
      %v2551 = vld [vmem:[%s254 + $0x6c] sm:$0xf]
      %v2552 = vld [vmem:[%s254 + $0x70] sm:$0xf]
      %v2553 = vld [vmem:[%s254 + $0x74] sm:$0xf]
      %v2554 = vld [vmem:[%s254 + $0x78] sm:$0xf]
      %v2555 = vld [vmem:[%s254 + $0x7c] sm:$0xf]
      %v2556 = vld [vmem:[%s254 + $0x80] sm:$0xf]
      %v2557 = vld [vmem:[%s254 + $0x84] sm:$0xf]
      %v2558 = vld [vmem:[%s254 + $0x88] sm:$0xf]
      %v2559 = vld [vmem:[%s254 + $0x8c] sm:$0xf]
      %v2560 = vld [vmem:[%s254 + $0x90] sm:$0xf]
      %v2561 = vld [vmem:[%s254 + $0x94] sm:$0xf]
      %v2562 = vld [vmem:[%s254 + $0x98] sm:$0xf]
      %v2563 = vld [vmem:[%s254 + $0x9c] sm:$0xf]
      %v2564 = vld [vmem:[%s254 + $0xa0] sm:$0x3]
      %s2565 = scalar_lea.vmem %s1, 12
      %v2566 = vld [vmem:[%s2565] sm:$0x3]
      %v2604 = vunpack.c.l.b16 %v2528
      %v2605 = vunpack.c.l.b16 %v2529
      %v2606 = vunpack.c.l.b16 %v2530
      %v2607 = vunpack.c.l.b16 %v2531
      %v2608 = vunpack.c.l.b16 %v2532
      %v2609 = vunpack.c.l.b16 %v2533
      %v2610 = vunpack.c.l.b16 %v2534
      %v2611 = vunpack.c.l.b16 %v2535
      %v2612 = vunpack.c.l.b16 %v2536
      %v2613 = vunpack.c.l.b16 %v2537
      %v2614 = vunpack.c.l.b16 %v2538
      %v2615 = vunpack.c.l.b16 %v2539
      %v2616 = vunpack.c.l.b16 %v2540
      %v2617 = vunpack.c.l.b16 %v2541
      %v2618 = vunpack.c.l.b16 %v2542
      %v2619 = vunpack.c.l.b16 %v2543
      %v2620 = vunpack.c.l.b16 %v2544
      %v2621 = vunpack.c.l.b16 %v2545
      %v2622 = vunpack.c.l.b16 %v2546
      %v2623 = vunpack.c.l.b16 %v2547
      %v2624 = vunpack.c.l.b16 %v2548
      %v2625 = vunpack.c.l.b16 %v2549
      %v2626 = vunpack.c.l.b16 %v2550
      %v2627 = vunpack.c.l.b16 %v2551
      %v2628 = vunpack.c.l.b16 %v2552
      %v2629 = vunpack.c.l.b16 %v2553
      %v2630 = vunpack.c.l.b16 %v2554
      %v2631 = vunpack.c.l.b16 %v2555
      %v2632 = vunpack.c.l.b16 %v2556
      %v2633 = vunpack.c.l.b16 %v2557
      %v2634 = vunpack.c.l.b16 %v2558
      %v2635 = vunpack.c.l.b16 %v2559
      %v2636 = vunpack.c.l.b16 %v2560
      %v2637 = vunpack.c.l.b16 %v2561
      %v2638 = vunpack.c.l.b16 %v2562
      %v2639 = vunpack.c.l.b16 %v2563
      %v2640 = vunpack.c.l.b16 %v2564
      %v2641 = vpack.c.b16 %v2605, %v2604
      %v2642 = vpack.c.b16 %v2607, %v2606
      %v2643 = vpack.c.b16 %v2609, %v2608
      %v2644 = vpack.c.b16 %v2611, %v2610
      %v2645 = vpack.c.b16 %v2613, %v2612
      %v2646 = vpack.c.b16 %v2615, %v2614
      %v2647 = vpack.c.b16 %v2617, %v2616
      %v2648 = vpack.c.b16 %v2619, %v2618
      %v2649 = vpack.c.b16 %v2621, %v2620
      %v2650 = vpack.c.b16 %v2623, %v2622
      %v2651 = vpack.c.b16 %v2625, %v2624
      %v2652 = vpack.c.b16 %v2627, %v2626
      %v2653 = vpack.c.b16 %v2629, %v2628
      %v2654 = vpack.c.b16 %v2631, %v2630
      %v2655 = vpack.c.b16 %v2633, %v2632
      %v2656 = vpack.c.b16 %v2635, %v2634
      %v2657 = vpack.c.b16 %v2637, %v2636
      %v2658 = vpack.c.b16 %v2639, %v2638
      %v2659 = vpack.c.b16 %v2640, %v2640
      %v2660 = vrot.slane %v2641, 2
      %v2661 = vrot.slane %v2642, 2
      %v2662 = vsel %vm2220, %v2660, %v2661
      %v2663 = vrot.slane %v2643, 2
      %v2664 = vsel %vm2220, %v2661, %v2663
      %v2665 = vrot.slane %v2644, 2
      %v2666 = vsel %vm2220, %v2663, %v2665
      %v2667 = vrot.slane %v2645, 2
      %v2668 = vsel %vm2220, %v2665, %v2667
      %v2669 = vrot.slane %v2646, 2
      %v2670 = vsel %vm2220, %v2667, %v2669
      %v2671 = vrot.slane %v2647, 2
      %v2672 = vsel %vm2220, %v2669, %v2671
      %v2673 = vrot.slane %v2648, 2
      %v2674 = vsel %vm2220, %v2671, %v2673
      %v2675 = vrot.slane %v2649, 2
      %v2676 = vsel %vm2220, %v2673, %v2675
      %v2677 = vrot.slane %v2650, 2
      %v2678 = vsel %vm2220, %v2675, %v2677
      %v2679 = vrot.slane %v2651, 2
      %v2680 = vsel %vm2220, %v2677, %v2679
      %v2681 = vrot.slane %v2652, 2
      %v2682 = vsel %vm2220, %v2679, %v2681
      %v2683 = vrot.slane %v2653, 2
      %v2684 = vsel %vm2220, %v2681, %v2683
      %v2685 = vrot.slane %v2654, 2
      %v2686 = vsel %vm2220, %v2683, %v2685
      %v2687 = vrot.slane %v2655, 2
      %v2688 = vsel %vm2220, %v2685, %v2687
      %v2689 = vrot.slane %v2656, 2
      %v2690 = vsel %vm2220, %v2687, %v2689
      %v2691 = vrot.slane %v2657, 2
      %v2692 = vsel %vm2220, %v2689, %v2691
      %v2693 = vrot.slane %v2658, 2
      %v2694 = vsel %vm2220, %v2691, %v2693
      %v2695 = vrot.slane %v2659, 2
      %v2696 = vsel %vm2220, %v2693, %v2695
      %v2698 = vsel %vm562, %v2662, 0
      %v2701 = vsel %vm562, %v2664, 0
      %v2704 = vsel %vm562, %v2666, 0
      %v2707 = vsel %vm562, %v2668, 0
      %v2710 = vsel %vm562, %v2670, 0
      %v2713 = vsel %vm562, %v2672, 0
      %v2716 = vsel %vm562, %v2674, 0
      %v2719 = vsel %vm562, %v2676, 0
      %v2722 = vsel %vm562, %v2678, 0
      %v2725 = vsel %vm562, %v2680, 0
      %v2728 = vsel %vm562, %v2682, 0
      %v2731 = vsel %vm562, %v2684, 0
      %v2734 = vsel %vm562, %v2686, 0
      %v2737 = vsel %vm562, %v2688, 0
      %v2740 = vsel %vm562, %v2690, 0
      %v2743 = vsel %vm562, %v2692, 0
      %v2746 = vsel %vm562, %v2694, 0
      %v2749 = vsel %vm562, %v2696, 0
      %v2752 = vsel %vm617, %v2566, 0
      %2754 = vmatprep.subr.bf16.mxu0 0
      %2755 = vmatpush1.bf16.msra.mxu0 %v2752
      %2756 = vmatprep.subr.bf16.mxu0 0
      %2757 = vmatpush1.bf16.msra.mxu0 0
      %2758 = vmatprep.subr.bf16.mxu0 0
      %2759 = vmatpush1.bf16.msra.mxu0 0
      %2760 = vmatprep.subr.bf16.mxu0 0
      %2761 = vmatpush1.bf16.msra.mxu0 0
      %2762 = vmatprep.subr.bf16.mxu0 0
      %2763 = vmatpush1.bf16.msra.mxu0 0
      %2764 = vmatprep.subr.bf16.mxu0 0
      %2765 = vmatpush1.bf16.msra.mxu0 0
      %2766 = vmatprep.subr.bf16.mxu0 0
      %2767 = vmatpush1.bf16.msra.mxu0 0
      %2768 = vmatprep.subr.bf16.mxu0 0
      %2769 = vmatpush1.bf16.msra.mxu0 0
      %2770 = vmatprep.subr.bf16.mxu0 0
      %2771 = vmatpush1.bf16.msra.mxu0 0
      %2772 = vmatprep.subr.bf16.mxu0 0
      %2773 = vmatpush1.bf16.msra.mxu0 0
      %2774 = vmatprep.subr.bf16.mxu0 0
      %2775 = vmatpush1.bf16.msra.mxu0 0
      %2776 = vmatprep.subr.bf16.mxu0 0
      %2777 = vmatpush1.bf16.msra.mxu0 0
      %2778 = vmatprep.subr.bf16.mxu0 0
      %2779 = vmatpush1.bf16.msra.mxu0 0
      %2780 = vmatprep.subr.bf16.mxu0 0
      %2781 = vmatpush1.bf16.msra.mxu0 0
      %2782 = vmatprep.subr.bf16.mxu0 0
      %2783 = vmatpush1.bf16.msra.mxu0 0
      %2784 = vmatprep.subr.bf16.mxu0 0
      %2785 = vmatpush1.bf16.msra.mxu0 0
      %2786 = vmatprep.mubr.bf16.mxu0 0
      %2787 = vmatmul.mubr.bf16.gmra.mrb[0].mxu0 %v2698
      %v2788 = vpop.f32.mrb[0].mxu0
      %v2789 = vadd.f32 0.0, %v2788
      %v2790 = vpop.f32.mrb[0].mxu0
      %v2791 = vpop.f32.mrb[0].mxu0
      %v2792 = vadd.f32 0.0, %v2791
      %v2793 = vpop.f32.mrb[0].mxu0
      %2794 = vmatprep.mubr.bf16.mxu0 0
      %2795 = vmatmul.mubr.bf16.gmra.mrb[0].mxu0 %v2701
      %v2796 = vpop.f32.mrb[0].mxu0
      %v2797 = vadd.f32 0.0, %v2796
      %v2798 = vpop.f32.mrb[0].mxu0
      %v2799 = vpop.f32.mrb[0].mxu0
      %v2800 = vadd.f32 0.0, %v2799
      %v2801 = vpop.f32.mrb[0].mxu0
      %2802 = vmatprep.mubr.bf16.mxu0 0
      %2803 = vmatmul.mubr.bf16.gmra.mrb[0].mxu0 %v2704
      %v2804 = vpop.f32.mrb[0].mxu0
      %v2805 = vadd.f32 0.0, %v2804
      %v2806 = vpop.f32.mrb[0].mxu0
      %v2807 = vpop.f32.mrb[0].mxu0
      %v2808 = vadd.f32 0.0, %v2807
      %v2809 = vpop.f32.mrb[0].mxu0
      %2810 = vmatprep.mubr.bf16.mxu0 0
      %2811 = vmatmul.mubr.bf16.gmra.mrb[0].mxu0 %v2707
      %v2812 = vpop.f32.mrb[0].mxu0
      %v2813 = vadd.f32 0.0, %v2812
      %v2814 = vpop.f32.mrb[0].mxu0
      %v2815 = vpop.f32.mrb[0].mxu0
      %v2816 = vadd.f32 0.0, %v2815
      %v2817 = vpop.f32.mrb[0].mxu0
      %2818 = vmatprep.mubr.bf16.mxu0 0
      %2819 = vmatmul.mubr.bf16.gmra.mrb[0].mxu0 %v2710
      %v2820 = vpop.f32.mrb[0].mxu0
      %v2821 = vadd.f32 0.0, %v2820
      %v2822 = vpop.f32.mrb[0].mxu0
      %v2823 = vpop.f32.mrb[0].mxu0
      %v2824 = vadd.f32 0.0, %v2823
      %v2825 = vpop.f32.mrb[0].mxu0
      %2826 = vmatprep.mubr.bf16.mxu0 0
      %2827 = vmatmul.mubr.bf16.gmra.mrb[0].mxu0 %v2713
      %v2828 = vpop.f32.mrb[0].mxu0
      %v2829 = vadd.f32 0.0, %v2828
      %v2830 = vpop.f32.mrb[0].mxu0
      %v2831 = vpop.f32.mrb[0].mxu0
      %v2832 = vadd.f32 0.0, %v2831
      %v2833 = vpop.f32.mrb[0].mxu0
      %2834 = vmatprep.mubr.bf16.mxu0 0
      %2835 = vmatmul.mubr.bf16.gmra.mrb[0].mxu0 %v2716
      %v2836 = vpop.f32.mrb[0].mxu0
      %v2837 = vadd.f32 0.0, %v2836
      %v2838 = vpop.f32.mrb[0].mxu0
      %v2839 = vpop.f32.mrb[0].mxu0
      %v2840 = vadd.f32 0.0, %v2839
      %v2841 = vpop.f32.mrb[0].mxu0
      %2842 = vmatprep.mubr.bf16.mxu0 0
      %2843 = vmatmul.mubr.bf16.gmra.mrb[0].mxu0 %v2719
      %v2844 = vpop.f32.mrb[0].mxu0
      %v2845 = vadd.f32 0.0, %v2844
      %v2846 = vpop.f32.mrb[0].mxu0
      %v2847 = vpop.f32.mrb[0].mxu0
      %v2848 = vadd.f32 0.0, %v2847
      %v2849 = vpop.f32.mrb[0].mxu0
      %2850 = vmatprep.mubr.bf16.mxu0 0
      %2851 = vmatmul.mubr.bf16.gmra.mrb[0].mxu0 %v2722
      %v2852 = vpop.f32.mrb[0].mxu0
      %v2853 = vadd.f32 0.0, %v2852
      %v2854 = vpop.f32.mrb[0].mxu0
      %v2855 = vpop.f32.mrb[0].mxu0
      %v2856 = vadd.f32 0.0, %v2855
      %v2857 = vpop.f32.mrb[0].mxu0
      %2858 = vmatprep.mubr.bf16.mxu0 0
      %2859 = vmatmul.mubr.bf16.gmra.mrb[0].mxu0 %v2725
      %v2860 = vpop.f32.mrb[0].mxu0
      %v2861 = vadd.f32 0.0, %v2860
      %v2862 = vpop.f32.mrb[0].mxu0
      %v2863 = vpop.f32.mrb[0].mxu0
      %v2864 = vadd.f32 0.0, %v2863
      %v2865 = vpop.f32.mrb[0].mxu0
      %2866 = vmatprep.mubr.bf16.mxu0 0
      %2867 = vmatmul.mubr.bf16.gmra.mrb[0].mxu0 %v2728
      %v2868 = vpop.f32.mrb[0].mxu0
      %v2869 = vadd.f32 0.0, %v2868
      %v2870 = vpop.f32.mrb[0].mxu0
      %v2871 = vpop.f32.mrb[0].mxu0
      %v2872 = vadd.f32 0.0, %v2871
      %v2873 = vpop.f32.mrb[0].mxu0
      %2874 = vmatprep.mubr.bf16.mxu0 0
      %2875 = vmatmul.mubr.bf16.gmra.mrb[0].mxu0 %v2731
      %v2876 = vpop.f32.mrb[0].mxu0
      %v2877 = vadd.f32 0.0, %v2876
      %v2878 = vpop.f32.mrb[0].mxu0
      %v2879 = vpop.f32.mrb[0].mxu0
      %v2880 = vadd.f32 0.0, %v2879
      %v2881 = vpop.f32.mrb[0].mxu0
      %2882 = vmatprep.mubr.bf16.mxu0 0
      %2883 = vmatmul.mubr.bf16.gmra.mrb[0].mxu0 %v2734
      %v2884 = vpop.f32.mrb[0].mxu0
      %v2885 = vadd.f32 0.0, %v2884
      %v2886 = vpop.f32.mrb[0].mxu0
      %v2887 = vpop.f32.mrb[0].mxu0
      %v2888 = vadd.f32 0.0, %v2887
      %v2889 = vpop.f32.mrb[0].mxu0
      %2890 = vmatprep.mubr.bf16.mxu0 0
      %2891 = vmatmul.mubr.bf16.gmra.mrb[0].mxu0 %v2737
      %v2892 = vpop.f32.mrb[0].mxu0
      %v2893 = vadd.f32 0.0, %v2892
      %v2894 = vpop.f32.mrb[0].mxu0
      %v2895 = vpop.f32.mrb[0].mxu0
      %v2896 = vadd.f32 0.0, %v2895
      %v2897 = vpop.f32.mrb[0].mxu0
      %2898 = vmatprep.mubr.bf16.mxu0 0
      %2899 = vmatmul.mubr.bf16.gmra.mrb[0].mxu0 %v2740
      %v2900 = vpop.f32.mrb[0].mxu0
      %v2901 = vadd.f32 0.0, %v2900
      %v2902 = vpop.f32.mrb[0].mxu0
      %v2903 = vpop.f32.mrb[0].mxu0
      %v2904 = vadd.f32 0.0, %v2903
      %v2905 = vpop.f32.mrb[0].mxu0
      %2906 = vmatprep.mubr.bf16.mxu0 0
      %2907 = vmatmul.mubr.bf16.gmra.mrb[0].mxu0 %v2743
      %v2908 = vpop.f32.mrb[0].mxu0
      %v2909 = vadd.f32 0.0, %v2908
      %v2910 = vpop.f32.mrb[0].mxu0
      %v2911 = vpop.f32.mrb[0].mxu0
      %v2912 = vadd.f32 0.0, %v2911
      %v2913 = vpop.f32.mrb[0].mxu0
      %2914 = vmatprep.mubr.bf16.mxu0 0
      %2915 = vmatmul.mubr.bf16.gmra.mrb[0].mxu0 %v2746
      %v2916 = vpop.f32.mrb[0].mxu0
      %v2917 = vadd.f32 0.0, %v2916
      %v2918 = vpop.f32.mrb[0].mxu0
      %v2919 = vpop.f32.mrb[0].mxu0
      %v2920 = vadd.f32 0.0, %v2919
      %v2921 = vpop.f32.mrb[0].mxu0
      %2922 = vmatprep.mubr.bf16.mxu0 0
      %2923 = vmatmul.mubr.bf16.gmra.mrb[0].mxu0 %v2749
      %v2924 = vpop.f32.mrb[0].mxu0
      %v2925 = vadd.f32 0.0, %v2924
      %v2926 = vpop.f32.mrb[0].mxu0
      %v2927 = vpop.f32.mrb[0].mxu0
      %v2928 = vadd.f32 0.0, %v2927
      %v2929 = vpop.f32.mrb[0].mxu0
      %2930 = vdwg.mxu0
      %v2931 = vadd.f32 %v2492, %v2789
      %v2932 = vadd.f32 %v2493, %v2792
      %v2933 = vadd.f32 %v2494, %v2797
      %v2934 = vadd.f32 %v2495, %v2800
      %v2935 = vadd.f32 %v2496, %v2805
      %v2936 = vadd.f32 %v2497, %v2808
      %v2937 = vadd.f32 %v2498, %v2813
      %v2938 = vadd.f32 %v2499, %v2816
      %v2939 = vadd.f32 %v2500, %v2821
      %v2940 = vadd.f32 %v2501, %v2824
      %v2941 = vadd.f32 %v2502, %v2829
      %v2942 = vadd.f32 %v2503, %v2832
      %v2943 = vadd.f32 %v2504, %v2837
      %v2944 = vadd.f32 %v2505, %v2840
      %v2945 = vadd.f32 %v2506, %v2845
      %v2946 = vadd.f32 %v2507, %v2848
      %v2947 = vadd.f32 %v2508, %v2853
      %v2948 = vadd.f32 %v2509, %v2856
      %v2949 = vadd.f32 %v2510, %v2861
      %v2950 = vadd.f32 %v2511, %v2864
      %v2951 = vadd.f32 %v2512, %v2869
      %v2952 = vadd.f32 %v2513, %v2872
      %v2953 = vadd.f32 %v2514, %v2877
      %v2954 = vadd.f32 %v2515, %v2880
      %v2955 = vadd.f32 %v2516, %v2885
      %v2956 = vadd.f32 %v2517, %v2888
      %v2957 = vadd.f32 %v2518, %v2893
      %v2958 = vadd.f32 %v2519, %v2896
      %v2959 = vadd.f32 %v2520, %v2901
      %v2960 = vadd.f32 %v2521, %v2904
      %v2961 = vadd.f32 %v2522, %v2909
      %v2962 = vadd.f32 %v2523, %v2912
      %v2963 = vadd.f32 %v2524, %v2917
      %v2964 = vadd.f32 %v2525, %v2920
      %v2965 = vadd.f32 %v2526, %v2925
      %v2966 = vadd.f32 %v2527, %v2928
      %v2967 = vld [vmem:[%s254 + $0xa0] sm:$0x7]
      %s2968 = scalar_lea.vmem %s1, 14
      %v2969 = vld [vmem:[%s2968] sm:$0x3]
      %v2971 = vunpack.c.l.b16 %v2967
      %v2972 = vpack.c.b16 %v2971, %v2971
      %vm2973 = vsmask.f32 5376
      %v2975 = vshrl.u32 %v2641, 16
      %v2977 = vrot.slane %v2975, 2
      %v2978 = vshll.u32 %v2641, 16
      %v2980 = vrot.slane %v2978, 3
      %v2981 = vor.u32 %v2977, %v2980
      %v2983 = vshrl.u32 %v2642, 16
      %v2985 = vrot.slane %v2983, 2
      %v2986 = vshll.u32 %v2642, 16
      %v2988 = vrot.slane %v2986, 3
      %v2989 = vor.u32 %v2985, %v2988
      %v2990 = vsel %vm2973, %v2981, %v2989
      %v2992 = vshrl.u32 %v2643, 16
      %v2994 = vrot.slane %v2992, 2
      %v2995 = vshll.u32 %v2643, 16
      %v2997 = vrot.slane %v2995, 3
      %v2998 = vor.u32 %v2994, %v2997
      %v2999 = vsel %vm2973, %v2989, %v2998
      %v3001 = vshrl.u32 %v2644, 16
      %v3003 = vrot.slane %v3001, 2
      %v3004 = vshll.u32 %v2644, 16
      %v3006 = vrot.slane %v3004, 3
      %v3007 = vor.u32 %v3003, %v3006
      %v3008 = vsel %vm2973, %v2998, %v3007
      %v3010 = vshrl.u32 %v2645, 16
      %v3012 = vrot.slane %v3010, 2
      %v3013 = vshll.u32 %v2645, 16
      %v3015 = vrot.slane %v3013, 3
      %v3016 = vor.u32 %v3012, %v3015
      %v3017 = vsel %vm2973, %v3007, %v3016
      %v3019 = vshrl.u32 %v2646, 16
      %v3021 = vrot.slane %v3019, 2
      %v3022 = vshll.u32 %v2646, 16
      %v3024 = vrot.slane %v3022, 3
      %v3025 = vor.u32 %v3021, %v3024
      %v3026 = vsel %vm2973, %v3016, %v3025
      %v3028 = vshrl.u32 %v2647, 16
      %v3030 = vrot.slane %v3028, 2
      %v3031 = vshll.u32 %v2647, 16
      %v3033 = vrot.slane %v3031, 3
      %v3034 = vor.u32 %v3030, %v3033
      %v3035 = vsel %vm2973, %v3025, %v3034
      %v3037 = vshrl.u32 %v2648, 16
      %v3039 = vrot.slane %v3037, 2
      %v3040 = vshll.u32 %v2648, 16
      %v3042 = vrot.slane %v3040, 3
      %v3043 = vor.u32 %v3039, %v3042
      %v3044 = vsel %vm2973, %v3034, %v3043
      %v3046 = vshrl.u32 %v2649, 16
      %v3048 = vrot.slane %v3046, 2
      %v3049 = vshll.u32 %v2649, 16
      %v3051 = vrot.slane %v3049, 3
      %v3052 = vor.u32 %v3048, %v3051
      %v3053 = vsel %vm2973, %v3043, %v3052
      %v3055 = vshrl.u32 %v2650, 16
      %v3057 = vrot.slane %v3055, 2
      %v3058 = vshll.u32 %v2650, 16
      %v3060 = vrot.slane %v3058, 3
      %v3061 = vor.u32 %v3057, %v3060
      %v3062 = vsel %vm2973, %v3052, %v3061
      %v3064 = vshrl.u32 %v2651, 16
      %v3066 = vrot.slane %v3064, 2
      %v3067 = vshll.u32 %v2651, 16
      %v3069 = vrot.slane %v3067, 3
      %v3070 = vor.u32 %v3066, %v3069
      %v3071 = vsel %vm2973, %v3061, %v3070
      %v3073 = vshrl.u32 %v2652, 16
      %v3075 = vrot.slane %v3073, 2
      %v3076 = vshll.u32 %v2652, 16
      %v3078 = vrot.slane %v3076, 3
      %v3079 = vor.u32 %v3075, %v3078
      %v3080 = vsel %vm2973, %v3070, %v3079
      %v3082 = vshrl.u32 %v2653, 16
      %v3084 = vrot.slane %v3082, 2
      %v3085 = vshll.u32 %v2653, 16
      %v3087 = vrot.slane %v3085, 3
      %v3088 = vor.u32 %v3084, %v3087
      %v3089 = vsel %vm2973, %v3079, %v3088
      %v3091 = vshrl.u32 %v2654, 16
      %v3093 = vrot.slane %v3091, 2
      %v3094 = vshll.u32 %v2654, 16
      %v3096 = vrot.slane %v3094, 3
      %v3097 = vor.u32 %v3093, %v3096
      %v3098 = vsel %vm2973, %v3088, %v3097
      %v3100 = vshrl.u32 %v2655, 16
      %v3102 = vrot.slane %v3100, 2
      %v3103 = vshll.u32 %v2655, 16
      %v3105 = vrot.slane %v3103, 3
      %v3106 = vor.u32 %v3102, %v3105
      %v3107 = vsel %vm2973, %v3097, %v3106
      %v3109 = vshrl.u32 %v2656, 16
      %v3111 = vrot.slane %v3109, 2
      %v3112 = vshll.u32 %v2656, 16
      %v3114 = vrot.slane %v3112, 3
      %v3115 = vor.u32 %v3111, %v3114
      %v3116 = vsel %vm2973, %v3106, %v3115
      %v3118 = vshrl.u32 %v2657, 16
      %v3120 = vrot.slane %v3118, 2
      %v3121 = vshll.u32 %v2657, 16
      %v3123 = vrot.slane %v3121, 3
      %v3124 = vor.u32 %v3120, %v3123
      %v3125 = vsel %vm2973, %v3115, %v3124
      %v3127 = vshrl.u32 %v2658, 16
      %v3129 = vrot.slane %v3127, 2
      %v3130 = vshll.u32 %v2658, 16
      %v3132 = vrot.slane %v3130, 3
      %v3133 = vor.u32 %v3129, %v3132
      %v3134 = vsel %vm2973, %v3124, %v3133
      %v3136 = vshrl.u32 %v2972, 16
      %v3138 = vrot.slane %v3136, 2
      %v3139 = vshll.u32 %v2972, 16
      %v3141 = vrot.slane %v3139, 3
      %v3142 = vor.u32 %v3138, %v3141
      %v3143 = vsel %vm2973, %v3133, %v3142
      %v3145 = vsel %vm562, %v2990, 0
      %v3148 = vsel %vm562, %v2999, 0
      %v3151 = vsel %vm562, %v3008, 0
      %v3154 = vsel %vm562, %v3017, 0
      %v3157 = vsel %vm562, %v3026, 0
      %v3160 = vsel %vm562, %v3035, 0
      %v3163 = vsel %vm562, %v3044, 0
      %v3166 = vsel %vm562, %v3053, 0
      %v3169 = vsel %vm562, %v3062, 0
      %v3172 = vsel %vm562, %v3071, 0
      %v3175 = vsel %vm562, %v3080, 0
      %v3178 = vsel %vm562, %v3089, 0
      %v3181 = vsel %vm562, %v3098, 0
      %v3184 = vsel %vm562, %v3107, 0
      %v3187 = vsel %vm562, %v3116, 0
      %v3190 = vsel %vm562, %v3125, 0
      %v3193 = vsel %vm562, %v3134, 0
      %v3196 = vsel %vm562, %v3143, 0
      %v3199 = vsel %vm617, %v2969, 0
      %3201 = vmatprep.subr.bf16.mxu0 0
      %3202 = vmatpush1.bf16.msra.mxu0 %v3199
      %3203 = vmatprep.subr.bf16.mxu0 0
      %3204 = vmatpush1.bf16.msra.mxu0 0
      %3205 = vmatprep.subr.bf16.mxu0 0
      %3206 = vmatpush1.bf16.msra.mxu0 0
      %3207 = vmatprep.subr.bf16.mxu0 0
      %3208 = vmatpush1.bf16.msra.mxu0 0
      %3209 = vmatprep.subr.bf16.mxu0 0
      %3210 = vmatpush1.bf16.msra.mxu0 0
      %3211 = vmatprep.subr.bf16.mxu0 0
      %3212 = vmatpush1.bf16.msra.mxu0 0
      %3213 = vmatprep.subr.bf16.mxu0 0
      %3214 = vmatpush1.bf16.msra.mxu0 0
      %3215 = vmatprep.subr.bf16.mxu0 0
      %3216 = vmatpush1.bf16.msra.mxu0 0
      %3217 = vmatprep.subr.bf16.mxu0 0
      %3218 = vmatpush1.bf16.msra.mxu0 0
      %3219 = vmatprep.subr.bf16.mxu0 0
      %3220 = vmatpush1.bf16.msra.mxu0 0
      %3221 = vmatprep.subr.bf16.mxu0 0
      %3222 = vmatpush1.bf16.msra.mxu0 0
      %3223 = vmatprep.subr.bf16.mxu0 0
      %3224 = vmatpush1.bf16.msra.mxu0 0
      %3225 = vmatprep.subr.bf16.mxu0 0
      %3226 = vmatpush1.bf16.msra.mxu0 0
      %3227 = vmatprep.subr.bf16.mxu0 0
      %3228 = vmatpush1.bf16.msra.mxu0 0
      %3229 = vmatprep.subr.bf16.mxu0 0
      %3230 = vmatpush1.bf16.msra.mxu0 0
      %3231 = vmatprep.subr.bf16.mxu0 0
      %3232 = vmatpush1.bf16.msra.mxu0 0
      %3233 = vmatprep.mubr.bf16.mxu0 0
      %3234 = vmatmul.mubr.bf16.gmra.mrb[0].mxu0 %v3145
      %v3235 = vpop.f32.mrb[0].mxu0
      %v3236 = vadd.f32 0.0, %v3235
      %v3237 = vpop.f32.mrb[0].mxu0
      %v3238 = vpop.f32.mrb[0].mxu0
      %v3239 = vadd.f32 0.0, %v3238
      %v3240 = vpop.f32.mrb[0].mxu0
      %3241 = vmatprep.mubr.bf16.mxu0 0
      %3242 = vmatmul.mubr.bf16.gmra.mrb[0].mxu0 %v3148
      %v3243 = vpop.f32.mrb[0].mxu0
      %v3244 = vadd.f32 0.0, %v3243
      %v3245 = vpop.f32.mrb[0].mxu0
      %v3246 = vpop.f32.mrb[0].mxu0
      %v3247 = vadd.f32 0.0, %v3246
      %v3248 = vpop.f32.mrb[0].mxu0
      %3249 = vmatprep.mubr.bf16.mxu0 0
      %3250 = vmatmul.mubr.bf16.gmra.mrb[0].mxu0 %v3151
      %v3251 = vpop.f32.mrb[0].mxu0
      %v3252 = vadd.f32 0.0, %v3251
      %v3253 = vpop.f32.mrb[0].mxu0
      %v3254 = vpop.f32.mrb[0].mxu0
      %v3255 = vadd.f32 0.0, %v3254
      %v3256 = vpop.f32.mrb[0].mxu0
      %3257 = vmatprep.mubr.bf16.mxu0 0
      %3258 = vmatmul.mubr.bf16.gmra.mrb[0].mxu0 %v3154
      %v3259 = vpop.f32.mrb[0].mxu0
      %v3260 = vadd.f32 0.0, %v3259
      %v3261 = vpop.f32.mrb[0].mxu0
      %v3262 = vpop.f32.mrb[0].mxu0
      %v3263 = vadd.f32 0.0, %v3262
      %v3264 = vpop.f32.mrb[0].mxu0
      %3265 = vmatprep.mubr.bf16.mxu0 0
      %3266 = vmatmul.mubr.bf16.gmra.mrb[0].mxu0 %v3157
      %v3267 = vpop.f32.mrb[0].mxu0
      %v3268 = vadd.f32 0.0, %v3267
      %v3269 = vpop.f32.mrb[0].mxu0
      %v3270 = vpop.f32.mrb[0].mxu0
      %v3271 = vadd.f32 0.0, %v3270
      %v3272 = vpop.f32.mrb[0].mxu0
      %3273 = vmatprep.mubr.bf16.mxu0 0
      %3274 = vmatmul.mubr.bf16.gmra.mrb[0].mxu0 %v3160
      %v3275 = vpop.f32.mrb[0].mxu0
      %v3276 = vadd.f32 0.0, %v3275
      %v3277 = vpop.f32.mrb[0].mxu0
      %v3278 = vpop.f32.mrb[0].mxu0
      %v3279 = vadd.f32 0.0, %v3278
      %v3280 = vpop.f32.mrb[0].mxu0
      %3281 = vmatprep.mubr.bf16.mxu0 0
      %3282 = vmatmul.mubr.bf16.gmra.mrb[0].mxu0 %v3163
      %v3283 = vpop.f32.mrb[0].mxu0
      %v3284 = vadd.f32 0.0, %v3283
      %v3285 = vpop.f32.mrb[0].mxu0
      %v3286 = vpop.f32.mrb[0].mxu0
      %v3287 = vadd.f32 0.0, %v3286
      %v3288 = vpop.f32.mrb[0].mxu0
      %3289 = vmatprep.mubr.bf16.mxu0 0
      %3290 = vmatmul.mubr.bf16.gmra.mrb[0].mxu0 %v3166
      %v3291 = vpop.f32.mrb[0].mxu0
      %v3292 = vadd.f32 0.0, %v3291
      %v3293 = vpop.f32.mrb[0].mxu0
      %v3294 = vpop.f32.mrb[0].mxu0
      %v3295 = vadd.f32 0.0, %v3294
      %v3296 = vpop.f32.mrb[0].mxu0
      %3297 = vmatprep.mubr.bf16.mxu0 0
      %3298 = vmatmul.mubr.bf16.gmra.mrb[0].mxu0 %v3169
      %v3299 = vpop.f32.mrb[0].mxu0
      %v3300 = vadd.f32 0.0, %v3299
      %v3301 = vpop.f32.mrb[0].mxu0
      %v3302 = vpop.f32.mrb[0].mxu0
      %v3303 = vadd.f32 0.0, %v3302
      %v3304 = vpop.f32.mrb[0].mxu0
      %3305 = vmatprep.mubr.bf16.mxu0 0
      %3306 = vmatmul.mubr.bf16.gmra.mrb[0].mxu0 %v3172
      %v3307 = vpop.f32.mrb[0].mxu0
      %v3308 = vadd.f32 0.0, %v3307
      %v3309 = vpop.f32.mrb[0].mxu0
      %v3310 = vpop.f32.mrb[0].mxu0
      %v3311 = vadd.f32 0.0, %v3310
      %v3312 = vpop.f32.mrb[0].mxu0
      %3313 = vmatprep.mubr.bf16.mxu0 0
      %3314 = vmatmul.mubr.bf16.gmra.mrb[0].mxu0 %v3175
      %v3315 = vpop.f32.mrb[0].mxu0
      %v3316 = vadd.f32 0.0, %v3315
      %v3317 = vpop.f32.mrb[0].mxu0
      %v3318 = vpop.f32.mrb[0].mxu0
      %v3319 = vadd.f32 0.0, %v3318
      %v3320 = vpop.f32.mrb[0].mxu0
      %3321 = vmatprep.mubr.bf16.mxu0 0
      %3322 = vmatmul.mubr.bf16.gmra.mrb[0].mxu0 %v3178
      %v3323 = vpop.f32.mrb[0].mxu0
      %v3324 = vadd.f32 0.0, %v3323
      %v3325 = vpop.f32.mrb[0].mxu0
      %v3326 = vpop.f32.mrb[0].mxu0
      %v3327 = vadd.f32 0.0, %v3326
      %v3328 = vpop.f32.mrb[0].mxu0
      %3329 = vmatprep.mubr.bf16.mxu0 0
      %3330 = vmatmul.mubr.bf16.gmra.mrb[0].mxu0 %v3181
      %v3331 = vpop.f32.mrb[0].mxu0
      %v3332 = vadd.f32 0.0, %v3331
      %v3333 = vpop.f32.mrb[0].mxu0
      %v3334 = vpop.f32.mrb[0].mxu0
      %v3335 = vadd.f32 0.0, %v3334
      %v3336 = vpop.f32.mrb[0].mxu0
      %3337 = vmatprep.mubr.bf16.mxu0 0
      %3338 = vmatmul.mubr.bf16.gmra.mrb[0].mxu0 %v3184
      %v3339 = vpop.f32.mrb[0].mxu0
      %v3340 = vadd.f32 0.0, %v3339
      %v3341 = vpop.f32.mrb[0].mxu0
      %v3342 = vpop.f32.mrb[0].mxu0
      %v3343 = vadd.f32 0.0, %v3342
      %v3344 = vpop.f32.mrb[0].mxu0
      %3345 = vmatprep.mubr.bf16.mxu0 0
      %3346 = vmatmul.mubr.bf16.gmra.mrb[0].mxu0 %v3187
      %v3347 = vpop.f32.mrb[0].mxu0
      %v3348 = vadd.f32 0.0, %v3347
      %v3349 = vpop.f32.mrb[0].mxu0
      %v3350 = vpop.f32.mrb[0].mxu0
      %v3351 = vadd.f32 0.0, %v3350
      %v3352 = vpop.f32.mrb[0].mxu0
      %3353 = vmatprep.mubr.bf16.mxu0 0
      %3354 = vmatmul.mubr.bf16.gmra.mrb[0].mxu0 %v3190
      %v3355 = vpop.f32.mrb[0].mxu0
      %v3356 = vadd.f32 0.0, %v3355
      %v3357 = vpop.f32.mrb[0].mxu0
      %v3358 = vpop.f32.mrb[0].mxu0
      %v3359 = vadd.f32 0.0, %v3358
      %v3360 = vpop.f32.mrb[0].mxu0
      %3361 = vmatprep.mubr.bf16.mxu0 0
      %3362 = vmatmul.mubr.bf16.gmra.mrb[0].mxu0 %v3193
      %v3363 = vpop.f32.mrb[0].mxu0
      %v3364 = vadd.f32 0.0, %v3363
      %v3365 = vpop.f32.mrb[0].mxu0
      %v3366 = vpop.f32.mrb[0].mxu0
      %v3367 = vadd.f32 0.0, %v3366
      %v3368 = vpop.f32.mrb[0].mxu0
      %3369 = vmatprep.mubr.bf16.mxu0 0
      %3370 = vmatmul.mubr.bf16.gmra.mrb[0].mxu0 %v3196
      %v3371 = vpop.f32.mrb[0].mxu0
      %v3372 = vadd.f32 0.0, %v3371
      %v3373 = vpop.f32.mrb[0].mxu0
      %v3374 = vpop.f32.mrb[0].mxu0
      %v3375 = vadd.f32 0.0, %v3374
      %v3376 = vpop.f32.mrb[0].mxu0
      %3377 = vdwg.mxu0
      %v3378 = vadd.f32 %v2931, %v3236
      %v3379 = vadd.f32 %v2932, %v3239
      %v3380 = vadd.f32 %v2933, %v3244
      %v3381 = vadd.f32 %v2934, %v3247
      %v3382 = vadd.f32 %v2935, %v3252
      %v3383 = vadd.f32 %v2936, %v3255
      %v3384 = vadd.f32 %v2937, %v3260
      %v3385 = vadd.f32 %v2938, %v3263
      %v3386 = vadd.f32 %v2939, %v3268
      %v3387 = vadd.f32 %v2940, %v3271
      %v3388 = vadd.f32 %v2941, %v3276
      %v3389 = vadd.f32 %v2942, %v3279
      %v3390 = vadd.f32 %v2943, %v3284
      %v3391 = vadd.f32 %v2944, %v3287
      %v3392 = vadd.f32 %v2945, %v3292
      %v3393 = vadd.f32 %v2946, %v3295
      %v3394 = vadd.f32 %v2947, %v3300
      %v3395 = vadd.f32 %v2948, %v3303
      %v3396 = vadd.f32 %v2949, %v3308
      %v3397 = vadd.f32 %v2950, %v3311
      %v3398 = vadd.f32 %v2951, %v3316
      %v3399 = vadd.f32 %v2952, %v3319
      %v3400 = vadd.f32 %v2953, %v3324
      %v3401 = vadd.f32 %v2954, %v3327
      %v3402 = vadd.f32 %v2955, %v3332
      %v3403 = vadd.f32 %v2956, %v3335
      %v3404 = vadd.f32 %v2957, %v3340
      %v3405 = vadd.f32 %v2958, %v3343
      %v3406 = vadd.f32 %v2959, %v3348
      %v3407 = vadd.f32 %v2960, %v3351
      %v3408 = vadd.f32 %v2961, %v3356
      %v3409 = vadd.f32 %v2962, %v3359
      %v3410 = vadd.f32 %v2963, %v3364
      %v3411 = vadd.f32 %v2964, %v3367
      %v3412 = vadd.f32 %v2965, %v3372
      %v3413 = vadd.f32 %v2966, %v3375
      %v3414 = vld [vmem:[%s254 + $0x10] sm:$0x8]
      %s3415 = scalar_lea.vmem %s1, 16
      %v3416 = vld [vmem:[%s3415] sm:$0x3]
      %v3418 = vunpack.c.l.b16 %v3414
      %v3419 = vpack.c.b16 %v2605, %v3418
      %vm3420 = vcmask 1044480
      %v3421 = vrot.slane %v3419, 3
      %v3422 = vrot.slane %v2642, 3
      %v3423 = vsel %vm3420, %v3421, %v3422
      %v3424 = vrot.slane %v2643, 3
      %v3425 = vsel %vm3420, %v3422, %v3424
      %v3426 = vrot.slane %v2644, 3
      %v3427 = vsel %vm3420, %v3424, %v3426
      %v3428 = vrot.slane %v2645, 3
      %v3429 = vsel %vm3420, %v3426, %v3428
      %v3430 = vrot.slane %v2646, 3
      %v3431 = vsel %vm3420, %v3428, %v3430
      %v3432 = vrot.slane %v2647, 3
      %v3433 = vsel %vm3420, %v3430, %v3432
      %v3434 = vrot.slane %v2648, 3
      %v3435 = vsel %vm3420, %v3432, %v3434
      %v3436 = vrot.slane %v2649, 3
      %v3437 = vsel %vm3420, %v3434, %v3436
      %v3438 = vrot.slane %v2650, 3
      %v3439 = vsel %vm3420, %v3436, %v3438
      %v3440 = vrot.slane %v2651, 3
      %v3441 = vsel %vm3420, %v3438, %v3440
      %v3442 = vrot.slane %v2652, 3
      %v3443 = vsel %vm3420, %v3440, %v3442
      %v3444 = vrot.slane %v2653, 3
      %v3445 = vsel %vm3420, %v3442, %v3444
      %v3446 = vrot.slane %v2654, 3
      %v3447 = vsel %vm3420, %v3444, %v3446
      %v3448 = vrot.slane %v2655, 3
      %v3449 = vsel %vm3420, %v3446, %v3448
      %v3450 = vrot.slane %v2656, 3
      %v3451 = vsel %vm3420, %v3448, %v3450
      %v3452 = vrot.slane %v2657, 3
      %v3453 = vsel %vm3420, %v3450, %v3452
      %v3454 = vrot.slane %v2658, 3
      %v3455 = vsel %vm3420, %v3452, %v3454
      %v3456 = vrot.slane %v2972, 3
      %v3457 = vsel %vm3420, %v3454, %v3456
      %v3459 = vsel %vm562, %v3423, 0
      %v3462 = vsel %vm562, %v3425, 0
      %v3465 = vsel %vm562, %v3427, 0
      %v3468 = vsel %vm562, %v3429, 0
      %v3471 = vsel %vm562, %v3431, 0
      %v3474 = vsel %vm562, %v3433, 0
      %v3477 = vsel %vm562, %v3435, 0
      %v3480 = vsel %vm562, %v3437, 0
      %v3483 = vsel %vm562, %v3439, 0
      %v3486 = vsel %vm562, %v3441, 0
      %v3489 = vsel %vm562, %v3443, 0
      %v3492 = vsel %vm562, %v3445, 0
      %v3495 = vsel %vm562, %v3447, 0
      %v3498 = vsel %vm562, %v3449, 0
      %v3501 = vsel %vm562, %v3451, 0
      %v3504 = vsel %vm562, %v3453, 0
      %v3507 = vsel %vm562, %v3455, 0
      %v3510 = vsel %vm562, %v3457, 0
      %v3513 = vsel %vm617, %v3416, 0
      %3515 = vmatprep.subr.bf16.mxu0 0
      %3516 = vmatpush1.bf16.msra.mxu0 %v3513
      %3517 = vmatprep.subr.bf16.mxu0 0
      %3518 = vmatpush1.bf16.msra.mxu0 0
      %3519 = vmatprep.subr.bf16.mxu0 0
      %3520 = vmatpush1.bf16.msra.mxu0 0
      %3521 = vmatprep.subr.bf16.mxu0 0
      %3522 = vmatpush1.bf16.msra.mxu0 0
      %3523 = vmatprep.subr.bf16.mxu0 0
      %3524 = vmatpush1.bf16.msra.mxu0 0
      %3525 = vmatprep.subr.bf16.mxu0 0
      %3526 = vmatpush1.bf16.msra.mxu0 0
      %3527 = vmatprep.subr.bf16.mxu0 0
      %3528 = vmatpush1.bf16.msra.mxu0 0
      %3529 = vmatprep.subr.bf16.mxu0 0
      %3530 = vmatpush1.bf16.msra.mxu0 0
      %3531 = vmatprep.subr.bf16.mxu0 0
      %3532 = vmatpush1.bf16.msra.mxu0 0
      %3533 = vmatprep.subr.bf16.mxu0 0
      %3534 = vmatpush1.bf16.msra.mxu0 0
      %3535 = vmatprep.subr.bf16.mxu0 0
      %3536 = vmatpush1.bf16.msra.mxu0 0
      %3537 = vmatprep.subr.bf16.mxu0 0
      %3538 = vmatpush1.bf16.msra.mxu0 0
      %3539 = vmatprep.subr.bf16.mxu0 0
      %3540 = vmatpush1.bf16.msra.mxu0 0
      %3541 = vmatprep.subr.bf16.mxu0 0
      %3542 = vmatpush1.bf16.msra.mxu0 0
      %3543 = vmatprep.subr.bf16.mxu0 0
      %3544 = vmatpush1.bf16.msra.mxu0 0
      %3545 = vmatprep.subr.bf16.mxu0 0
      %3546 = vmatpush1.bf16.msra.mxu0 0
      %3547 = vmatprep.mubr.bf16.mxu0 0
      %3548 = vmatmul.mubr.bf16.gmra.mrb[0].mxu0 %v3459
      %v3549 = vpop.f32.mrb[0].mxu0
      %v3550 = vadd.f32 0.0, %v3549
      %v3551 = vpop.f32.mrb[0].mxu0
      %v3552 = vpop.f32.mrb[0].mxu0
      %v3553 = vadd.f32 0.0, %v3552
      %v3554 = vpop.f32.mrb[0].mxu0
      %3555 = vmatprep.mubr.bf16.mxu0 0
      %3556 = vmatmul.mubr.bf16.gmra.mrb[0].mxu0 %v3462
      %v3557 = vpop.f32.mrb[0].mxu0
      %v3558 = vadd.f32 0.0, %v3557
      %v3559 = vpop.f32.mrb[0].mxu0
      %v3560 = vpop.f32.mrb[0].mxu0
      %v3561 = vadd.f32 0.0, %v3560
      %v3562 = vpop.f32.mrb[0].mxu0
      %3563 = vmatprep.mubr.bf16.mxu0 0
      %3564 = vmatmul.mubr.bf16.gmra.mrb[0].mxu0 %v3465
      %v3565 = vpop.f32.mrb[0].mxu0
      %v3566 = vadd.f32 0.0, %v3565
      %v3567 = vpop.f32.mrb[0].mxu0
      %v3568 = vpop.f32.mrb[0].mxu0
      %v3569 = vadd.f32 0.0, %v3568
      %v3570 = vpop.f32.mrb[0].mxu0
      %3571 = vmatprep.mubr.bf16.mxu0 0
      %3572 = vmatmul.mubr.bf16.gmra.mrb[0].mxu0 %v3468
      %v3573 = vpop.f32.mrb[0].mxu0
      %v3574 = vadd.f32 0.0, %v3573
      %v3575 = vpop.f32.mrb[0].mxu0
      %v3576 = vpop.f32.mrb[0].mxu0
      %v3577 = vadd.f32 0.0, %v3576
      %v3578 = vpop.f32.mrb[0].mxu0
      %3579 = vmatprep.mubr.bf16.mxu0 0
      %3580 = vmatmul.mubr.bf16.gmra.mrb[0].mxu0 %v3471
      %v3581 = vpop.f32.mrb[0].mxu0
      %v3582 = vadd.f32 0.0, %v3581
      %v3583 = vpop.f32.mrb[0].mxu0
      %v3584 = vpop.f32.mrb[0].mxu0
      %v3585 = vadd.f32 0.0, %v3584
      %v3586 = vpop.f32.mrb[0].mxu0
      %3587 = vmatprep.mubr.bf16.mxu0 0
      %3588 = vmatmul.mubr.bf16.gmra.mrb[0].mxu0 %v3474
      %v3589 = vpop.f32.mrb[0].mxu0
      %v3590 = vadd.f32 0.0, %v3589
      %v3591 = vpop.f32.mrb[0].mxu0
      %v3592 = vpop.f32.mrb[0].mxu0
      %v3593 = vadd.f32 0.0, %v3592
      %v3594 = vpop.f32.mrb[0].mxu0
      %3595 = vmatprep.mubr.bf16.mxu0 0
      %3596 = vmatmul.mubr.bf16.gmra.mrb[0].mxu0 %v3477
      %v3597 = vpop.f32.mrb[0].mxu0
      %v3598 = vadd.f32 0.0, %v3597
      %v3599 = vpop.f32.mrb[0].mxu0
      %v3600 = vpop.f32.mrb[0].mxu0
      %v3601 = vadd.f32 0.0, %v3600
      %v3602 = vpop.f32.mrb[0].mxu0
      %3603 = vmatprep.mubr.bf16.mxu0 0
      %3604 = vmatmul.mubr.bf16.gmra.mrb[0].mxu0 %v3480
      %v3605 = vpop.f32.mrb[0].mxu0
      %v3606 = vadd.f32 0.0, %v3605
      %v3607 = vpop.f32.mrb[0].mxu0
      %v3608 = vpop.f32.mrb[0].mxu0
      %v3609 = vadd.f32 0.0, %v3608
      %v3610 = vpop.f32.mrb[0].mxu0
      %3611 = vmatprep.mubr.bf16.mxu0 0
      %3612 = vmatmul.mubr.bf16.gmra.mrb[0].mxu0 %v3483
      %v3613 = vpop.f32.mrb[0].mxu0
      %v3614 = vadd.f32 0.0, %v3613
      %v3615 = vpop.f32.mrb[0].mxu0
      %v3616 = vpop.f32.mrb[0].mxu0
      %v3617 = vadd.f32 0.0, %v3616
      %v3618 = vpop.f32.mrb[0].mxu0
      %3619 = vmatprep.mubr.bf16.mxu0 0
      %3620 = vmatmul.mubr.bf16.gmra.mrb[0].mxu0 %v3486
      %v3621 = vpop.f32.mrb[0].mxu0
      %v3622 = vadd.f32 0.0, %v3621
      %v3623 = vpop.f32.mrb[0].mxu0
      %v3624 = vpop.f32.mrb[0].mxu0
      %v3625 = vadd.f32 0.0, %v3624
      %v3626 = vpop.f32.mrb[0].mxu0
      %3627 = vmatprep.mubr.bf16.mxu0 0
      %3628 = vmatmul.mubr.bf16.gmra.mrb[0].mxu0 %v3489
      %v3629 = vpop.f32.mrb[0].mxu0
      %v3630 = vadd.f32 0.0, %v3629
      %v3631 = vpop.f32.mrb[0].mxu0
      %v3632 = vpop.f32.mrb[0].mxu0
      %v3633 = vadd.f32 0.0, %v3632
      %v3634 = vpop.f32.mrb[0].mxu0
      %3635 = vmatprep.mubr.bf16.mxu0 0
      %3636 = vmatmul.mubr.bf16.gmra.mrb[0].mxu0 %v3492
      %v3637 = vpop.f32.mrb[0].mxu0
      %v3638 = vadd.f32 0.0, %v3637
      %v3639 = vpop.f32.mrb[0].mxu0
      %v3640 = vpop.f32.mrb[0].mxu0
      %v3641 = vadd.f32 0.0, %v3640
      %v3642 = vpop.f32.mrb[0].mxu0
      %3643 = vmatprep.mubr.bf16.mxu0 0
      %3644 = vmatmul.mubr.bf16.gmra.mrb[0].mxu0 %v3495
      %v3645 = vpop.f32.mrb[0].mxu0
      %v3646 = vadd.f32 0.0, %v3645
      %v3647 = vpop.f32.mrb[0].mxu0
      %v3648 = vpop.f32.mrb[0].mxu0
      %v3649 = vadd.f32 0.0, %v3648
      %v3650 = vpop.f32.mrb[0].mxu0
      %3651 = vmatprep.mubr.bf16.mxu0 0
      %3652 = vmatmul.mubr.bf16.gmra.mrb[0].mxu0 %v3498
      %v3653 = vpop.f32.mrb[0].mxu0
      %v3654 = vadd.f32 0.0, %v3653
      %v3655 = vpop.f32.mrb[0].mxu0
      %v3656 = vpop.f32.mrb[0].mxu0
      %v3657 = vadd.f32 0.0, %v3656
      %v3658 = vpop.f32.mrb[0].mxu0
      %3659 = vmatprep.mubr.bf16.mxu0 0
      %3660 = vmatmul.mubr.bf16.gmra.mrb[0].mxu0 %v3501
      %v3661 = vpop.f32.mrb[0].mxu0
      %v3662 = vadd.f32 0.0, %v3661
      %v3663 = vpop.f32.mrb[0].mxu0
      %v3664 = vpop.f32.mrb[0].mxu0
      %v3665 = vadd.f32 0.0, %v3664
      %v3666 = vpop.f32.mrb[0].mxu0
      %3667 = vmatprep.mubr.bf16.mxu0 0
      %3668 = vmatmul.mubr.bf16.gmra.mrb[0].mxu0 %v3504
      %v3669 = vpop.f32.mrb[0].mxu0
      %v3670 = vadd.f32 0.0, %v3669
      %v3671 = vpop.f32.mrb[0].mxu0
      %v3672 = vpop.f32.mrb[0].mxu0
      %v3673 = vadd.f32 0.0, %v3672
      %v3674 = vpop.f32.mrb[0].mxu0
      %3675 = vmatprep.mubr.bf16.mxu0 0
      %3676 = vmatmul.mubr.bf16.gmra.mrb[0].mxu0 %v3507
      %v3677 = vpop.f32.mrb[0].mxu0
      %v3678 = vadd.f32 0.0, %v3677
      %v3679 = vpop.f32.mrb[0].mxu0
      %v3680 = vpop.f32.mrb[0].mxu0
      %v3681 = vadd.f32 0.0, %v3680
      %v3682 = vpop.f32.mrb[0].mxu0
      %3683 = vmatprep.mubr.bf16.mxu0 0
      %3684 = vmatmul.mubr.bf16.gmra.mrb[0].mxu0 %v3510
      %v3685 = vpop.f32.mrb[0].mxu0
      %v3686 = vadd.f32 0.0, %v3685
      %v3687 = vpop.f32.mrb[0].mxu0
      %v3688 = vpop.f32.mrb[0].mxu0
      %v3689 = vadd.f32 0.0, %v3688
      %v3690 = vpop.f32.mrb[0].mxu0
      %3691 = vdwg.mxu0
      %v3692 = vadd.f32 %v3378, %v3550
      %v3693 = vadd.f32 %v3379, %v3553
      %v3694 = vadd.f32 %v3380, %v3558
      %v3695 = vadd.f32 %v3381, %v3561
      %v3696 = vadd.f32 %v3382, %v3566
      %v3697 = vadd.f32 %v3383, %v3569
      %v3698 = vadd.f32 %v3384, %v3574
      %v3699 = vadd.f32 %v3385, %v3577
      %v3700 = vadd.f32 %v3386, %v3582
      %v3701 = vadd.f32 %v3387, %v3585
      %v3702 = vadd.f32 %v3388, %v3590
      %v3703 = vadd.f32 %v3389, %v3593
      %v3704 = vadd.f32 %v3390, %v3598
      %v3705 = vadd.f32 %v3391, %v3601
      %v3706 = vadd.f32 %v3392, %v3606
      %v3707 = vadd.f32 %v3393, %v3609
      %v3708 = vadd.f32 %v3394, %v3614
      %v3709 = vadd.f32 %v3395, %v3617
      %v3710 = vadd.f32 %v3396, %v3622
      %v3711 = vadd.f32 %v3397, %v3625
      %v3712 = vadd.f32 %v3398, %v3630
      %v3713 = vadd.f32 %v3399, %v3633
      %v3714 = vadd.f32 %v3400, %v3638
      %v3715 = vadd.f32 %v3401, %v3641
      %v3716 = vadd.f32 %v3402, %v3646
      %v3717 = vadd.f32 %v3403, %v3649
      %v3718 = vadd.f32 %v3404, %v3654
      %v3719 = vadd.f32 %v3405, %v3657
      %v3720 = vadd.f32 %v3406, %v3662
      %v3721 = vadd.f32 %v3407, %v3665
      %v3722 = vadd.f32 %v3408, %v3670
      %v3723 = vadd.f32 %v3409, %v3673
      %v3724 = vadd.f32 %v3410, %v3678
      %v3725 = vadd.f32 %v3411, %v3681
      %v3726 = vadd.f32 %v3412, %v3686
      %v3727 = vadd.f32 %v3413, %v3689
      %3728 = vst [vmem:[%s262] sm:$0xff] %v3692
      %3729 = vst [vmem:[%s262 + $0x8] sm:$0xff] %v3693
      %3730 = vst [vmem:[%s262 + $0x10] sm:$0xff] %v3694
      %3731 = vst [vmem:[%s262 + $0x18] sm:$0xff] %v3695
      %3732 = vst [vmem:[%s262 + $0x20] sm:$0xff] %v3696
      %3733 = vst [vmem:[%s262 + $0x28] sm:$0xff] %v3697
      %3734 = vst [vmem:[%s262 + $0x30] sm:$0xff] %v3698
      %3735 = vst [vmem:[%s262 + $0x38] sm:$0xff] %v3699
      %3736 = vst [vmem:[%s262 + $0x40] sm:$0xff] %v3700
      %3737 = vst [vmem:[%s262 + $0x48] sm:$0xff] %v3701
      %3738 = vst [vmem:[%s262 + $0x50] sm:$0xff] %v3702
      %3739 = vst [vmem:[%s262 + $0x58] sm:$0xff] %v3703
      %3740 = vst [vmem:[%s262 + $0x60] sm:$0xff] %v3704
      %3741 = vst [vmem:[%s262 + $0x68] sm:$0xff] %v3705
      %3742 = vst [vmem:[%s262 + $0x70] sm:$0xff] %v3706
      %3743 = vst [vmem:[%s262 + $0x78] sm:$0xff] %v3707
      %3744 = vst [vmem:[%s262 + $0x80] sm:$0xff] %v3708
      %3745 = vst [vmem:[%s262 + $0x88] sm:$0xff] %v3709
      %3746 = vst [vmem:[%s262 + $0x90] sm:$0xff] %v3710
      %3747 = vst [vmem:[%s262 + $0x98] sm:$0xff] %v3711
      %3748 = vst [vmem:[%s262 + $0xa0] sm:$0xff] %v3712
      %3749 = vst [vmem:[%s262 + $0xa8] sm:$0xff] %v3713
      %3750 = vst [vmem:[%s262 + $0xb0] sm:$0xff] %v3714
      %3751 = vst [vmem:[%s262 + $0xb8] sm:$0xff] %v3715
      %3752 = vst [vmem:[%s262 + $0xc0] sm:$0xff] %v3716
      %3753 = vst [vmem:[%s262 + $0xc8] sm:$0xff] %v3717
      %3754 = vst [vmem:[%s262 + $0xd0] sm:$0xff] %v3718
      %3755 = vst [vmem:[%s262 + $0xd8] sm:$0xff] %v3719
      %3756 = vst [vmem:[%s262 + $0xe0] sm:$0xff] %v3720
      %3757 = vst [vmem:[%s262 + $0xe8] sm:$0xff] %v3721
      %3758 = vst [vmem:[%s262 + $0xf0] sm:$0xff] %v3722
      %3759 = vst [vmem:[%s262 + $0xf8] sm:$0xff] %v3723
      %3760 = vst [vmem:[%s262 + $0x100] sm:$0xff] %v3724
      %3761 = vst [vmem:[%s262 + $0x108] sm:$0xff] %v3725
      %3762 = vst [vmem:[%s262 + $0x110] sm:$0xff] %v3726
      %3763 = vst [vmem:[%s262 + $0x118] sm:$0xff] %v3727
      %v3764 = vld [vmem:[%s2] sm:$0xff]
      %v3765 = vld [vmem:[%s2 + $0x8] sm:$0xff]
      %v3766 = vld [vmem:[%s2 + $0x10] sm:$0xff]
      %v3767 = vld [vmem:[%s2 + $0x18] sm:$0xff]
      %v3768 = vld [vmem:[%s2 + $0x20] sm:$0xff]
      %v3769 = vld [vmem:[%s2 + $0x28] sm:$0xff]
      %v3770 = vld [vmem:[%s2 + $0x30] sm:$0xff]
      %v3771 = vld [vmem:[%s2 + $0x38] sm:$0xff]
      %v3772 = vld [vmem:[%s2 + $0x40] sm:$0xff]
      %v3773 = vld [vmem:[%s2 + $0x48] sm:$0xff]
      %v3774 = vld [vmem:[%s2 + $0x50] sm:$0xff]
      %v3775 = vld [vmem:[%s2 + $0x58] sm:$0xff]
      %v3776 = vld [vmem:[%s2 + $0x60] sm:$0xff]
      %v3777 = vld [vmem:[%s2 + $0x68] sm:$0xff]
      %v3778 = vld [vmem:[%s2 + $0x70] sm:$0xff]
      %v3779 = vld [vmem:[%s2 + $0x78] sm:$0xff]
      %v3780 = vld [vmem:[%s2 + $0x80] sm:$0xff]
      %v3781 = vld [vmem:[%s2 + $0x88] sm:$0xff]
      %v3782 = vld [vmem:[%s2 + $0x90] sm:$0xff]
      %v3783 = vld [vmem:[%s2 + $0x98] sm:$0xff]
      %v3784 = vld [vmem:[%s2 + $0xa0] sm:$0xff]
      %v3785 = vld [vmem:[%s2 + $0xa8] sm:$0xff]
      %v3786 = vld [vmem:[%s2 + $0xb0] sm:$0xff]
      %v3787 = vld [vmem:[%s2 + $0xb8] sm:$0xff]
      %v3788 = vld [vmem:[%s2 + $0xc0] sm:$0xff]
      %v3789 = vld [vmem:[%s2 + $0xc8] sm:$0xff]
      %v3790 = vld [vmem:[%s2 + $0xd0] sm:$0xff]
      %v3791 = vld [vmem:[%s2 + $0xd8] sm:$0xff]
      %v3792 = vld [vmem:[%s2 + $0xe0] sm:$0xff]
      %v3793 = vld [vmem:[%s2 + $0xe8] sm:$0xff]
      %v3794 = vld [vmem:[%s2 + $0xf0] sm:$0xff]
      %v3795 = vld [vmem:[%s2 + $0xf8] sm:$0xff]
      %v3796 = vld [vmem:[%s2 + $0x100] sm:$0xff]
      %v3797 = vld [vmem:[%s2 + $0x108] sm:$0xff]
      %v3798 = vld [vmem:[%s2 + $0x110] sm:$0xff]
      %v3799 = vld [vmem:[%s2 + $0x118] sm:$0xff]
      %3801 = vset.pattern.permute.xlu0 0
      %3802 = vperm.xlu0 %3801, %v3764
      %v3803 = vpop.permute.xlu0 %3802
      %3806 = vset.pattern.permute.xlu0 0
      %3807 = vperm.xlu0 %3806, %v3765
      %v3808 = vpop.permute.xlu0 %3807
      %3811 = vset.pattern.permute.xlu0 0
      %3812 = vperm.xlu0 %3811, %v3766
      %v3813 = vpop.permute.xlu0 %3812
      %3816 = vset.pattern.permute.xlu0 0
      %3817 = vperm.xlu0 %3816, %v3767
      %v3818 = vpop.permute.xlu0 %3817
      %3821 = vset.pattern.permute.xlu0 0
      %3822 = vperm.xlu0 %3821, %v3768
      %v3823 = vpop.permute.xlu0 %3822
      %3826 = vset.pattern.permute.xlu0 0
      %3827 = vperm.xlu0 %3826, %v3769
      %v3828 = vpop.permute.xlu0 %3827
      %3831 = vset.pattern.permute.xlu0 0
      %3832 = vperm.xlu0 %3831, %v3770
      %v3833 = vpop.permute.xlu0 %3832
      %3836 = vset.pattern.permute.xlu0 0
      %3837 = vperm.xlu0 %3836, %v3771
      %v3838 = vpop.permute.xlu0 %3837
      %3841 = vset.pattern.permute.xlu0 0
      %3842 = vperm.xlu0 %3841, %v3772
      %v3843 = vpop.permute.xlu0 %3842
      %3846 = vset.pattern.permute.xlu0 0
      %3847 = vperm.xlu0 %3846, %v3773
      %v3848 = vpop.permute.xlu0 %3847
      %3851 = vset.pattern.permute.xlu0 0
      %3852 = vperm.xlu0 %3851, %v3774
      %v3853 = vpop.permute.xlu0 %3852
      %3856 = vset.pattern.permute.xlu0 0
      %3857 = vperm.xlu0 %3856, %v3775
      %v3858 = vpop.permute.xlu0 %3857
      %3861 = vset.pattern.permute.xlu0 0
      %3862 = vperm.xlu0 %3861, %v3776
      %v3863 = vpop.permute.xlu0 %3862
      %3866 = vset.pattern.permute.xlu0 0
      %3867 = vperm.xlu0 %3866, %v3777
      %v3868 = vpop.permute.xlu0 %3867
      %3871 = vset.pattern.permute.xlu0 0
      %3872 = vperm.xlu0 %3871, %v3778
      %v3873 = vpop.permute.xlu0 %3872
      %3876 = vset.pattern.permute.xlu0 0
      %3877 = vperm.xlu0 %3876, %v3779
      %v3878 = vpop.permute.xlu0 %3877
      %3881 = vset.pattern.permute.xlu0 0
      %3882 = vperm.xlu0 %3881, %v3780
      %v3883 = vpop.permute.xlu0 %3882
      %3886 = vset.pattern.permute.xlu0 0
      %3887 = vperm.xlu0 %3886, %v3781
      %v3888 = vpop.permute.xlu0 %3887
      %3891 = vset.pattern.permute.xlu0 0
      %3892 = vperm.xlu0 %3891, %v3782
      %v3893 = vpop.permute.xlu0 %3892
      %3896 = vset.pattern.permute.xlu0 0
      %3897 = vperm.xlu0 %3896, %v3783
      %v3898 = vpop.permute.xlu0 %3897
      %3901 = vset.pattern.permute.xlu0 0
      %3902 = vperm.xlu0 %3901, %v3784
      %v3903 = vpop.permute.xlu0 %3902
      %3906 = vset.pattern.permute.xlu0 0
      %3907 = vperm.xlu0 %3906, %v3785
      %v3908 = vpop.permute.xlu0 %3907
      %3911 = vset.pattern.permute.xlu0 0
      %3912 = vperm.xlu0 %3911, %v3786
      %v3913 = vpop.permute.xlu0 %3912
      %3916 = vset.pattern.permute.xlu0 0
      %3917 = vperm.xlu0 %3916, %v3787
      %v3918 = vpop.permute.xlu0 %3917
      %3921 = vset.pattern.permute.xlu0 0
      %3922 = vperm.xlu0 %3921, %v3788
      %v3923 = vpop.permute.xlu0 %3922
      %3926 = vset.pattern.permute.xlu0 0
      %3927 = vperm.xlu0 %3926, %v3789
      %v3928 = vpop.permute.xlu0 %3927
      %3931 = vset.pattern.permute.xlu0 0
      %3932 = vperm.xlu0 %3931, %v3790
      %v3933 = vpop.permute.xlu0 %3932
      %3936 = vset.pattern.permute.xlu0 0
      %3937 = vperm.xlu0 %3936, %v3791
      %v3938 = vpop.permute.xlu0 %3937
      %3941 = vset.pattern.permute.xlu0 0
      %3942 = vperm.xlu0 %3941, %v3792
      %v3943 = vpop.permute.xlu0 %3942
      %3946 = vset.pattern.permute.xlu0 0
      %3947 = vperm.xlu0 %3946, %v3793
      %v3948 = vpop.permute.xlu0 %3947
      %3951 = vset.pattern.permute.xlu0 0
      %3952 = vperm.xlu0 %3951, %v3794
      %v3953 = vpop.permute.xlu0 %3952
      %3956 = vset.pattern.permute.xlu0 0
      %3957 = vperm.xlu0 %3956, %v3795
      %v3958 = vpop.permute.xlu0 %3957
      %3961 = vset.pattern.permute.xlu0 0
      %3962 = vperm.xlu0 %3961, %v3796
      %v3963 = vpop.permute.xlu0 %3962
      %3966 = vset.pattern.permute.xlu0 0
      %3967 = vperm.xlu0 %3966, %v3797
      %v3968 = vpop.permute.xlu0 %3967
      %3971 = vset.pattern.permute.xlu0 0
      %3972 = vperm.xlu0 %3971, %v3798
      %v3973 = vpop.permute.xlu0 %3972
      %3976 = vset.pattern.permute.xlu0 0
      %3977 = vperm.xlu0 %3976, %v3799
      %v3978 = vpop.permute.xlu0 %3977
      %v3980 = vmul.f32 %v3692, %v3803
      %v3981 = vmul.f32 %v3693, %v3808
      %v3982 = vmul.f32 %v3694, %v3813
      %v3983 = vmul.f32 %v3695, %v3818
      %v3984 = vmul.f32 %v3696, %v3823
      %v3985 = vmul.f32 %v3697, %v3828
      %v3986 = vmul.f32 %v3698, %v3833
      %v3987 = vmul.f32 %v3699, %v3838
      %v3988 = vmul.f32 %v3700, %v3843
      %v3989 = vmul.f32 %v3701, %v3848
      %v3990 = vmul.f32 %v3702, %v3853
      %v3991 = vmul.f32 %v3703, %v3858
      %v3992 = vmul.f32 %v3704, %v3863
      %v3993 = vmul.f32 %v3705, %v3868
      %v3994 = vmul.f32 %v3706, %v3873
      %v3995 = vmul.f32 %v3707, %v3878
      %v3996 = vmul.f32 %v3708, %v3883
      %v3997 = vmul.f32 %v3709, %v3888
      %v3998 = vmul.f32 %v3710, %v3893
      %v3999 = vmul.f32 %v3711, %v3898
      %v4000 = vmul.f32 %v3712, %v3903
      %v4001 = vmul.f32 %v3713, %v3908
      %v4002 = vmul.f32 %v3714, %v3913
      %v4003 = vmul.f32 %v3715, %v3918
      %v4004 = vmul.f32 %v3716, %v3923
      %v4005 = vmul.f32 %v3717, %v3928
      %v4006 = vmul.f32 %v3718, %v3933
      %v4007 = vmul.f32 %v3719, %v3938
      %v4008 = vmul.f32 %v3720, %v3943
      %v4009 = vmul.f32 %v3721, %v3948
      %v4010 = vmul.f32 %v3722, %v3953
      %v4011 = vmul.f32 %v3723, %v3958
      %v4012 = vmul.f32 %v3724, %v3963
      %v4013 = vmul.f32 %v3725, %v3968
      %v4014 = vmul.f32 %v3726, %v3973
      %v4015 = vmul.f32 %v3727, %v3978
      %v4016 = vld [vmem:[%s268] sm:$0xff]
      %v4017 = vadd.f32 %v3980, %v3981
      %v4018 = vadd.f32 %v4017, %v3982
      %v4019 = vadd.f32 %v4018, %v3983
      %v4020 = vadd.f32 %v4019, %v3984
      %v4021 = vadd.f32 %v4020, %v3985
      %v4022 = vadd.f32 %v4021, %v3986
      %v4023 = vadd.f32 %v4022, %v3987
      %v4024 = vadd.f32 %v4023, %v3988
      %v4025 = vadd.f32 %v4024, %v3989
      %v4026 = vadd.f32 %v4025, %v3990
      %v4027 = vadd.f32 %v4026, %v3991
      %v4028 = vadd.f32 %v4027, %v3992
      %v4029 = vadd.f32 %v4028, %v3993
      %v4030 = vadd.f32 %v4029, %v3994
      %v4031 = vadd.f32 %v4030, %v3995
      %v4032 = vadd.f32 %v4031, %v3996
      %v4033 = vadd.f32 %v4032, %v3997
      %v4034 = vadd.f32 %v4033, %v3998
      %v4035 = vadd.f32 %v4034, %v3999
      %v4036 = vadd.f32 %v4035, %v4000
      %v4037 = vadd.f32 %v4036, %v4001
      %v4038 = vadd.f32 %v4037, %v4002
      %v4039 = vadd.f32 %v4038, %v4003
      %v4040 = vadd.f32 %v4039, %v4004
      %v4041 = vadd.f32 %v4040, %v4005
      %v4042 = vadd.f32 %v4041, %v4006
      %v4043 = vadd.f32 %v4042, %v4007
      %v4044 = vadd.f32 %v4043, %v4008
      %v4045 = vadd.f32 %v4044, %v4009
      %v4046 = vadd.f32 %v4045, %v4010
      %v4047 = vadd.f32 %v4046, %v4011
      %v4048 = vadd.f32 %v4047, %v4012
      %v4049 = vadd.f32 %v4048, %v4013
      %v4050 = vadd.f32 %v4049, %v4014
      %v4051 = vadd.f32 %v4050, %v4015
      %v4052 = vrot.slane %v4051, 4
      %v4053 = vadd.f32 %v4051, %v4052
      %v4054 = vrot.slane %v4053, 2
      %v4055 = vadd.f32 %v4053, %v4054
      %v4056 = vrot.slane %v4055, 1
      %v4057 = vadd.f32 %v4055, %v4056
      %v4058 = vadd.f32 %v4016, %v4057
      %4059 = vst [vmem:[%s268] sm:$0xff] %v4058
      %v4060 = vld [vmem:[%s272] sm:$0xff]
      %v4061 = vmul.f32 %v3980, %v3692
      %v4062 = vmul.f32 %v3981, %v3693
      %v4063 = vmul.f32 %v3982, %v3694
      %v4064 = vmul.f32 %v3983, %v3695
      %v4065 = vmul.f32 %v3984, %v3696
      %v4066 = vmul.f32 %v3985, %v3697
      %v4067 = vmul.f32 %v3986, %v3698
      %v4068 = vmul.f32 %v3987, %v3699
      %v4069 = vmul.f32 %v3988, %v3700
      %v4070 = vmul.f32 %v3989, %v3701
      %v4071 = vmul.f32 %v3990, %v3702
      %v4072 = vmul.f32 %v3991, %v3703
      %v4073 = vmul.f32 %v3992, %v3704
      %v4074 = vmul.f32 %v3993, %v3705
      %v4075 = vmul.f32 %v3994, %v3706
      %v4076 = vmul.f32 %v3995, %v3707
      %v4077 = vmul.f32 %v3996, %v3708
      %v4078 = vmul.f32 %v3997, %v3709
      %v4079 = vmul.f32 %v3998, %v3710
      %v4080 = vmul.f32 %v3999, %v3711
      %v4081 = vmul.f32 %v4000, %v3712
      %v4082 = vmul.f32 %v4001, %v3713
      %v4083 = vmul.f32 %v4002, %v3714
      %v4084 = vmul.f32 %v4003, %v3715
      %v4085 = vmul.f32 %v4004, %v3716
      %v4086 = vmul.f32 %v4005, %v3717
      %v4087 = vmul.f32 %v4006, %v3718
      %v4088 = vmul.f32 %v4007, %v3719
      %v4089 = vmul.f32 %v4008, %v3720
      %v4090 = vmul.f32 %v4009, %v3721
      %v4091 = vmul.f32 %v4010, %v3722
      %v4092 = vmul.f32 %v4011, %v3723
      %v4093 = vmul.f32 %v4012, %v3724
      %v4094 = vmul.f32 %v4013, %v3725
      %v4095 = vmul.f32 %v4014, %v3726
      %v4096 = vmul.f32 %v4015, %v3727
      %v4097 = vadd.f32 %v4061, %v4062
      %v4098 = vadd.f32 %v4097, %v4063
      %v4099 = vadd.f32 %v4098, %v4064
      %v4100 = vadd.f32 %v4099, %v4065
      %v4101 = vadd.f32 %v4100, %v4066
      %v4102 = vadd.f32 %v4101, %v4067
      %v4103 = vadd.f32 %v4102, %v4068
      %v4104 = vadd.f32 %v4103, %v4069
      %v4105 = vadd.f32 %v4104, %v4070
      %v4106 = vadd.f32 %v4105, %v4071
      %v4107 = vadd.f32 %v4106, %v4072
      %v4108 = vadd.f32 %v4107, %v4073
      %v4109 = vadd.f32 %v4108, %v4074
      %v4110 = vadd.f32 %v4109, %v4075
      %v4111 = vadd.f32 %v4110, %v4076
      %v4112 = vadd.f32 %v4111, %v4077
      %v4113 = vadd.f32 %v4112, %v4078
      %v4114 = vadd.f32 %v4113, %v4079
      %v4115 = vadd.f32 %v4114, %v4080
      %v4116 = vadd.f32 %v4115, %v4081
      %v4117 = vadd.f32 %v4116, %v4082
      %v4118 = vadd.f32 %v4117, %v4083
      %v4119 = vadd.f32 %v4118, %v4084
      %v4120 = vadd.f32 %v4119, %v4085
      %v4121 = vadd.f32 %v4120, %v4086
      %v4122 = vadd.f32 %v4121, %v4087
      %v4123 = vadd.f32 %v4122, %v4088
      %v4124 = vadd.f32 %v4123, %v4089
      %v4125 = vadd.f32 %v4124, %v4090
      %v4126 = vadd.f32 %v4125, %v4091
      %v4127 = vadd.f32 %v4126, %v4092
      %v4128 = vadd.f32 %v4127, %v4093
      %v4129 = vadd.f32 %v4128, %v4094
      %v4130 = vadd.f32 %v4129, %v4095
      %v4131 = vadd.f32 %v4130, %v4096
      %v4132 = vrot.slane %v4131, 4
      %v4133 = vadd.f32 %v4131, %v4132
      %v4134 = vrot.slane %v4133, 2
      %v4135 = vadd.f32 %v4133, %v4134
      %v4136 = vrot.slane %v4135, 1
      %v4137 = vadd.f32 %v4135, %v4136
      %v4138 = vadd.f32 %v4060, %v4137
      %4139 = vst [vmem:[%s272] sm:$0xff] %v4138
      %s4140 = sadd.s32 %s21, %s22
      %s4141 = smul.u32 36, %s4140
      %p4142 = scmp.lt.s32.totalorder %s4141, 71
      %s4143 = scalar_select %p4142, %s4141, 71
      %s4144 = smul.addr %s4143, 8
      %s4145 = scalar_lea.vmem %s3, %s4144
      %p4146 = scmp.lt.s32.totalorder %s21, 1
      %s4147 = scalar_select %p4146, %s21, 1
      %s4148 = smul.addr %s4147, 8
      %s4149 = scalar_lea.vmem %s4, %s4148
      %p4150 = scmp.lt.s32.totalorder %s21, 1
      %s4151 = scalar_select %p4150, %s21, 1
      %s4152 = smul.addr %s4151, 8
      %s4153 = scalar_lea.vmem %s5, %s4152
      // Predicated region
      $region37: #{normalized_op_forward.2} parent=31 // pred_check
        %p4154 = pneg %p119
      $region38: #{normalized_op_forward.2} parent=31 // pred_check_branch
        %4156 = sbr.rel (%p4154) target = $region40
      $region39: #{normalized_op_forward.2} parent=31 // pred_region
        %s4157 = sadd.s32 %s21, %s22
        %s4158 = smul.u32 36, %s4157
      $region40: #{normalized_op_forward.2} parent=31 // pred_fallthru
        _
      // Predicated region
      $region41: #{normalized_op_forward.2} parent=31 // pred_check
        %p4159 = pneg %p145
      $region42: #{normalized_op_forward.2} parent=31 // pred_check_branch
        %4161 = sbr.rel (%p4159) target = $region44
      $region43: #{normalized_op_forward.2} parent=31 // pred_region
        _
      $region44: #{normalized_op_forward.2} parent=31 // pred_fallthru
        _
      // Predicated region
      $region45: #{normalized_op_forward.2} parent=31 // pred_check
        %p4162 = pneg %p171
      $region46: #{normalized_op_forward.2} parent=31 // pred_check_branch
        %4164 = sbr.rel (%p4162) target = $region48
      $region47: #{normalized_op_forward.2} parent=31 // pred_region
        _
      $region48: #{normalized_op_forward.2} parent=31 // pred_fallthru
        _
    $region32: #{normalized_op_forward.2} parent=5 // pred_fallthru
      _
    %p4165 = scmp.le.s32.totalorder 2, %s12
    // Predicated region
    $region49: #{normalized_op_forward.2} parent=5 // pred_check
      %p4166 = pneg %p4165
    $region50: #{normalized_op_forward.2} parent=5 // pred_check_branch
      %4168 = sbr.rel (%p4166) target = $region52
    $region51: #{normalized_op_forward.2} parent=5 // pred_region
      %s4169 = ssub.s32 %s12, 2
      // Predicated region
      $region53: #{normalized_op_forward.2} parent=51 // pred_check
        %p4170 = pneg %p125
      $region54: #{normalized_op_forward.2} parent=51 // pred_check_branch
        %4172 = sbr.rel (%p4170) target = $region56
      $region55: #{normalized_op_forward.2} parent=51 // pred_region
        %s4173 = sadd.s32 %s23, %s24
        %s4174 = smul.u32 36, %s4173
        %p4175 = scmp.lt.s32.totalorder %s4174, 71
        %s4176 = scalar_select %p4175, %s4174, 71
        %s4177 = smul.addr %s4176, 8
        %s4178 = scalar_lea.vmem %s3, %s4177
      $region56: #{normalized_op_forward.2} parent=51 // pred_fallthru
        _
      // Predicated region
      $region57: #{normalized_op_forward.2} parent=51 // pred_check
        %p4179 = pneg %p151
      $region58: #{normalized_op_forward.2} parent=51 // pred_check_branch
        %4181 = sbr.rel (%p4179) target = $region60
      $region59: #{normalized_op_forward.2} parent=51 // pred_region
        %p4182 = scmp.lt.s32.totalorder %s23, 1
        %s4183 = scalar_select %p4182, %s23, 1
        %s4184 = smul.addr %s4183, 8
        %s4185 = scalar_lea.vmem %s4, %s4184
      $region60: #{normalized_op_forward.2} parent=51 // pred_fallthru
        _
      // Predicated region
      $region61: #{normalized_op_forward.2} parent=51 // pred_check
        %p4186 = pneg %p177
      $region62: #{normalized_op_forward.2} parent=51 // pred_check_branch
        %4188 = sbr.rel (%p4186) target = $region64
      $region63: #{normalized_op_forward.2} parent=51 // pred_region
        %p4189 = scmp.lt.s32.totalorder %s23, 1
        %s4190 = scalar_select %p4189, %s23, 1
        %s4191 = smul.addr %s4190, 8
        %s4192 = scalar_lea.vmem %s5, %s4191
      $region64: #{normalized_op_forward.2} parent=51 // pred_fallthru
        _
    $region52: #{normalized_op_forward.2} parent=5 // pred_fallthru
      _
  $region6: #{normalized_op_forward.2} parent=0 // loop_footer
    %s16 = sadd.s32 1, %s12
  $region7: #{normalized_op_forward.2} parent=0 // loop_footer_branch
    %11 = sbr.rel target = $region3
  $region8: #{normalized_op_forward.2} parent=0 // loop_exit
    _

</llo_original>
